<compile_context>
chip_gen: v7x
topology: tpu7x:2x2x1
jax: 0.10.0
libtpu: 0.0.40
codegen_flags: <defaults>
</compile_context>

<pallas_src>
import jax
import jax.numpy as jnp
from jax import lax
from jax.experimental import pallas as pl
from jax.experimental.pallas import tpu as pltpu

INPUT_DIM = 24
HIDDEN = (128, 64, 32)
OUT_DIM = 2
TILE_B = 2048   # batch tile; lane axis of the feature-major intermediates
LANE = 128      # hardware lane width


def _mlp_kernel(x_ref,
                w1_ref, b1_ref,
                w2_ref, b2_ref,
                w3_ref, b3_ref,
                w4_ref, b4_ref,
                o_ref):
    """Feature-major fused MLP: every intermediate is (features, TILE_B)."""
    # Layer 1: contract K=24 of W1(128,24) with K=24 of x(TILE_B,24) -> (128, TILE_B).
    # Batch stays on lanes; the x-block transposition is handled on-chip (XLU),
    # overlapping with MXU work — no wrapper transpose / extra HBM pass.
    h = lax.dot_general(
        w1_ref[...], x_ref[...].astype(jnp.bfloat16),
        dimension_numbers=(((1,), (1,)), ((), ())),
        preferred_element_type=jnp.float32)
    h = jnp.maximum(h + b1_ref[...], 0.0)

    # Layer 2: (64,128) @ (128,TILE_B) -> (64,TILE_B)
    h = jnp.dot(w2_ref[...], h.astype(jnp.bfloat16),
                preferred_element_type=jnp.float32)
    h = jnp.maximum(h + b2_ref[...], 0.0)

    # Layer 3: (32,64) @ (64,TILE_B) -> (32,TILE_B)
    h = jnp.dot(w3_ref[...], h.astype(jnp.bfloat16),
                preferred_element_type=jnp.float32)
    h = jnp.maximum(h + b3_ref[...], 0.0)

    # Layer 4 (logits): (2,32) @ (32,TILE_B) -> (2,TILE_B); lane-dense store.
    out = jnp.dot(w4_ref[...], h.astype(jnp.bfloat16),
                  preferred_element_type=jnp.float32)
    o_ref[...] = (out + b4_ref[...]).astype(o_ref.dtype)


def higgs_classifier_forward(x, params, *, tile_b=TILE_B):
    """x: (B, 24) f32.  params: list of (W(out,in) f32, b(out,) f32) per layer
    (PyTorch nn.Linear layout).  Returns logits (B, 2) f32."""
    B = x.shape[0]
    num_tiles = pl.cdiv(B, tile_b)
    # Prefer >= 2 tiles when the batch allows it so v7x's two TensorCores both
    # get work under the "parallel" batch axis.  No-op on single-TC v5e/v6e.
    if num_tiles == 1 and B > 2 * LANE:
        tile_b = max(LANE, pl.cdiv(pl.cdiv(B, 2), LANE) * LANE)
        num_tiles = pl.cdiv(B, tile_b)

    flat_args = [x]
    in_specs = [pl.BlockSpec((tile_b, INPUT_DIM), lambda i: (i, 0))]
    for w, b in params:
        w_t = w.astype(jnp.bfloat16)                   # (out, in), MXU-native dtype
        b_col = b.reshape(-1, 1).astype(jnp.float32)   # (out, 1), broadcasts over lanes
        flat_args.append(w_t)
        in_specs.append(pl.BlockSpec(w_t.shape, lambda i: (0, 0)))   # VMEM-resident
        flat_args.append(b_col)
        in_specs.append(pl.BlockSpec(b_col.shape, lambda i: (0, 0)))

    out_t = pl.pallas_call(
        _mlp_kernel,
        out_shape=jax.ShapeDtypeStruct((OUT_DIM, B), jnp.float32),
        grid=(num_tiles,),
        in_specs=in_specs,
        out_specs=pl.BlockSpec((OUT_DIM, tile_b), lambda i: (0, i)),
        compiler_params=pltpu.CompilerParams(
            dimension_semantics=("parallel",),
            vmem_limit_bytes=32 * 1024 * 1024),
    )(*flat_args)

    # Back to the module's (B, 2) interface; B x 2 transpose is negligible.
    return out_t.T


def init_params(key):
    """PyTorch nn.Linear default init: U(-1/sqrt(fan_in), 1/sqrt(fan_in)) for W and b.
    Weights stored torch-style as (out_features, in_features)."""
    dims = (INPUT_DIM,) + HIDDEN + (OUT_DIM,)
    params = []
    for i in range(len(dims) - 1):
        fan_in, fan_out = dims[i], dims[i + 1]
        key, kw, kb = jax.random.split(key, 3)
        bound = 1.0 / jnp.sqrt(float(fan_in))
        w = jax.random.uniform(kw, (fan_out, fan_in), jnp.float32, -bound, bound)
        b = jax.random.uniform(kb, (fan_out,), jnp.float32, -bound, bound)
        params.append((w, b))
    return params


def reference_forward_mixed(x, params):
    """Pure-JAX reference matching the kernel numerics (bf16 dot operands,
    f32 accumulation, f32 bias-add / ReLU)."""
    h = x
    for i, (w, b) in enumerate(params):
        h = jnp.dot(h.astype(jnp.bfloat16), w.astype(jnp.bfloat16).T,
                    preferred_element_type=jnp.float32) + b
        if i < len(params) - 1:
            h = jnp.maximum(h, 0.0)
    return h


def reference_forward_f32(x, params):
    """Full-f32 reference (PyTorch-equivalent semantics: x @ W.T + b)."""
    h = x
    for i, (w, b) in enumerate(params):
        h = h @ w.T + b
        if i < len(params) - 1:
            h = jnp.maximum(h, 0.0)
    return h


if __name__ == "__main__":
    key = jax.random.PRNGKey(0)
    key, kx = jax.random.split(key)

    # Small in memory (2500 x 24 f32 ~ 240 KB) but exercises one full tile plus
    # one partial trailing tile at TILE_B=2048 (even tile count -> both v7x TCs).
    batch = 2500
    x = jax.random.normal(kx, (batch, INPUT_DIM), jnp.float32)
    params = init_params(key)

    out = higgs_classifier_forward(x, params)
    out = jax.block_until_ready(out)
    assert out.shape == (batch, OUT_DIM)
    assert bool(jnp.all(jnp.isfinite(out))), "non-finite logits"

    # Tight check vs a reference with identical mixed-precision numerics.
    ref_mixed = reference_forward_mixed(x, params)
    assert jnp.allclose(out, ref_mixed, atol=2e-2, rtol=2e-2), \
        "mismatch vs mixed-precision reference"

    # Loose sanity check vs the full-f32 (PyTorch-equivalent) reference;
    # bf16 rounding of x / activations costs a few 1e-2 absolute.
    ref_f32 = reference_forward_f32(x, params)
    max_err = float(jnp.max(jnp.abs(out - ref_f32)))
    assert max_err < 0.25, f"f32-reference max abs error too large: {max_err}"

    print("KERNEL_OK")
</pallas_src>

<mosaic_0001>
module attributes {stable_mosaic.version = 11 : i64} {
  func.func @_mlp_kernel(%arg0: i32, %arg1: memref<2048x24xf32, #tpu.memory_space<vmem>>, %arg2: memref<128x24xbf16, #tpu.memory_space<vmem>>, %arg3: memref<128x1xf32, #tpu.memory_space<vmem>>, %arg4: memref<64x128xbf16, #tpu.memory_space<vmem>>, %arg5: memref<64x1xf32, #tpu.memory_space<vmem>>, %arg6: memref<32x64xbf16, #tpu.memory_space<vmem>>, %arg7: memref<32x1xf32, #tpu.memory_space<vmem>>, %arg8: memref<2x32xbf16, #tpu.memory_space<vmem>>, %arg9: memref<2x1xf32, #tpu.memory_space<vmem>>, %arg10: memref<2x2048xf32, #tpu.memory_space<vmem>>) attributes {dimension_semantics = [#tpu.dimension_semantics<parallel>], iteration_bounds = array<i64: 2>, scalar_prefetch = 0 : i64, scratch_operands = 0 : i64, tpu.core_type = #tpu.core_type<tc>, window_params = [{transform_indices = @transform_0, window_bounds = array<i64: 2048, 24>}, {pipeline_mode = #tpu.pipeline_mode<synchronous>, transform_indices = @transform_1, window_bounds = array<i64: 128, 24>}, {pipeline_mode = #tpu.pipeline_mode<synchronous>, transform_indices = @transform_2, window_bounds = array<i64: 128, 1>}, {pipeline_mode = #tpu.pipeline_mode<synchronous>, transform_indices = @transform_3, window_bounds = array<i64: 64, 128>}, {pipeline_mode = #tpu.pipeline_mode<synchronous>, transform_indices = @transform_4, window_bounds = array<i64: 64, 1>}, {pipeline_mode = #tpu.pipeline_mode<synchronous>, transform_indices = @transform_5, window_bounds = array<i64: 32, 64>}, {pipeline_mode = #tpu.pipeline_mode<synchronous>, transform_indices = @transform_6, window_bounds = array<i64: 32, 1>}, {pipeline_mode = #tpu.pipeline_mode<synchronous>, transform_indices = @transform_7, window_bounds = array<i64: 2, 32>}, {pipeline_mode = #tpu.pipeline_mode<synchronous>, transform_indices = @transform_8, window_bounds = array<i64: 2, 1>}, {transform_indices = @transform_9, window_bounds = array<i64: 2, 2048>}]} {
    %c0 = arith.constant 0 : index
    %c0_0 = arith.constant 0 : index
    %0 = vector.load %arg2[%c0, %c0_0] : memref<128x24xbf16, #tpu.memory_space<vmem>>, vector<128x24xbf16>
    %c0_1 = arith.constant 0 : index
    %c0_2 = arith.constant 0 : index
    %1 = vector.load %arg1[%c0_1, %c0_2] : memref<2048x24xf32, #tpu.memory_space<vmem>>, vector<2048x24xf32>
    %2 = arith.truncf %1 : vector<2048x24xf32> to vector<2048x24xbf16>
    %cst = arith.constant dense<0.000000e+00> : vector<128x2048xf32>
    %3 = tpu.matmul %0, %2, %cst {dimension_numbers = #tpu.dot_dimension_numbers<[1], [1], [0], [0], [0, 0, 1, 0], [], []>} : vector<128x24xbf16>, vector<2048x24xbf16>, vector<128x2048xf32> -> vector<128x2048xf32>
    %c0_3 = arith.constant 0 : index
    %c0_4 = arith.constant 0 : index
    %4 = vector.load %arg3[%c0_3, %c0_4] : memref<128x1xf32, #tpu.memory_space<vmem>>, vector<128x1xf32>
    %5 = vector.broadcast %4 : vector<128x1xf32> to vector<128x2048xf32>
    %6 = arith.addf %3, %5 : vector<128x2048xf32>
    %cst_5 = arith.constant 0.000000e+00 : f32
    %7 = vector.broadcast %cst_5 : f32 to vector<128x2048xf32>
    %8 = arith.maximumf %6, %7 : vector<128x2048xf32>
    %c0_6 = arith.constant 0 : index
    %c0_7 = arith.constant 0 : index
    %9 = vector.load %arg4[%c0_6, %c0_7] : memref<64x128xbf16, #tpu.memory_space<vmem>>, vector<64x128xbf16>
    %10 = arith.truncf %8 : vector<128x2048xf32> to vector<128x2048xbf16>
    %cst_8 = arith.constant dense<0.000000e+00> : vector<64x2048xf32>
    %11 = tpu.matmul %9, %10, %cst_8 {dimension_numbers = #tpu.dot_dimension_numbers<[1], [0], [0], [1], [0, 0, 1, 1], [], []>} : vector<64x128xbf16>, vector<128x2048xbf16>, vector<64x2048xf32> -> vector<64x2048xf32>
    %c0_9 = arith.constant 0 : index
    %c0_10 = arith.constant 0 : index
    %12 = vector.load %arg5[%c0_9, %c0_10] : memref<64x1xf32, #tpu.memory_space<vmem>>, vector<64x1xf32>
    %13 = vector.broadcast %12 : vector<64x1xf32> to vector<64x2048xf32>
    %14 = arith.addf %11, %13 : vector<64x2048xf32>
    %cst_11 = arith.constant 0.000000e+00 : f32
    %15 = vector.broadcast %cst_11 : f32 to vector<64x2048xf32>
    %16 = arith.maximumf %14, %15 : vector<64x2048xf32>
    %c0_12 = arith.constant 0 : index
    %c0_13 = arith.constant 0 : index
    %17 = vector.load %arg6[%c0_12, %c0_13] : memref<32x64xbf16, #tpu.memory_space<vmem>>, vector<32x64xbf16>
    %18 = arith.truncf %16 : vector<64x2048xf32> to vector<64x2048xbf16>
    %cst_14 = arith.constant dense<0.000000e+00> : vector<32x2048xf32>
    %19 = tpu.matmul %17, %18, %cst_14 {dimension_numbers = #tpu.dot_dimension_numbers<[1], [0], [0], [1], [0, 0, 1, 1], [], []>} : vector<32x64xbf16>, vector<64x2048xbf16>, vector<32x2048xf32> -> vector<32x2048xf32>
    %c0_15 = arith.constant 0 : index
    %c0_16 = arith.constant 0 : index
    %20 = vector.load %arg7[%c0_15, %c0_16] : memref<32x1xf32, #tpu.memory_space<vmem>>, vector<32x1xf32>
    %21 = vector.broadcast %20 : vector<32x1xf32> to vector<32x2048xf32>
    %22 = arith.addf %19, %21 : vector<32x2048xf32>
    %cst_17 = arith.constant 0.000000e+00 : f32
    %23 = vector.broadcast %cst_17 : f32 to vector<32x2048xf32>
    %24 = arith.maximumf %22, %23 : vector<32x2048xf32>
    %c0_18 = arith.constant 0 : index
    %c0_19 = arith.constant 0 : index
    %25 = vector.load %arg8[%c0_18, %c0_19] : memref<2x32xbf16, #tpu.memory_space<vmem>>, vector<2x32xbf16>
    %26 = arith.truncf %24 : vector<32x2048xf32> to vector<32x2048xbf16>
    %cst_20 = arith.constant dense<0.000000e+00> : vector<2x2048xf32>
    %27 = tpu.matmul %25, %26, %cst_20 {dimension_numbers = #tpu.dot_dimension_numbers<[1], [0], [0], [1], [0, 0, 1, 1], [], []>} : vector<2x32xbf16>, vector<32x2048xbf16>, vector<2x2048xf32> -> vector<2x2048xf32>
    %c0_21 = arith.constant 0 : index
    %c0_22 = arith.constant 0 : index
    %28 = vector.load %arg9[%c0_21, %c0_22] : memref<2x1xf32, #tpu.memory_space<vmem>>, vector<2x1xf32>
    %29 = vector.broadcast %28 : vector<2x1xf32> to vector<2x2048xf32>
    %30 = arith.addf %27, %29 : vector<2x2048xf32>
    %c0_23 = arith.constant 0 : index
    %c0_24 = arith.constant 0 : index
    %31 = vector.load %arg10[%c0_23, %c0_24] : memref<2x2048xf32, #tpu.memory_space<vmem>>, vector<2x2048xf32>
    tpu.vector_store %arg10[%c0_23, %c0_24], %30 {strides = array<i32>} : memref<2x2048xf32, #tpu.memory_space<vmem>>, vector<2x2048xf32>,
    return
  }
  func.func @transform_0(%arg0: i32) -> (i32, i32) {
    %c0_i32 = arith.constant 0 : i32
    %c0_i32_0 = arith.constant 0 : i32
    return %arg0, %c0_i32 : i32, i32
  }
  func.func @transform_1(%arg0: i32) -> (i32, i32) {
    %c0_i32 = arith.constant 0 : i32
    %c0_i32_0 = arith.constant 0 : i32
    %c0_i32_1 = arith.constant 0 : i32
    return %c0_i32, %c0_i32_0 : i32, i32
  }
  func.func @transform_2(%arg0: i32) -> (i32, i32) {
    %c0_i32 = arith.constant 0 : i32
    %c0_i32_0 = arith.constant 0 : i32
    %c0_i32_1 = arith.constant 0 : i32
    return %c0_i32, %c0_i32_0 : i32, i32
  }
  func.func @transform_3(%arg0: i32) -> (i32, i32) {
    %c0_i32 = arith.constant 0 : i32
    %c0_i32_0 = arith.constant 0 : i32
    %c0_i32_1 = arith.constant 0 : i32
    return %c0_i32, %c0_i32_0 : i32, i32
  }
  func.func @transform_4(%arg0: i32) -> (i32, i32) {
    %c0_i32 = arith.constant 0 : i32
    %c0_i32_0 = arith.constant 0 : i32
    %c0_i32_1 = arith.constant 0 : i32
    return %c0_i32, %c0_i32_0 : i32, i32
  }
  func.func @transform_5(%arg0: i32) -> (i32, i32) {
    %c0_i32 = arith.constant 0 : i32
    %c0_i32_0 = arith.constant 0 : i32
    %c0_i32_1 = arith.constant 0 : i32
    return %c0_i32, %c0_i32_0 : i32, i32
  }
  func.func @transform_6(%arg0: i32) -> (i32, i32) {
    %c0_i32 = arith.constant 0 : i32
    %c0_i32_0 = arith.constant 0 : i32
    %c0_i32_1 = arith.constant 0 : i32
    return %c0_i32, %c0_i32_0 : i32, i32
  }
  func.func @transform_7(%arg0: i32) -> (i32, i32) {
    %c0_i32 = arith.constant 0 : i32
    %c0_i32_0 = arith.constant 0 : i32
    %c0_i32_1 = arith.constant 0 : i32
    return %c0_i32, %c0_i32_0 : i32, i32
  }
  func.func @transform_8(%arg0: i32) -> (i32, i32) {
    %c0_i32 = arith.constant 0 : i32
    %c0_i32_0 = arith.constant 0 : i32
    %c0_i32_1 = arith.constant 0 : i32
    return %c0_i32, %c0_i32_0 : i32, i32
  }
  func.func @transform_9(%arg0: i32) -> (i32, i32) {
    %c0_i32 = arith.constant 0 : i32
    %c0_i32_0 = arith.constant 0 : i32
    return %c0_i32, %arg0 : i32, i32
  }
}

</mosaic_0001>

<llo_original>
// kernel: tpu_custom_call.1
$region0: #{tpu_custom_call.1}
  #allocation0 [shape = 'u32[]', space=smem, size = 0x4, offset = 0x4, fixed_abs, tag = 'smem constant byte address 0x4 - core index']
  #allocation1 [shape = 'u32[144,128]{1,0:T(1,128)}', space=vmem, size = 0x12000, scoped, tag = 'internal scratch']
  %s0 = inlined_call_operand.vmem [shape: f32[2500,24], index: 0, kind: input, shape index: {}]
  %s1 = inlined_call_operand.vmem [shape: bf16[128,24], index: 1, kind: input, shape index: {}]
  %s2 = inlined_call_operand.vmem [shape: f32[128,1], index: 2, kind: input, shape index: {}]
  %s3 = inlined_call_operand.vmem [shape: bf16[64,128], index: 3, kind: input, shape index: {}]
  %s4 = inlined_call_operand.vmem [shape: f32[64,1], index: 4, kind: input, shape index: {}]
  %s5 = inlined_call_operand.vmem [shape: bf16[32,64], index: 5, kind: input, shape index: {}]
  %s6 = inlined_call_operand.vmem [shape: f32[32,1], index: 6, kind: input, shape index: {}]
  %s7 = inlined_call_operand.vmem [shape: bf16[2,32], index: 7, kind: input, shape index: {}]
  %s8 = inlined_call_operand.vmem [shape: f32[2,1], index: 8, kind: input, shape index: {}]
  %s9 = inlined_call_operand.hbm [shape: f32[2,2500], index: 9, kind: output, shape index: {}]
  %s10 = sld [smem:[#allocation0]]
  $region69: #{tpu_custom_call.1} parent=0
    _
  %s12 = ssub.s32 1, %s10
  %s13 = scalar_select 0, %s12, %s10
  $region1: #{tpu_custom_call.1} parent=0
    #allocation2 [shape = 'u8[32768]{0}', space=vmem, size = 0x8000, scoped, tag = 'output window, operand 0']
    #allocation3 [shape = 's32[2]{0}', space=sflag, size = 0x8, scoped, tag = 'scoped memory for tpu_custom_call.1']
    %14 = vsyncpa [#allocation3], 0
    %s15 = scalar_lea.sflag [#allocation3], 1
    %16 = vsyncpa %s15, 0
    loop: start=0, step=1, limit=4
    $region2: #{tpu_custom_call.1} parent=1 // loop_pre_header
      _
    $region3: #{tpu_custom_call.1} parent=1 // loop_header
      %s18 = sphi 0, %s22
      %p19 = scmp.ge.s32.totalorder %s18, 4
      %s28 = sphi 0, %s30
      %s31 = sphi 0, %s28
      %s32 = sphi 0, %s31
      %s48 = sphi 0, %s32
      %s52 = sphi 0, %s52
      %s54 = sphi 0, %s52
      %s55 = sphi 0, %s54
      %s69 = sphi 0, %s55
      %s73 = sphi 0, %s73
      %s75 = sphi 0, %s73
      %s76 = sphi 0, %s75
      %s90 = sphi 0, %s76
      %s94 = sphi 0, %s94
      %s96 = sphi 0, %s94
      %s97 = sphi 0, %s96
      %s111 = sphi 0, %s97
      %s115 = sphi 0, %s115
      %s117 = sphi 0, %s115
      %s118 = sphi 0, %s117
      %s132 = sphi 0, %s118
      %s136 = sphi 0, %s136
      %s138 = sphi 0, %s136
      %s139 = sphi 0, %s138
      %s153 = sphi 0, %s139
      %s157 = sphi 0, %s157
      %s159 = sphi 0, %s157
      %s160 = sphi 0, %s159
      %s174 = sphi 0, %s160
      %s178 = sphi 0, %s178
      %s180 = sphi 0, %s178
      %s181 = sphi 0, %s180
      %s195 = sphi 0, %s181
      %s199 = sphi 0, %s199
      %s201 = sphi 0, %s199
      %s202 = sphi 0, %s201
      %s216 = sphi 0, %s202
      %s222 = sphi 0, %s224
      %s225 = sphi 0, %s222
      %s226 = sphi 0, %s225
      %s242 = sphi 0, %s226
    $region4: #{tpu_custom_call.1} parent=1 // loop_header_branch
      %21 = sbr.rel (%p19) target = $region8
    $region5: #{tpu_custom_call.1} parent=1 // loop_body
      %s23 = ssub.s32 %s18, 1
      %s24 = ssub.s32 %s18, 2
      %s25 = sadd.s32 %s18, 1
      %s26 = ssub.s32 %s18, %s25
      %p27 = scmp.eq.s32.totalorder %s26, 0
      %s29 = sadd.s32 %s28, 1
      %s30 = scalar_select %p27, %s28, %s29
      %p33 = pneg %p27
      %p34 = scmp.eq.s32.totalorder %s18, 1
      %p35 = por %p33, %p34
      %p36 = scmp.ne.s32.totalorder %s28, %s31
      %p37 = scmp.eq.s32.totalorder %s18, 0
      %p38 = por %p36, %p37
      %p39 = scmp.ne.s32.totalorder %s28, %s31
      %p40 = scmp.eq.s32.totalorder %s23, 1
      %p41 = por %p39, %p40
      %p42 = scmp.ne.s32.totalorder %s31, %s32
      %p43 = scmp.eq.s32.totalorder %s23, 0
      %p44 = por %p42, %p43
      %p45 = scmp.ne.s32.totalorder %s31, %s32
      %p46 = scmp.eq.s32.totalorder %s24, 1
      %p47 = por %p45, %p46
      %p49 = scmp.ne.s32.totalorder %s32, %s48
      %p50 = scmp.eq.s32.totalorder %s24, 0
      %p51 = por %p49, %p50
      %s53 = sadd.s32 %s52, 1
      %p56 = scmp.eq.s32.totalorder %s18, 1
      %p57 = scmp.ne.s32.totalorder %s52, %s54
      %p58 = scmp.eq.s32.totalorder %s18, 0
      %p59 = por %p57, %p58
      %p60 = scmp.ne.s32.totalorder %s52, %s54
      %p61 = scmp.eq.s32.totalorder %s23, 1
      %p62 = por %p60, %p61
      %p63 = scmp.ne.s32.totalorder %s54, %s55
      %p64 = scmp.eq.s32.totalorder %s23, 0
      %p65 = por %p63, %p64
      %p66 = scmp.ne.s32.totalorder %s54, %s55
      %p67 = scmp.eq.s32.totalorder %s24, 1
      %p68 = por %p66, %p67
      %p70 = scmp.ne.s32.totalorder %s55, %s69
      %p71 = scmp.eq.s32.totalorder %s24, 0
      %p72 = por %p70, %p71
      %s74 = sadd.s32 %s73, 1
      %p77 = scmp.eq.s32.totalorder %s18, 1
      %p78 = scmp.ne.s32.totalorder %s73, %s75
      %p79 = scmp.eq.s32.totalorder %s18, 0
      %p80 = por %p78, %p79
      %p81 = scmp.ne.s32.totalorder %s73, %s75
      %p82 = scmp.eq.s32.totalorder %s23, 1
      %p83 = por %p81, %p82
      %p84 = scmp.ne.s32.totalorder %s75, %s76
      %p85 = scmp.eq.s32.totalorder %s23, 0
      %p86 = por %p84, %p85
      %p87 = scmp.ne.s32.totalorder %s75, %s76
      %p88 = scmp.eq.s32.totalorder %s24, 1
      %p89 = por %p87, %p88
      %p91 = scmp.ne.s32.totalorder %s76, %s90
      %p92 = scmp.eq.s32.totalorder %s24, 0
      %p93 = por %p91, %p92
      %s95 = sadd.s32 %s94, 1
      %p98 = scmp.eq.s32.totalorder %s18, 1
      %p99 = scmp.ne.s32.totalorder %s94, %s96
      %p100 = scmp.eq.s32.totalorder %s18, 0
      %p101 = por %p99, %p100
      %p102 = scmp.ne.s32.totalorder %s94, %s96
      %p103 = scmp.eq.s32.totalorder %s23, 1
      %p104 = por %p102, %p103
      %p105 = scmp.ne.s32.totalorder %s96, %s97
      %p106 = scmp.eq.s32.totalorder %s23, 0
      %p107 = por %p105, %p106
      %p108 = scmp.ne.s32.totalorder %s96, %s97
      %p109 = scmp.eq.s32.totalorder %s24, 1
      %p110 = por %p108, %p109
      %p112 = scmp.ne.s32.totalorder %s97, %s111
      %p113 = scmp.eq.s32.totalorder %s24, 0
      %p114 = por %p112, %p113
      %s116 = sadd.s32 %s115, 1
      %p119 = scmp.eq.s32.totalorder %s18, 1
      %p120 = scmp.ne.s32.totalorder %s115, %s117
      %p121 = scmp.eq.s32.totalorder %s18, 0
      %p122 = por %p120, %p121
      %p123 = scmp.ne.s32.totalorder %s115, %s117
      %p124 = scmp.eq.s32.totalorder %s23, 1
      %p125 = por %p123, %p124
      %p126 = scmp.ne.s32.totalorder %s117, %s118
      %p127 = scmp.eq.s32.totalorder %s23, 0
      %p128 = por %p126, %p127
      %p129 = scmp.ne.s32.totalorder %s117, %s118
      %p130 = scmp.eq.s32.totalorder %s24, 1
      %p131 = por %p129, %p130
      %p133 = scmp.ne.s32.totalorder %s118, %s132
      %p134 = scmp.eq.s32.totalorder %s24, 0
      %p135 = por %p133, %p134
      %s137 = sadd.s32 %s136, 1
      %p140 = scmp.eq.s32.totalorder %s18, 1
      %p141 = scmp.ne.s32.totalorder %s136, %s138
      %p142 = scmp.eq.s32.totalorder %s18, 0
      %p143 = por %p141, %p142
      %p144 = scmp.ne.s32.totalorder %s136, %s138
      %p145 = scmp.eq.s32.totalorder %s23, 1
      %p146 = por %p144, %p145
      %p147 = scmp.ne.s32.totalorder %s138, %s139
      %p148 = scmp.eq.s32.totalorder %s23, 0
      %p149 = por %p147, %p148
      %p150 = scmp.ne.s32.totalorder %s138, %s139
      %p151 = scmp.eq.s32.totalorder %s24, 1
      %p152 = por %p150, %p151
      %p154 = scmp.ne.s32.totalorder %s139, %s153
      %p155 = scmp.eq.s32.totalorder %s24, 0
      %p156 = por %p154, %p155
      %s158 = sadd.s32 %s157, 1
      %p161 = scmp.eq.s32.totalorder %s18, 1
      %p162 = scmp.ne.s32.totalorder %s157, %s159
      %p163 = scmp.eq.s32.totalorder %s18, 0
      %p164 = por %p162, %p163
      %p165 = scmp.ne.s32.totalorder %s157, %s159
      %p166 = scmp.eq.s32.totalorder %s23, 1
      %p167 = por %p165, %p166
      %p168 = scmp.ne.s32.totalorder %s159, %s160
      %p169 = scmp.eq.s32.totalorder %s23, 0
      %p170 = por %p168, %p169
      %p171 = scmp.ne.s32.totalorder %s159, %s160
      %p172 = scmp.eq.s32.totalorder %s24, 1
      %p173 = por %p171, %p172
      %p175 = scmp.ne.s32.totalorder %s160, %s174
      %p176 = scmp.eq.s32.totalorder %s24, 0
      %p177 = por %p175, %p176
      %s179 = sadd.s32 %s178, 1
      %p182 = scmp.eq.s32.totalorder %s18, 1
      %p183 = scmp.ne.s32.totalorder %s178, %s180
      %p184 = scmp.eq.s32.totalorder %s18, 0
      %p185 = por %p183, %p184
      %p186 = scmp.ne.s32.totalorder %s178, %s180
      %p187 = scmp.eq.s32.totalorder %s23, 1
      %p188 = por %p186, %p187
      %p189 = scmp.ne.s32.totalorder %s180, %s181
      %p190 = scmp.eq.s32.totalorder %s23, 0
      %p191 = por %p189, %p190
      %p192 = scmp.ne.s32.totalorder %s180, %s181
      %p193 = scmp.eq.s32.totalorder %s24, 1
      %p194 = por %p192, %p193
      %p196 = scmp.ne.s32.totalorder %s181, %s195
      %p197 = scmp.eq.s32.totalorder %s24, 0
      %p198 = por %p196, %p197
      %s200 = sadd.s32 %s199, 1
      %p203 = scmp.eq.s32.totalorder %s18, 1
      %p204 = scmp.ne.s32.totalorder %s199, %s201
      %p205 = scmp.eq.s32.totalorder %s18, 0
      %p206 = por %p204, %p205
      %p207 = scmp.ne.s32.totalorder %s199, %s201
      %p208 = scmp.eq.s32.totalorder %s23, 1
      %p209 = por %p207, %p208
      %p210 = scmp.ne.s32.totalorder %s201, %s202
      %p211 = scmp.eq.s32.totalorder %s23, 0
      %p212 = por %p210, %p211
      %p213 = scmp.ne.s32.totalorder %s201, %s202
      %p214 = scmp.eq.s32.totalorder %s24, 1
      %p215 = por %p213, %p214
      %p217 = scmp.ne.s32.totalorder %s202, %s216
      %p218 = scmp.eq.s32.totalorder %s24, 0
      %p219 = por %p217, %p218
      %s220 = ssub.s32 %s18, %s25
      %p221 = scmp.eq.s32.totalorder %s220, 0
      %s223 = sadd.s32 %s222, 1
      %s224 = scalar_select %p221, %s222, %s223
      %p227 = pneg %p221
      %p228 = scmp.eq.s32.totalorder %s18, 1
      %p229 = por %p227, %p228
      %p230 = scmp.ne.s32.totalorder %s222, %s225
      %p231 = scmp.eq.s32.totalorder %s18, 0
      %p232 = por %p230, %p231
      %p233 = scmp.ne.s32.totalorder %s222, %s225
      %p234 = scmp.eq.s32.totalorder %s23, 1
      %p235 = por %p233, %p234
      %p236 = scmp.ne.s32.totalorder %s225, %s226
      %p237 = scmp.eq.s32.totalorder %s23, 0
      %p238 = por %p236, %p237
      %p239 = scmp.ne.s32.totalorder %s225, %s226
      %p240 = scmp.eq.s32.totalorder %s24, 1
      %p241 = por %p239, %p240
      %p243 = scmp.ne.s32.totalorder %s226, %s242
      %p244 = scmp.eq.s32.totalorder %s24, 0
      %p245 = por %p243, %p244
      %p246 = scmp.le.s32.totalorder 1, %s18
      %p247 = scmp.lt.s32.totalorder %s18, 3
      %p248 = pnand %p246, %p247
      %p249 = pneg %p248
      // Predicated region
      $region9: #{tpu_custom_call.1} parent=5 // pred_check
        _
      $region10: #{tpu_custom_call.1} parent=5 // pred_check_branch
        %251 = sbr.rel (%p248) target = $region12
      $region11: #{tpu_custom_call.1} parent=5 // pred_region
        %s252 = ssub.s32 %s18, 1
        // Predicated region
        $region13: #{tpu_custom_call.1} parent=11 // pred_check
          %p253 = pneg %p65
        $region14: #{tpu_custom_call.1} parent=11 // pred_check_branch
          %255 = sbr.rel (%p253) target = $region16
        $region15: #{tpu_custom_call.1} parent=11 // pred_region
          _
        $region16: #{tpu_custom_call.1} parent=11 // pred_fallthru
          _
        // Predicated region
        $region17: #{tpu_custom_call.1} parent=11 // pred_check
          %p256 = pneg %p86
        $region18: #{tpu_custom_call.1} parent=11 // pred_check_branch
          %258 = sbr.rel (%p256) target = $region20
        $region19: #{tpu_custom_call.1} parent=11 // pred_region
          _
        $region20: #{tpu_custom_call.1} parent=11 // pred_fallthru
          _
        // Predicated region
        $region21: #{tpu_custom_call.1} parent=11 // pred_check
          %p259 = pneg %p107
        $region22: #{tpu_custom_call.1} parent=11 // pred_check_branch
          %261 = sbr.rel (%p259) target = $region24
        $region23: #{tpu_custom_call.1} parent=11 // pred_region
          _
        $region24: #{tpu_custom_call.1} parent=11 // pred_fallthru
          _
        // Predicated region
        $region25: #{tpu_custom_call.1} parent=11 // pred_check
          %p262 = pneg %p128
        $region26: #{tpu_custom_call.1} parent=11 // pred_check_branch
          %264 = sbr.rel (%p262) target = $region28
        $region27: #{tpu_custom_call.1} parent=11 // pred_region
          _
        $region28: #{tpu_custom_call.1} parent=11 // pred_fallthru
          _
        // Predicated region
        $region29: #{tpu_custom_call.1} parent=11 // pred_check
          %p265 = pneg %p149
        $region30: #{tpu_custom_call.1} parent=11 // pred_check_branch
          %267 = sbr.rel (%p265) target = $region32
        $region31: #{tpu_custom_call.1} parent=11 // pred_region
          _
        $region32: #{tpu_custom_call.1} parent=11 // pred_fallthru
          _
        // Predicated region
        $region33: #{tpu_custom_call.1} parent=11 // pred_check
          %p268 = pneg %p170
        $region34: #{tpu_custom_call.1} parent=11 // pred_check_branch
          %270 = sbr.rel (%p268) target = $region36
        $region35: #{tpu_custom_call.1} parent=11 // pred_region
          _
        $region36: #{tpu_custom_call.1} parent=11 // pred_fallthru
          _
        // Predicated region
        $region37: #{tpu_custom_call.1} parent=11 // pred_check
          %p271 = pneg %p191
        $region38: #{tpu_custom_call.1} parent=11 // pred_check_branch
          %273 = sbr.rel (%p271) target = $region40
        $region39: #{tpu_custom_call.1} parent=11 // pred_region
          _
        $region40: #{tpu_custom_call.1} parent=11 // pred_fallthru
          _
        // Predicated region
        $region41: #{tpu_custom_call.1} parent=11 // pred_check
          %p274 = pneg %p212
        $region42: #{tpu_custom_call.1} parent=11 // pred_check_branch
          %276 = sbr.rel (%p274) target = $region44
        $region43: #{tpu_custom_call.1} parent=11 // pred_region
          _
        $region44: #{tpu_custom_call.1} parent=11 // pred_fallthru
          _
      $region12: #{tpu_custom_call.1} parent=5 // pred_fallthru
        _
      %p277 = scmp.lt.s32.totalorder %s18, 2
      // Predicated region
      $region45: #{tpu_custom_call.1} parent=5 // pred_check
        %p278 = pneg %p277
      $region46: #{tpu_custom_call.1} parent=5 // pred_check_branch
        %280 = sbr.rel (%p278) target = $region48
      $region47: #{tpu_custom_call.1} parent=5 // pred_region
        // Predicated region
        $region49: #{tpu_custom_call.1} parent=47 // pred_check
          %p281 = pneg %p38
        $region50: #{tpu_custom_call.1} parent=47 // pred_check_branch
          %283 = sbr.rel (%p281) target = $region52
        $region51: #{tpu_custom_call.1} parent=47 // pred_region
          %s284 = smul.u32 256, %s18
          %s285 = ssub.s32 313, %s284
          %p286 = scmp.lt.s32.totalorder %s285, 256
          %s287 = scalar_select %p286, %s285, 256
          %s288 = smul.u32 128, %s287
          %p289 = scmp.lt.s32.totalorder %s284, 312
          %s290 = scalar_select %p289, %s284, 312
          %s291 = smul.addr %s290, 8
          %s292 = scalar_lea.vmem %s0, %s291
          %s293 = smul.u32 256, %s18
          %s294 = ssub.s32 313, %s293
          %p295 = scmp.lt.s32.totalorder %s294, 256
          %s296 = scalar_select %p295, %s294, 256
          %s297 = smul.u32 128, %s296
        $region52: #{tpu_custom_call.1} parent=47 // pred_fallthru
          _
      $region48: #{tpu_custom_call.1} parent=5 // pred_fallthru
        _
      %p298 = scmp.le.s32.totalorder 1, %s18
      %p299 = scmp.lt.s32.totalorder %s18, 3
      %p300 = pnand %p298, %p299
      %p301 = pneg %p300
      // Predicated region
      $region53: #{tpu_custom_call.1} parent=5 // pred_check
        _
      $region54: #{tpu_custom_call.1} parent=5 // pred_check_branch
        %303 = sbr.rel (%p300) target = $region56
      $region55: #{tpu_custom_call.1} parent=5 // pred_region
        %s304 = ssub.s32 %s18, 1
        %s305 = smul.u32 256, %s23
        %s306 = ssub.s32 313, %s305
        %p307 = scmp.lt.s32.totalorder %s306, 256
        %s308 = scalar_select %p307, %s306, 256
        %s309 = smul.u32 128, %s308
        %p310 = scmp.lt.s32.totalorder %s305, 312
        %s311 = scalar_select %p310, %s305, 312
        %s312 = smul.addr %s311, 8
        %s313 = scalar_lea.vmem %s0, %s312
        %p314 = pneg %p44
        %p315 = pneg %p41
        %p316 = pneg %p65
        %p317 = pneg %p62
        %p318 = pneg %p86
        %p319 = pneg %p83
        %p320 = pneg %p107
        %p321 = pneg %p104
        %p322 = pneg %p128
        %p323 = pneg %p125
        %p324 = pneg %p149
        %p325 = pneg %p146
        %p326 = pneg %p170
        %p327 = pneg %p167
        %p328 = pneg %p191
        %p329 = pneg %p188
        %p330 = pneg %p212
        %p331 = pneg %p209
        %p332 = pneg %p238
        %p333 = pneg %p235
        %s334 = sand.u32 %s225, 1
        %s335 = scalar_lea.sflag [#allocation3], %s334
        %s336 = sand.u32 %s225, 1
        %s337 = smul.addr %s336, 32
        %s338 = scalar_lea.vmem [#allocation2], %s337
        %s339 = smul.u32 256, %s23
        %s340 = ssub.s32 313, %s339
        %p341 = scmp.lt.s32.totalorder %s340, 256
        %s342 = scalar_select %p341, %s340, 256
        %s343 = smul.u32 128, %s342
        %p344 = scmp.lt.s32.totalorder %s339, 312
        %s345 = scalar_select %p344, %s339, 312
        %s346 = smul.addr %s345, 8
        %s347 = scalar_lea.vmem %s0, %s346
        %s348 = smul.u32 256, %s23
        %s349 = ssub.s32 313, %s348
        %p350 = scmp.lt.s32.totalorder %s349, 256
        %s351 = scalar_select %p350, %s349, 256
        %s352 = smul.u32 128, %s351
        %s353 = smul.u32 16, %s23
        %s354 = ssub.s32 20, %s353
        %p355 = scmp.lt.s32.totalorder %s354, 16
        %s356 = scalar_select %p355, %s354, 16
        %s357 = smul.u32 32, %s356
        %v359 = vld [vmem:[%s1] sm:$0xf]
        %v360 = vld [vmem:[%s1 + $0x4] sm:$0xf]
        %v361 = vld [vmem:[%s1 + $0x8] sm:$0xf]
        %v362 = vld [vmem:[%s1 + $0xc] sm:$0xf]
        %v363 = vld [vmem:[%s1 + $0x10] sm:$0xf]
        %v364 = vld [vmem:[%s1 + $0x14] sm:$0xf]
        %v365 = vld [vmem:[%s1 + $0x18] sm:$0xf]
        %v366 = vld [vmem:[%s1 + $0x1c] sm:$0xf]
        %v367 = vld [vmem:[%s1 + $0x20] sm:$0xf]
        %v368 = vld [vmem:[%s1 + $0x24] sm:$0xf]
        %v369 = vld [vmem:[%s1 + $0x28] sm:$0xf]
        %v370 = vld [vmem:[%s1 + $0x2c] sm:$0xf]
        %v371 = vld [vmem:[%s1 + $0x30] sm:$0xf]
        %v372 = vld [vmem:[%s1 + $0x34] sm:$0xf]
        %v373 = vld [vmem:[%s1 + $0x38] sm:$0xf]
        %v374 = vld [vmem:[%s1 + $0x3c] sm:$0xf]
        %v375 = vld [vmem:[%s347] sm:$0xff]
        %v376 = vld [vmem:[%s347 + $0x8] sm:$0xff]
        %v377 = vld [vmem:[%s347 + $0x10] sm:$0xff]
        %v378 = vld [vmem:[%s347 + $0x18] sm:$0xff]
        %v379 = vld [vmem:[%s347 + $0x20] sm:$0xff]
        %v380 = vld [vmem:[%s347 + $0x28] sm:$0xff]
        %v381 = vld [vmem:[%s347 + $0x30] sm:$0xff]
        %v382 = vld [vmem:[%s347 + $0x38] sm:$0xff]
        %v383 = vld [vmem:[%s347 + $0x40] sm:$0xff]
        %v384 = vld [vmem:[%s347 + $0x48] sm:$0xff]
        %v385 = vld [vmem:[%s347 + $0x50] sm:$0xff]
        %v386 = vld [vmem:[%s347 + $0x58] sm:$0xff]
        %v387 = vld [vmem:[%s347 + $0x60] sm:$0xff]
        %v388 = vld [vmem:[%s347 + $0x68] sm:$0xff]
        %v389 = vld [vmem:[%s347 + $0x70] sm:$0xff]
        %v390 = vld [vmem:[%s347 + $0x78] sm:$0xff]
        %v391 = vld [vmem:[%s347 + $0x80] sm:$0xff]
        %v392 = vld [vmem:[%s347 + $0x88] sm:$0xff]
        %v393 = vld [vmem:[%s347 + $0x90] sm:$0xff]
        %v394 = vld [vmem:[%s347 + $0x98] sm:$0xff]
        %v395 = vld [vmem:[%s347 + $0xa0] sm:$0xff]
        %v396 = vld [vmem:[%s347 + $0xa8] sm:$0xff]
        %v397 = vld [vmem:[%s347 + $0xb0] sm:$0xff]
        %v398 = vld [vmem:[%s347 + $0xb8] sm:$0xff]
        %v399 = vld [vmem:[%s347 + $0xc0] sm:$0xff]
        %v400 = vld [vmem:[%s347 + $0xc8] sm:$0xff]
        %v401 = vld [vmem:[%s347 + $0xd0] sm:$0xff]
        %v402 = vld [vmem:[%s347 + $0xd8] sm:$0xff]
        %v403 = vld [vmem:[%s347 + $0xe0] sm:$0xff]
        %v404 = vld [vmem:[%s347 + $0xe8] sm:$0xff]
        %v405 = vld [vmem:[%s347 + $0xf0] sm:$0xff]
        %v406 = vld [vmem:[%s347 + $0xf8] sm:$0xff]
        %v407 = vld [vmem:[%s347 + $0x100] sm:$0xff]
        %v408 = vld [vmem:[%s347 + $0x108] sm:$0xff]
        %v409 = vld [vmem:[%s347 + $0x110] sm:$0xff]
        %v410 = vld [vmem:[%s347 + $0x118] sm:$0xff]
        %v411 = vld [vmem:[%s347 + $0x120] sm:$0xff]
        %v412 = vld [vmem:[%s347 + $0x128] sm:$0xff]
        %v413 = vld [vmem:[%s347 + $0x130] sm:$0xff]
        %v414 = vld [vmem:[%s347 + $0x138] sm:$0xff]
        %v415 = vld [vmem:[%s347 + $0x140] sm:$0xff]
        %v416 = vld [vmem:[%s347 + $0x148] sm:$0xff]
        %v417 = vld [vmem:[%s347 + $0x150] sm:$0xff]
        %v418 = vld [vmem:[%s347 + $0x158] sm:$0xff]
        %v419 = vld [vmem:[%s347 + $0x160] sm:$0xff]
        %v420 = vld [vmem:[%s347 + $0x168] sm:$0xff]
        %v421 = vld [vmem:[%s347 + $0x170] sm:$0xff]
        %v422 = vld [vmem:[%s347 + $0x178] sm:$0xff]
        %v423 = vld [vmem:[%s347 + $0x180] sm:$0xff]
        %v424 = vld [vmem:[%s347 + $0x188] sm:$0xff]
        %v425 = vld [vmem:[%s347 + $0x190] sm:$0xff]
        %v426 = vld [vmem:[%s347 + $0x198] sm:$0xff]
        %v427 = vld [vmem:[%s347 + $0x1a0] sm:$0xff]
        %v428 = vld [vmem:[%s347 + $0x1a8] sm:$0xff]
        %v429 = vld [vmem:[%s347 + $0x1b0] sm:$0xff]
        %v430 = vld [vmem:[%s347 + $0x1b8] sm:$0xff]
        %v431 = vld [vmem:[%s347 + $0x1c0] sm:$0xff]
        %v432 = vld [vmem:[%s347 + $0x1c8] sm:$0xff]
        %v433 = vld [vmem:[%s347 + $0x1d0] sm:$0xff]
        %v434 = vld [vmem:[%s347 + $0x1d8] sm:$0xff]
        %v435 = vld [vmem:[%s347 + $0x1e0] sm:$0xff]
        %v436 = vld [vmem:[%s347 + $0x1e8] sm:$0xff]
        %v437 = vld [vmem:[%s347 + $0x1f0] sm:$0xff]
        %v438 = vld [vmem:[%s347 + $0x1f8] sm:$0xff]
        %v439 = vld [vmem:[%s347 + $0x200] sm:$0xff]
        %v440 = vld [vmem:[%s347 + $0x208] sm:$0xff]
        %v441 = vld [vmem:[%s347 + $0x210] sm:$0xff]
        %v442 = vld [vmem:[%s347 + $0x218] sm:$0xff]
        %v443 = vld [vmem:[%s347 + $0x220] sm:$0xff]
        %v444 = vld [vmem:[%s347 + $0x228] sm:$0xff]
        %v445 = vld [vmem:[%s347 + $0x230] sm:$0xff]
        %v446 = vld [vmem:[%s347 + $0x238] sm:$0xff]
        %v447 = vld [vmem:[%s347 + $0x240] sm:$0xff]
        %v448 = vld [vmem:[%s347 + $0x248] sm:$0xff]
        %v449 = vld [vmem:[%s347 + $0x250] sm:$0xff]
        %v450 = vld [vmem:[%s347 + $0x258] sm:$0xff]
        %v451 = vld [vmem:[%s347 + $0x260] sm:$0xff]
        %v452 = vld [vmem:[%s347 + $0x268] sm:$0xff]
        %v453 = vld [vmem:[%s347 + $0x270] sm:$0xff]
        %v454 = vld [vmem:[%s347 + $0x278] sm:$0xff]
        %v455 = vld [vmem:[%s347 + $0x280] sm:$0xff]
        %v456 = vld [vmem:[%s347 + $0x288] sm:$0xff]
        %v457 = vld [vmem:[%s347 + $0x290] sm:$0xff]
        %v458 = vld [vmem:[%s347 + $0x298] sm:$0xff]
        %v459 = vld [vmem:[%s347 + $0x2a0] sm:$0xff]
        %v460 = vld [vmem:[%s347 + $0x2a8] sm:$0xff]
        %v461 = vld [vmem:[%s347 + $0x2b0] sm:$0xff]
        %v462 = vld [vmem:[%s347 + $0x2b8] sm:$0xff]
        %v463 = vld [vmem:[%s347 + $0x2c0] sm:$0xff]
        %v464 = vld [vmem:[%s347 + $0x2c8] sm:$0xff]
        %v465 = vld [vmem:[%s347 + $0x2d0] sm:$0xff]
        %v466 = vld [vmem:[%s347 + $0x2d8] sm:$0xff]
        %v467 = vld [vmem:[%s347 + $0x2e0] sm:$0xff]
        %v468 = vld [vmem:[%s347 + $0x2e8] sm:$0xff]
        %v469 = vld [vmem:[%s347 + $0x2f0] sm:$0xff]
        %v470 = vld [vmem:[%s347 + $0x2f8] sm:$0xff]
        %v471 = vld [vmem:[%s347 + $0x300] sm:$0xff]
        %v472 = vld [vmem:[%s347 + $0x308] sm:$0xff]
        %v473 = vld [vmem:[%s347 + $0x310] sm:$0xff]
        %v474 = vld [vmem:[%s347 + $0x318] sm:$0xff]
        %v475 = vld [vmem:[%s347 + $0x320] sm:$0xff]
        %v476 = vld [vmem:[%s347 + $0x328] sm:$0xff]
        %v477 = vld [vmem:[%s347 + $0x330] sm:$0xff]
        %v478 = vld [vmem:[%s347 + $0x338] sm:$0xff]
        %v479 = vld [vmem:[%s347 + $0x340] sm:$0xff]
        %v480 = vld [vmem:[%s347 + $0x348] sm:$0xff]
        %v481 = vld [vmem:[%s347 + $0x350] sm:$0xff]
        %v482 = vld [vmem:[%s347 + $0x358] sm:$0xff]
        %v483 = vld [vmem:[%s347 + $0x360] sm:$0xff]
        %v484 = vld [vmem:[%s347 + $0x368] sm:$0xff]
        %v485 = vld [vmem:[%s347 + $0x370] sm:$0xff]
        %v486 = vld [vmem:[%s347 + $0x378] sm:$0xff]
        %v487 = vld [vmem:[%s347 + $0x380] sm:$0xff]
        %v488 = vld [vmem:[%s347 + $0x388] sm:$0xff]
        %v489 = vld [vmem:[%s347 + $0x390] sm:$0xff]
        %v490 = vld [vmem:[%s347 + $0x398] sm:$0xff]
        %v491 = vld [vmem:[%s347 + $0x3a0] sm:$0xff]
        %v492 = vld [vmem:[%s347 + $0x3a8] sm:$0xff]
        %v493 = vld [vmem:[%s347 + $0x3b0] sm:$0xff]
        %v494 = vld [vmem:[%s347 + $0x3b8] sm:$0xff]
        %v495 = vld [vmem:[%s347 + $0x3c0] sm:$0xff]
        %v496 = vld [vmem:[%s347 + $0x3c8] sm:$0xff]
        %v497 = vld [vmem:[%s347 + $0x3d0] sm:$0xff]
        %v498 = vld [vmem:[%s347 + $0x3d8] sm:$0xff]
        %v499 = vld [vmem:[%s347 + $0x3e0] sm:$0xff]
        %v500 = vld [vmem:[%s347 + $0x3e8] sm:$0xff]
        %v501 = vld [vmem:[%s347 + $0x3f0] sm:$0xff]
        %v502 = vld [vmem:[%s347 + $0x3f8] sm:$0xff]
        %v503 = vld [vmem:[%s347 + $0x400] sm:$0xff]
        %v504 = vld [vmem:[%s347 + $0x408] sm:$0xff]
        %v505 = vld [vmem:[%s347 + $0x410] sm:$0xff]
        %v506 = vld [vmem:[%s347 + $0x418] sm:$0xff]
        %v507 = vld [vmem:[%s347 + $0x420] sm:$0xff]
        %v508 = vld [vmem:[%s347 + $0x428] sm:$0xff]
        %v509 = vld [vmem:[%s347 + $0x430] sm:$0xff]
        %v510 = vld [vmem:[%s347 + $0x438] sm:$0xff]
        %v511 = vld [vmem:[%s347 + $0x440] sm:$0xff]
        %v512 = vld [vmem:[%s347 + $0x448] sm:$0xff]
        %v513 = vld [vmem:[%s347 + $0x450] sm:$0xff]
        %v514 = vld [vmem:[%s347 + $0x458] sm:$0xff]
        %v515 = vld [vmem:[%s347 + $0x460] sm:$0xff]
        %v516 = vld [vmem:[%s347 + $0x468] sm:$0xff]
        %v517 = vld [vmem:[%s347 + $0x470] sm:$0xff]
        %v518 = vld [vmem:[%s347 + $0x478] sm:$0xff]
        %v519 = vld [vmem:[%s347 + $0x480] sm:$0xff]
        %v520 = vld [vmem:[%s347 + $0x488] sm:$0xff]
        %v521 = vld [vmem:[%s347 + $0x490] sm:$0xff]
        %v522 = vld [vmem:[%s347 + $0x498] sm:$0xff]
        %v523 = vld [vmem:[%s347 + $0x4a0] sm:$0xff]
        %v524 = vld [vmem:[%s347 + $0x4a8] sm:$0xff]
        %v525 = vld [vmem:[%s347 + $0x4b0] sm:$0xff]
        %v526 = vld [vmem:[%s347 + $0x4b8] sm:$0xff]
        %v527 = vld [vmem:[%s347 + $0x4c0] sm:$0xff]
        %v528 = vld [vmem:[%s347 + $0x4c8] sm:$0xff]
        %v529 = vld [vmem:[%s347 + $0x4d0] sm:$0xff]
        %v530 = vld [vmem:[%s347 + $0x4d8] sm:$0xff]
        %v531 = vld [vmem:[%s347 + $0x4e0] sm:$0xff]
        %v532 = vld [vmem:[%s347 + $0x4e8] sm:$0xff]
        %v533 = vld [vmem:[%s347 + $0x4f0] sm:$0xff]
        %v534 = vld [vmem:[%s347 + $0x4f8] sm:$0xff]
        %v535 = vld [vmem:[%s347 + $0x500] sm:$0xff]
        %v536 = vld [vmem:[%s347 + $0x508] sm:$0xff]
        %v537 = vld [vmem:[%s347 + $0x510] sm:$0xff]
        %v538 = vld [vmem:[%s347 + $0x518] sm:$0xff]
        %v539 = vld [vmem:[%s347 + $0x520] sm:$0xff]
        %v540 = vld [vmem:[%s347 + $0x528] sm:$0xff]
        %v541 = vld [vmem:[%s347 + $0x530] sm:$0xff]
        %v542 = vld [vmem:[%s347 + $0x538] sm:$0xff]
        %v543 = vld [vmem:[%s347 + $0x540] sm:$0xff]
        %v544 = vld [vmem:[%s347 + $0x548] sm:$0xff]
        %v545 = vld [vmem:[%s347 + $0x550] sm:$0xff]
        %v546 = vld [vmem:[%s347 + $0x558] sm:$0xff]
        %v547 = vld [vmem:[%s347 + $0x560] sm:$0xff]
        %v548 = vld [vmem:[%s347 + $0x568] sm:$0xff]
        %v549 = vld [vmem:[%s347 + $0x570] sm:$0xff]
        %v550 = vld [vmem:[%s347 + $0x578] sm:$0xff]
        %v551 = vld [vmem:[%s347 + $0x580] sm:$0xff]
        %v552 = vld [vmem:[%s347 + $0x588] sm:$0xff]
        %v553 = vld [vmem:[%s347 + $0x590] sm:$0xff]
        %v554 = vld [vmem:[%s347 + $0x598] sm:$0xff]
        %v555 = vld [vmem:[%s347 + $0x5a0] sm:$0xff]
        %v556 = vld [vmem:[%s347 + $0x5a8] sm:$0xff]
        %v557 = vld [vmem:[%s347 + $0x5b0] sm:$0xff]
        %v558 = vld [vmem:[%s347 + $0x5b8] sm:$0xff]
        %v559 = vld [vmem:[%s347 + $0x5c0] sm:$0xff]
        %v560 = vld [vmem:[%s347 + $0x5c8] sm:$0xff]
        %v561 = vld [vmem:[%s347 + $0x5d0] sm:$0xff]
        %v562 = vld [vmem:[%s347 + $0x5d8] sm:$0xff]
        %v563 = vld [vmem:[%s347 + $0x5e0] sm:$0xff]
        %v564 = vld [vmem:[%s347 + $0x5e8] sm:$0xff]
        %v565 = vld [vmem:[%s347 + $0x5f0] sm:$0xff]
        %v566 = vld [vmem:[%s347 + $0x5f8] sm:$0xff]
        %v567 = vld [vmem:[%s347 + $0x600] sm:$0xff]
        %v568 = vld [vmem:[%s347 + $0x608] sm:$0xff]
        %v569 = vld [vmem:[%s347 + $0x610] sm:$0xff]
        %v570 = vld [vmem:[%s347 + $0x618] sm:$0xff]
        %v571 = vld [vmem:[%s347 + $0x620] sm:$0xff]
        %v572 = vld [vmem:[%s347 + $0x628] sm:$0xff]
        %v573 = vld [vmem:[%s347 + $0x630] sm:$0xff]
        %v574 = vld [vmem:[%s347 + $0x638] sm:$0xff]
        %v575 = vld [vmem:[%s347 + $0x640] sm:$0xff]
        %v576 = vld [vmem:[%s347 + $0x648] sm:$0xff]
        %v577 = vld [vmem:[%s347 + $0x650] sm:$0xff]
        %v578 = vld [vmem:[%s347 + $0x658] sm:$0xff]
        %v579 = vld [vmem:[%s347 + $0x660] sm:$0xff]
        %v580 = vld [vmem:[%s347 + $0x668] sm:$0xff]
        %v581 = vld [vmem:[%s347 + $0x670] sm:$0xff]
        %v582 = vld [vmem:[%s347 + $0x678] sm:$0xff]
        %v583 = vld [vmem:[%s347 + $0x680] sm:$0xff]
        %v584 = vld [vmem:[%s347 + $0x688] sm:$0xff]
        %v585 = vld [vmem:[%s347 + $0x690] sm:$0xff]
        %v586 = vld [vmem:[%s347 + $0x698] sm:$0xff]
        %v587 = vld [vmem:[%s347 + $0x6a0] sm:$0xff]
        %v588 = vld [vmem:[%s347 + $0x6a8] sm:$0xff]
        %v589 = vld [vmem:[%s347 + $0x6b0] sm:$0xff]
        %v590 = vld [vmem:[%s347 + $0x6b8] sm:$0xff]
        %v591 = vld [vmem:[%s347 + $0x6c0] sm:$0xff]
        %v592 = vld [vmem:[%s347 + $0x6c8] sm:$0xff]
        %v593 = vld [vmem:[%s347 + $0x6d0] sm:$0xff]
        %v594 = vld [vmem:[%s347 + $0x6d8] sm:$0xff]
        %v595 = vld [vmem:[%s347 + $0x6e0] sm:$0xff]
        %v596 = vld [vmem:[%s347 + $0x6e8] sm:$0xff]
        %v597 = vld [vmem:[%s347 + $0x6f0] sm:$0xff]
        %v598 = vld [vmem:[%s347 + $0x6f8] sm:$0xff]
        %v599 = vld [vmem:[%s347 + $0x700] sm:$0xff]
        %v600 = vld [vmem:[%s347 + $0x708] sm:$0xff]
        %v601 = vld [vmem:[%s347 + $0x710] sm:$0xff]
        %v602 = vld [vmem:[%s347 + $0x718] sm:$0xff]
        %v603 = vld [vmem:[%s347 + $0x720] sm:$0xff]
        %v604 = vld [vmem:[%s347 + $0x728] sm:$0xff]
        %v605 = vld [vmem:[%s347 + $0x730] sm:$0xff]
        %v606 = vld [vmem:[%s347 + $0x738] sm:$0xff]
        %v607 = vld [vmem:[%s347 + $0x740] sm:$0xff]
        %v608 = vld [vmem:[%s347 + $0x748] sm:$0xff]
        %v609 = vld [vmem:[%s347 + $0x750] sm:$0xff]
        %v610 = vld [vmem:[%s347 + $0x758] sm:$0xff]
        %v611 = vld [vmem:[%s347 + $0x760] sm:$0xff]
        %v612 = vld [vmem:[%s347 + $0x768] sm:$0xff]
        %v613 = vld [vmem:[%s347 + $0x770] sm:$0xff]
        %v614 = vld [vmem:[%s347 + $0x778] sm:$0xff]
        %v615 = vld [vmem:[%s347 + $0x780] sm:$0xff]
        %v616 = vld [vmem:[%s347 + $0x788] sm:$0xff]
        %v617 = vld [vmem:[%s347 + $0x790] sm:$0xff]
        %v618 = vld [vmem:[%s347 + $0x798] sm:$0xff]
        %v619 = vld [vmem:[%s347 + $0x7a0] sm:$0xff]
        %v620 = vld [vmem:[%s347 + $0x7a8] sm:$0xff]
        %v621 = vld [vmem:[%s347 + $0x7b0] sm:$0xff]
        %v622 = vld [vmem:[%s347 + $0x7b8] sm:$0xff]
        %v623 = vld [vmem:[%s347 + $0x7c0] sm:$0xff]
        %v624 = vld [vmem:[%s347 + $0x7c8] sm:$0xff]
        %v625 = vld [vmem:[%s347 + $0x7d0] sm:$0xff]
        %v626 = vld [vmem:[%s347 + $0x7d8] sm:$0xff]
        %v627 = vld [vmem:[%s347 + $0x7e0] sm:$0xff]
        %v628 = vld [vmem:[%s347 + $0x7e8] sm:$0xff]
        %v629 = vld [vmem:[%s347 + $0x7f0] sm:$0xff]
        %v630 = vld [vmem:[%s347 + $0x7f8] sm:$0xff]
        %v631 = vpack.c.bf16 %v376, %v375
        %v632 = vpack.c.bf16 %v378, %v377
        %v633 = vpack.c.bf16 %v380, %v379
        %v634 = vpack.c.bf16 %v382, %v381
        %v635 = vpack.c.bf16 %v384, %v383
        %v636 = vpack.c.bf16 %v386, %v385
        %v637 = vpack.c.bf16 %v388, %v387
        %v638 = vpack.c.bf16 %v390, %v389
        %v639 = vpack.c.bf16 %v392, %v391
        %v640 = vpack.c.bf16 %v394, %v393
        %v641 = vpack.c.bf16 %v396, %v395
        %v642 = vpack.c.bf16 %v398, %v397
        %v643 = vpack.c.bf16 %v400, %v399
        %v644 = vpack.c.bf16 %v402, %v401
        %v645 = vpack.c.bf16 %v404, %v403
        %v646 = vpack.c.bf16 %v406, %v405
        %v647 = vpack.c.bf16 %v408, %v407
        %v648 = vpack.c.bf16 %v410, %v409
        %v649 = vpack.c.bf16 %v412, %v411
        %v650 = vpack.c.bf16 %v414, %v413
        %v651 = vpack.c.bf16 %v416, %v415
        %v652 = vpack.c.bf16 %v418, %v417
        %v653 = vpack.c.bf16 %v420, %v419
        %v654 = vpack.c.bf16 %v422, %v421
        %v655 = vpack.c.bf16 %v424, %v423
        %v656 = vpack.c.bf16 %v426, %v425
        %v657 = vpack.c.bf16 %v428, %v427
        %v658 = vpack.c.bf16 %v430, %v429
        %v659 = vpack.c.bf16 %v432, %v431
        %v660 = vpack.c.bf16 %v434, %v433
        %v661 = vpack.c.bf16 %v436, %v435
        %v662 = vpack.c.bf16 %v438, %v437
        %v663 = vpack.c.bf16 %v440, %v439
        %v664 = vpack.c.bf16 %v442, %v441
        %v665 = vpack.c.bf16 %v444, %v443
        %v666 = vpack.c.bf16 %v446, %v445
        %v667 = vpack.c.bf16 %v448, %v447
        %v668 = vpack.c.bf16 %v450, %v449
        %v669 = vpack.c.bf16 %v452, %v451
        %v670 = vpack.c.bf16 %v454, %v453
        %v671 = vpack.c.bf16 %v456, %v455
        %v672 = vpack.c.bf16 %v458, %v457
        %v673 = vpack.c.bf16 %v460, %v459
        %v674 = vpack.c.bf16 %v462, %v461
        %v675 = vpack.c.bf16 %v464, %v463
        %v676 = vpack.c.bf16 %v466, %v465
        %v677 = vpack.c.bf16 %v468, %v467
        %v678 = vpack.c.bf16 %v470, %v469
        %v679 = vpack.c.bf16 %v472, %v471
        %v680 = vpack.c.bf16 %v474, %v473
        %v681 = vpack.c.bf16 %v476, %v475
        %v682 = vpack.c.bf16 %v478, %v477
        %v683 = vpack.c.bf16 %v480, %v479
        %v684 = vpack.c.bf16 %v482, %v481
        %v685 = vpack.c.bf16 %v484, %v483
        %v686 = vpack.c.bf16 %v486, %v485
        %v687 = vpack.c.bf16 %v488, %v487
        %v688 = vpack.c.bf16 %v490, %v489
        %v689 = vpack.c.bf16 %v492, %v491
        %v690 = vpack.c.bf16 %v494, %v493
        %v691 = vpack.c.bf16 %v496, %v495
        %v692 = vpack.c.bf16 %v498, %v497
        %v693 = vpack.c.bf16 %v500, %v499
        %v694 = vpack.c.bf16 %v502, %v501
        %v695 = vpack.c.bf16 %v504, %v503
        %v696 = vpack.c.bf16 %v506, %v505
        %v697 = vpack.c.bf16 %v508, %v507
        %v698 = vpack.c.bf16 %v510, %v509
        %v699 = vpack.c.bf16 %v512, %v511
        %v700 = vpack.c.bf16 %v514, %v513
        %v701 = vpack.c.bf16 %v516, %v515
        %v702 = vpack.c.bf16 %v518, %v517
        %v703 = vpack.c.bf16 %v520, %v519
        %v704 = vpack.c.bf16 %v522, %v521
        %v705 = vpack.c.bf16 %v524, %v523
        %v706 = vpack.c.bf16 %v526, %v525
        %v707 = vpack.c.bf16 %v528, %v527
        %v708 = vpack.c.bf16 %v530, %v529
        %v709 = vpack.c.bf16 %v532, %v531
        %v710 = vpack.c.bf16 %v534, %v533
        %v711 = vpack.c.bf16 %v536, %v535
        %v712 = vpack.c.bf16 %v538, %v537
        %v713 = vpack.c.bf16 %v540, %v539
        %v714 = vpack.c.bf16 %v542, %v541
        %v715 = vpack.c.bf16 %v544, %v543
        %v716 = vpack.c.bf16 %v546, %v545
        %v717 = vpack.c.bf16 %v548, %v547
        %v718 = vpack.c.bf16 %v550, %v549
        %v719 = vpack.c.bf16 %v552, %v551
        %v720 = vpack.c.bf16 %v554, %v553
        %v721 = vpack.c.bf16 %v556, %v555
        %v722 = vpack.c.bf16 %v558, %v557
        %v723 = vpack.c.bf16 %v560, %v559
        %v724 = vpack.c.bf16 %v562, %v561
        %v725 = vpack.c.bf16 %v564, %v563
        %v726 = vpack.c.bf16 %v566, %v565
        %v727 = vpack.c.bf16 %v568, %v567
        %v728 = vpack.c.bf16 %v570, %v569
        %v729 = vpack.c.bf16 %v572, %v571
        %v730 = vpack.c.bf16 %v574, %v573
        %v731 = vpack.c.bf16 %v576, %v575
        %v732 = vpack.c.bf16 %v578, %v577
        %v733 = vpack.c.bf16 %v580, %v579
        %v734 = vpack.c.bf16 %v582, %v581
        %v735 = vpack.c.bf16 %v584, %v583
        %v736 = vpack.c.bf16 %v586, %v585
        %v737 = vpack.c.bf16 %v588, %v587
        %v738 = vpack.c.bf16 %v590, %v589
        %v739 = vpack.c.bf16 %v592, %v591
        %v740 = vpack.c.bf16 %v594, %v593
        %v741 = vpack.c.bf16 %v596, %v595
        %v742 = vpack.c.bf16 %v598, %v597
        %v743 = vpack.c.bf16 %v600, %v599
        %v744 = vpack.c.bf16 %v602, %v601
        %v745 = vpack.c.bf16 %v604, %v603
        %v746 = vpack.c.bf16 %v606, %v605
        %v747 = vpack.c.bf16 %v608, %v607
        %v748 = vpack.c.bf16 %v610, %v609
        %v749 = vpack.c.bf16 %v612, %v611
        %v750 = vpack.c.bf16 %v614, %v613
        %v751 = vpack.c.bf16 %v616, %v615
        %v752 = vpack.c.bf16 %v618, %v617
        %v753 = vpack.c.bf16 %v620, %v619
        %v754 = vpack.c.bf16 %v622, %v621
        %v755 = vpack.c.bf16 %v624, %v623
        %v756 = vpack.c.bf16 %v626, %v625
        %v757 = vpack.c.bf16 %v628, %v627
        %v758 = vpack.c.bf16 %v630, %v629
        %v759 = vld [vmem:[%s2] sm:$0xff]
        %v760 = vld [vmem:[%s2 + $0x8] sm:$0xff]
        %v761 = vld [vmem:[%s2 + $0x10] sm:$0xff]
        %v762 = vld [vmem:[%s2 + $0x18] sm:$0xff]
        %v763 = vld [vmem:[%s2 + $0x20] sm:$0xff]
        %v764 = vld [vmem:[%s2 + $0x28] sm:$0xff]
        %v765 = vld [vmem:[%s2 + $0x30] sm:$0xff]
        %v766 = vld [vmem:[%s2 + $0x38] sm:$0xff]
        %v767 = vld [vmem:[%s2 + $0x40] sm:$0xff]
        %v768 = vld [vmem:[%s2 + $0x48] sm:$0xff]
        %v769 = vld [vmem:[%s2 + $0x50] sm:$0xff]
        %v770 = vld [vmem:[%s2 + $0x58] sm:$0xff]
        %v771 = vld [vmem:[%s2 + $0x60] sm:$0xff]
        %v772 = vld [vmem:[%s2 + $0x68] sm:$0xff]
        %v773 = vld [vmem:[%s2 + $0x70] sm:$0xff]
        %v774 = vld [vmem:[%s2 + $0x78] sm:$0xff]
        %776 = vset.pattern.permute.xlu0 0
        %777 = vperm.xlu0 %776, %v759
        %v778 = vpop.permute.xlu0 %777
        %781 = vset.pattern.permute.xlu0 0
        %782 = vperm.xlu0 %781, %v760
        %v783 = vpop.permute.xlu0 %782
        %786 = vset.pattern.permute.xlu0 0
        %787 = vperm.xlu0 %786, %v761
        %v788 = vpop.permute.xlu0 %787
        %791 = vset.pattern.permute.xlu0 0
        %792 = vperm.xlu0 %791, %v762
        %v793 = vpop.permute.xlu0 %792
        %796 = vset.pattern.permute.xlu0 0
        %797 = vperm.xlu0 %796, %v763
        %v798 = vpop.permute.xlu0 %797
        %801 = vset.pattern.permute.xlu0 0
        %802 = vperm.xlu0 %801, %v764
        %v803 = vpop.permute.xlu0 %802
        %806 = vset.pattern.permute.xlu0 0
        %807 = vperm.xlu0 %806, %v765
        %v808 = vpop.permute.xlu0 %807
        %811 = vset.pattern.permute.xlu0 0
        %812 = vperm.xlu0 %811, %v766
        %v813 = vpop.permute.xlu0 %812
        %816 = vset.pattern.permute.xlu0 0
        %817 = vperm.xlu0 %816, %v767
        %v818 = vpop.permute.xlu0 %817
        %821 = vset.pattern.permute.xlu0 0
        %822 = vperm.xlu0 %821, %v768
        %v823 = vpop.permute.xlu0 %822
        %826 = vset.pattern.permute.xlu0 0
        %827 = vperm.xlu0 %826, %v769
        %v828 = vpop.permute.xlu0 %827
        %831 = vset.pattern.permute.xlu0 0
        %832 = vperm.xlu0 %831, %v770
        %v833 = vpop.permute.xlu0 %832
        %836 = vset.pattern.permute.xlu0 0
        %837 = vperm.xlu0 %836, %v771
        %v838 = vpop.permute.xlu0 %837
        %841 = vset.pattern.permute.xlu0 0
        %842 = vperm.xlu0 %841, %v772
        %v843 = vpop.permute.xlu0 %842
        %846 = vset.pattern.permute.xlu0 0
        %847 = vperm.xlu0 %846, %v773
        %v848 = vpop.permute.xlu0 %847
        %851 = vset.pattern.permute.xlu0 0
        %852 = vperm.xlu0 %851, %v774
        %v853 = vpop.permute.xlu0 %852
        %v871 = vunpack.c.l.b16 %v359
        %v872 = vunpack.c.l.b16 %v360
        %v873 = vunpack.c.l.b16 %v361
        %v874 = vunpack.c.l.b16 %v362
        %v875 = vunpack.c.l.b16 %v363
        %v876 = vunpack.c.l.b16 %v364
        %v877 = vunpack.c.l.b16 %v365
        %v878 = vunpack.c.l.b16 %v366
        %v879 = vunpack.c.l.b16 %v367
        %v880 = vunpack.c.l.b16 %v368
        %v881 = vunpack.c.l.b16 %v369
        %v882 = vunpack.c.l.b16 %v370
        %v883 = vunpack.c.l.b16 %v371
        %v884 = vunpack.c.l.b16 %v372
        %v885 = vunpack.c.l.b16 %v373
        %v886 = vunpack.c.l.b16 %v374
        %v887 = vpack.c.b16 %v872, %v871
        %v888 = vpack.c.b16 %v874, %v873
        %v889 = vpack.c.b16 %v876, %v875
        %v890 = vpack.c.b16 %v878, %v877
        %v891 = vpack.c.b16 %v880, %v879
        %v892 = vpack.c.b16 %v882, %v881
        %v893 = vpack.c.b16 %v884, %v883
        %v894 = vpack.c.b16 %v886, %v885
        %vm895 = vcmask 195584
        %v897 = vsel %vm895, %v887, 0
        %v900 = vsel %vm895, %v888, 0
        %v903 = vsel %vm895, %v889, 0
        %v906 = vsel %vm895, %v890, 0
        %v909 = vsel %vm895, %v891, 0
        %v912 = vsel %vm895, %v892, 0
        %v915 = vsel %vm895, %v893, 0
        %v918 = vsel %vm895, %v894, 0
        %v921 = vsel %vm895, %v631, 0
        %v924 = vsel %vm895, %v632, 0
        %v927 = vsel %vm895, %v633, 0
        %v930 = vsel %vm895, %v634, 0
        %v933 = vsel %vm895, %v635, 0
        %v936 = vsel %vm895, %v636, 0
        %v939 = vsel %vm895, %v637, 0
        %v942 = vsel %vm895, %v638, 0
        %v945 = vsel %vm895, %v639, 0
        %v948 = vsel %vm895, %v640, 0
        %v951 = vsel %vm895, %v641, 0
        %v954 = vsel %vm895, %v642, 0
        %v957 = vsel %vm895, %v643, 0
        %v960 = vsel %vm895, %v644, 0
        %v963 = vsel %vm895, %v645, 0
        %v966 = vsel %vm895, %v646, 0
        %v969 = vsel %vm895, %v647, 0
        %v972 = vsel %vm895, %v648, 0
        %v975 = vsel %vm895, %v649, 0
        %v978 = vsel %vm895, %v650, 0
        %v981 = vsel %vm895, %v651, 0
        %v984 = vsel %vm895, %v652, 0
        %v987 = vsel %vm895, %v653, 0
        %v990 = vsel %vm895, %v654, 0
        %v993 = vsel %vm895, %v655, 0
        %v996 = vsel %vm895, %v656, 0
        %v999 = vsel %vm895, %v657, 0
        %v1002 = vsel %vm895, %v658, 0
        %v1005 = vsel %vm895, %v659, 0
        %v1008 = vsel %vm895, %v660, 0
        %v1011 = vsel %vm895, %v661, 0
        %v1014 = vsel %vm895, %v662, 0
        %v1017 = vsel %vm895, %v663, 0
        %v1020 = vsel %vm895, %v664, 0
        %v1023 = vsel %vm895, %v665, 0
        %v1026 = vsel %vm895, %v666, 0
        %v1029 = vsel %vm895, %v667, 0
        %v1032 = vsel %vm895, %v668, 0
        %v1035 = vsel %vm895, %v669, 0
        %v1038 = vsel %vm895, %v670, 0
        %v1041 = vsel %vm895, %v671, 0
        %v1044 = vsel %vm895, %v672, 0
        %v1047 = vsel %vm895, %v673, 0
        %v1050 = vsel %vm895, %v674, 0
        %v1053 = vsel %vm895, %v675, 0
        %v1056 = vsel %vm895, %v676, 0
        %v1059 = vsel %vm895, %v677, 0
        %v1062 = vsel %vm895, %v678, 0
        %v1065 = vsel %vm895, %v679, 0
        %v1068 = vsel %vm895, %v680, 0
        %v1071 = vsel %vm895, %v681, 0
        %v1074 = vsel %vm895, %v682, 0
        %v1077 = vsel %vm895, %v683, 0
        %v1080 = vsel %vm895, %v684, 0
        %v1083 = vsel %vm895, %v685, 0
        %v1086 = vsel %vm895, %v686, 0
        %v1089 = vsel %vm895, %v687, 0
        %v1092 = vsel %vm895, %v688, 0
        %v1095 = vsel %vm895, %v689, 0
        %v1098 = vsel %vm895, %v690, 0
        %v1101 = vsel %vm895, %v691, 0
        %v1104 = vsel %vm895, %v692, 0
        %v1107 = vsel %vm895, %v693, 0
        %v1110 = vsel %vm895, %v694, 0
        %v1113 = vsel %vm895, %v695, 0
        %v1116 = vsel %vm895, %v696, 0
        %v1119 = vsel %vm895, %v697, 0
        %v1122 = vsel %vm895, %v698, 0
        %v1125 = vsel %vm895, %v699, 0
        %v1128 = vsel %vm895, %v700, 0
        %v1131 = vsel %vm895, %v701, 0
        %v1134 = vsel %vm895, %v702, 0
        %v1137 = vsel %vm895, %v703, 0
        %v1140 = vsel %vm895, %v704, 0
        %v1143 = vsel %vm895, %v705, 0
        %v1146 = vsel %vm895, %v706, 0
        %v1149 = vsel %vm895, %v707, 0
        %v1152 = vsel %vm895, %v708, 0
        %v1155 = vsel %vm895, %v709, 0
        %v1158 = vsel %vm895, %v710, 0
        %v1161 = vsel %vm895, %v711, 0
        %v1164 = vsel %vm895, %v712, 0
        %v1167 = vsel %vm895, %v713, 0
        %v1170 = vsel %vm895, %v714, 0
        %v1173 = vsel %vm895, %v715, 0
        %v1176 = vsel %vm895, %v716, 0
        %v1179 = vsel %vm895, %v717, 0
        %v1182 = vsel %vm895, %v718, 0
        %v1185 = vsel %vm895, %v719, 0
        %v1188 = vsel %vm895, %v720, 0
        %v1191 = vsel %vm895, %v721, 0
        %v1194 = vsel %vm895, %v722, 0
        %v1197 = vsel %vm895, %v723, 0
        %v1200 = vsel %vm895, %v724, 0
        %v1203 = vsel %vm895, %v725, 0
        %v1206 = vsel %vm895, %v726, 0
        %v1209 = vsel %vm895, %v727, 0
        %v1212 = vsel %vm895, %v728, 0
        %v1215 = vsel %vm895, %v729, 0
        %v1218 = vsel %vm895, %v730, 0
        %v1221 = vsel %vm895, %v731, 0
        %v1224 = vsel %vm895, %v732, 0
        %v1227 = vsel %vm895, %v733, 0
        %v1230 = vsel %vm895, %v734, 0
        %v1233 = vsel %vm895, %v735, 0
        %v1236 = vsel %vm895, %v736, 0
        %v1239 = vsel %vm895, %v737, 0
        %v1242 = vsel %vm895, %v738, 0
        %v1245 = vsel %vm895, %v739, 0
        %v1248 = vsel %vm895, %v740, 0
        %v1251 = vsel %vm895, %v741, 0
        %v1254 = vsel %vm895, %v742, 0
        %v1257 = vsel %vm895, %v743, 0
        %v1260 = vsel %vm895, %v744, 0
        %v1263 = vsel %vm895, %v745, 0
        %v1266 = vsel %vm895, %v746, 0
        %v1269 = vsel %vm895, %v747, 0
        %v1272 = vsel %vm895, %v748, 0
        %v1275 = vsel %vm895, %v749, 0
        %v1278 = vsel %vm895, %v750, 0
        %v1281 = vsel %vm895, %v751, 0
        %v1284 = vsel %vm895, %v752, 0
        %v1287 = vsel %vm895, %v753, 0
        %v1290 = vsel %vm895, %v754, 0
        %v1293 = vsel %vm895, %v755, 0
        %v1296 = vsel %vm895, %v756, 0
        %v1299 = vsel %vm895, %v757, 0
        %v1302 = vsel %vm895, %v758, 0
        %1304 = vmatprep.subr.bf16.mxu0 0
        %1305 = vmatpush1.bf16.xpose.msra.mxu0 %v921
        %1306 = vmatprep.subr.bf16.mxu0 0
        %1307 = vmatpush1.bf16.xpose.msra.mxu0 %v924
        %1308 = vmatprep.subr.bf16.mxu0 0
        %1309 = vmatpush1.bf16.xpose.msra.mxu0 %v927
        %1310 = vmatprep.subr.bf16.mxu0 0
        %1311 = vmatpush1.bf16.xpose.msra.mxu0 %v930
        %1312 = vmatprep.subr.bf16.mxu0 0
        %1313 = vmatpush1.bf16.xpose.msra.mxu0 %v933
        %1314 = vmatprep.subr.bf16.mxu0 0
        %1315 = vmatpush1.bf16.xpose.msra.mxu0 %v936
        %1316 = vmatprep.subr.bf16.mxu0 0
        %1317 = vmatpush1.bf16.xpose.msra.mxu0 %v939
        %1318 = vmatprep.subr.bf16.mxu0 0
        %1319 = vmatpush1.bf16.xpose.msra.mxu0 %v942
        %1320 = vmatprep.subr.bf16.mxu0 0
        %1321 = vmatpush1.bf16.xpose.msra.mxu0 %v945
        %1322 = vmatprep.subr.bf16.mxu0 0
        %1323 = vmatpush1.bf16.xpose.msra.mxu0 %v948
        %1324 = vmatprep.subr.bf16.mxu0 0
        %1325 = vmatpush1.bf16.xpose.msra.mxu0 %v951
        %1326 = vmatprep.subr.bf16.mxu0 0
        %1327 = vmatpush1.bf16.xpose.msra.mxu0 %v954
        %1328 = vmatprep.subr.bf16.mxu0 0
        %1329 = vmatpush1.bf16.xpose.msra.mxu0 %v957
        %1330 = vmatprep.subr.bf16.mxu0 0
        %1331 = vmatpush1.bf16.xpose.msra.mxu0 %v960
        %1332 = vmatprep.subr.bf16.mxu0 0
        %1333 = vmatpush1.bf16.xpose.msra.mxu0 %v963
        %1334 = vmatprep.subr.bf16.mxu0 0
        %1335 = vmatpush1.bf16.xpose.msra.mxu0 %v966
        %1336 = vmatprep.mubr.bf16.mxu0 0
        %1337 = vmatmul.mubr.bf16.gmra.mrb[0].mxu0 %v897
        %v1338 = vpop.f32.mrb[0].mxu0
        %v1339 = vadd.f32 %v778, %v1338
        %v1340 = vpop.f32.mrb[0].mxu0
        %v1341 = vadd.f32 %v778, %v1340
        %v1342 = vpop.f32.mrb[0].mxu0
        %v1343 = vadd.f32 %v783, %v1342
        %v1344 = vpop.f32.mrb[0].mxu0
        %v1345 = vadd.f32 %v783, %v1344
        %1346 = vmatprep.mubr.bf16.mxu0 0
        %1347 = vmatmul.mubr.bf16.gmra.mrb[0].mxu0 %v900
        %v1348 = vpop.f32.mrb[0].mxu0
        %v1349 = vadd.f32 %v788, %v1348
        %v1350 = vpop.f32.mrb[0].mxu0
        %v1351 = vadd.f32 %v788, %v1350
        %v1352 = vpop.f32.mrb[0].mxu0
        %v1353 = vadd.f32 %v793, %v1352
        %v1354 = vpop.f32.mrb[0].mxu0
        %v1355 = vadd.f32 %v793, %v1354
        %1356 = vmatprep.mubr.bf16.mxu0 0
        %1357 = vmatmul.mubr.bf16.gmra.mrb[0].mxu0 %v903
        %v1358 = vpop.f32.mrb[0].mxu0
        %v1359 = vadd.f32 %v798, %v1358
        %v1360 = vpop.f32.mrb[0].mxu0
        %v1361 = vadd.f32 %v798, %v1360
        %v1362 = vpop.f32.mrb[0].mxu0
        %v1363 = vadd.f32 %v803, %v1362
        %v1364 = vpop.f32.mrb[0].mxu0
        %v1365 = vadd.f32 %v803, %v1364
        %1366 = vmatprep.mubr.bf16.mxu0 0
        %1367 = vmatmul.mubr.bf16.gmra.mrb[0].mxu0 %v906
        %v1368 = vpop.f32.mrb[0].mxu0
        %v1369 = vadd.f32 %v808, %v1368
        %v1370 = vpop.f32.mrb[0].mxu0
        %v1371 = vadd.f32 %v808, %v1370
        %v1372 = vpop.f32.mrb[0].mxu0
        %v1373 = vadd.f32 %v813, %v1372
        %v1374 = vpop.f32.mrb[0].mxu0
        %v1375 = vadd.f32 %v813, %v1374
        %1376 = vmatprep.mubr.bf16.mxu0 0
        %1377 = vmatmul.mubr.bf16.gmra.mrb[0].mxu0 %v909
        %v1378 = vpop.f32.mrb[0].mxu0
        %v1379 = vadd.f32 %v818, %v1378
        %v1380 = vpop.f32.mrb[0].mxu0
        %v1381 = vadd.f32 %v818, %v1380
        %v1382 = vpop.f32.mrb[0].mxu0
        %v1383 = vadd.f32 %v823, %v1382
        %v1384 = vpop.f32.mrb[0].mxu0
        %v1385 = vadd.f32 %v823, %v1384
        %1386 = vmatprep.mubr.bf16.mxu0 0
        %1387 = vmatmul.mubr.bf16.gmra.mrb[0].mxu0 %v912
        %v1388 = vpop.f32.mrb[0].mxu0
        %v1389 = vadd.f32 %v828, %v1388
        %v1390 = vpop.f32.mrb[0].mxu0
        %v1391 = vadd.f32 %v828, %v1390
        %v1392 = vpop.f32.mrb[0].mxu0
        %v1393 = vadd.f32 %v833, %v1392
        %v1394 = vpop.f32.mrb[0].mxu0
        %v1395 = vadd.f32 %v833, %v1394
        %1396 = vmatprep.mubr.bf16.mxu0 0
        %1397 = vmatmul.mubr.bf16.gmra.mrb[0].mxu0 %v915
        %v1398 = vpop.f32.mrb[0].mxu0
        %v1399 = vadd.f32 %v838, %v1398
        %v1400 = vpop.f32.mrb[0].mxu0
        %v1401 = vadd.f32 %v838, %v1400
        %v1402 = vpop.f32.mrb[0].mxu0
        %v1403 = vadd.f32 %v843, %v1402
        %v1404 = vpop.f32.mrb[0].mxu0
        %v1405 = vadd.f32 %v843, %v1404
        %1406 = vmatprep.mubr.bf16.mxu0 0
        %1407 = vmatmul.mubr.bf16.gmra.mrb[0].mxu0 %v918
        %v1408 = vpop.f32.mrb[0].mxu0
        %v1409 = vadd.f32 %v848, %v1408
        %v1410 = vpop.f32.mrb[0].mxu0
        %v1411 = vadd.f32 %v848, %v1410
        %v1412 = vpop.f32.mrb[0].mxu0
        %v1413 = vadd.f32 %v853, %v1412
        %v1414 = vpop.f32.mrb[0].mxu0
        %v1415 = vadd.f32 %v853, %v1414
        %1416 = vdwg.mxu0
        %1417 = vmatprep.subr.bf16.mxu0 0
        %1418 = vmatpush1.bf16.xpose.msra.mxu0 %v969
        %1419 = vmatprep.subr.bf16.mxu0 0
        %1420 = vmatpush1.bf16.xpose.msra.mxu0 %v972
        %1421 = vmatprep.subr.bf16.mxu0 0
        %1422 = vmatpush1.bf16.xpose.msra.mxu0 %v975
        %1423 = vmatprep.subr.bf16.mxu0 0
        %1424 = vmatpush1.bf16.xpose.msra.mxu0 %v978
        %1425 = vmatprep.subr.bf16.mxu0 0
        %1426 = vmatpush1.bf16.xpose.msra.mxu0 %v981
        %1427 = vmatprep.subr.bf16.mxu0 0
        %1428 = vmatpush1.bf16.xpose.msra.mxu0 %v984
        %1429 = vmatprep.subr.bf16.mxu0 0
        %1430 = vmatpush1.bf16.xpose.msra.mxu0 %v987
        %1431 = vmatprep.subr.bf16.mxu0 0
        %1432 = vmatpush1.bf16.xpose.msra.mxu0 %v990
        %1433 = vmatprep.subr.bf16.mxu0 0
        %1434 = vmatpush1.bf16.xpose.msra.mxu0 %v993
        %1435 = vmatprep.subr.bf16.mxu0 0
        %1436 = vmatpush1.bf16.xpose.msra.mxu0 %v996
        %1437 = vmatprep.subr.bf16.mxu0 0
        %1438 = vmatpush1.bf16.xpose.msra.mxu0 %v999
        %1439 = vmatprep.subr.bf16.mxu0 0
        %1440 = vmatpush1.bf16.xpose.msra.mxu0 %v1002
        %1441 = vmatprep.subr.bf16.mxu0 0
        %1442 = vmatpush1.bf16.xpose.msra.mxu0 %v1005
        %1443 = vmatprep.subr.bf16.mxu0 0
        %1444 = vmatpush1.bf16.xpose.msra.mxu0 %v1008
        %1445 = vmatprep.subr.bf16.mxu0 0
        %1446 = vmatpush1.bf16.xpose.msra.mxu0 %v1011
        %1447 = vmatprep.subr.bf16.mxu0 0
        %1448 = vmatpush1.bf16.xpose.msra.mxu0 %v1014
        %1449 = vmatprep.mubr.bf16.mxu0 0
        %1450 = vmatmul.mubr.bf16.gmra.mrb[0].mxu0 %v897
        %v1451 = vpop.f32.mrb[0].mxu0
        %v1452 = vadd.f32 %v778, %v1451
        %v1453 = vpop.f32.mrb[0].mxu0
        %v1454 = vadd.f32 %v778, %v1453
        %v1455 = vpop.f32.mrb[0].mxu0
        %v1456 = vadd.f32 %v783, %v1455
        %v1457 = vpop.f32.mrb[0].mxu0
        %v1458 = vadd.f32 %v783, %v1457
        %1459 = vmatprep.mubr.bf16.mxu0 0
        %1460 = vmatmul.mubr.bf16.gmra.mrb[0].mxu0 %v900
        %v1461 = vpop.f32.mrb[0].mxu0
        %v1462 = vadd.f32 %v788, %v1461
        %v1463 = vpop.f32.mrb[0].mxu0
        %v1464 = vadd.f32 %v788, %v1463
        %v1465 = vpop.f32.mrb[0].mxu0
        %v1466 = vadd.f32 %v793, %v1465
        %v1467 = vpop.f32.mrb[0].mxu0
        %v1468 = vadd.f32 %v793, %v1467
        %1469 = vmatprep.mubr.bf16.mxu0 0
        %1470 = vmatmul.mubr.bf16.gmra.mrb[0].mxu0 %v903
        %v1471 = vpop.f32.mrb[0].mxu0
        %v1472 = vadd.f32 %v798, %v1471
        %v1473 = vpop.f32.mrb[0].mxu0
        %v1474 = vadd.f32 %v798, %v1473
        %v1475 = vpop.f32.mrb[0].mxu0
        %v1476 = vadd.f32 %v803, %v1475
        %v1477 = vpop.f32.mrb[0].mxu0
        %v1478 = vadd.f32 %v803, %v1477
        %1479 = vmatprep.mubr.bf16.mxu0 0
        %1480 = vmatmul.mubr.bf16.gmra.mrb[0].mxu0 %v906
        %v1481 = vpop.f32.mrb[0].mxu0
        %v1482 = vadd.f32 %v808, %v1481
        %v1483 = vpop.f32.mrb[0].mxu0
        %v1484 = vadd.f32 %v808, %v1483
        %v1485 = vpop.f32.mrb[0].mxu0
        %v1486 = vadd.f32 %v813, %v1485
        %v1487 = vpop.f32.mrb[0].mxu0
        %v1488 = vadd.f32 %v813, %v1487
        %1489 = vmatprep.mubr.bf16.mxu0 0
        %1490 = vmatmul.mubr.bf16.gmra.mrb[0].mxu0 %v909
        %v1491 = vpop.f32.mrb[0].mxu0
        %v1492 = vadd.f32 %v818, %v1491
        %v1493 = vpop.f32.mrb[0].mxu0
        %v1494 = vadd.f32 %v818, %v1493
        %v1495 = vpop.f32.mrb[0].mxu0
        %v1496 = vadd.f32 %v823, %v1495
        %v1497 = vpop.f32.mrb[0].mxu0
        %v1498 = vadd.f32 %v823, %v1497
        %1499 = vmatprep.mubr.bf16.mxu0 0
        %1500 = vmatmul.mubr.bf16.gmra.mrb[0].mxu0 %v912
        %v1501 = vpop.f32.mrb[0].mxu0
        %v1502 = vadd.f32 %v828, %v1501
        %v1503 = vpop.f32.mrb[0].mxu0
        %v1504 = vadd.f32 %v828, %v1503
        %v1505 = vpop.f32.mrb[0].mxu0
        %v1506 = vadd.f32 %v833, %v1505
        %v1507 = vpop.f32.mrb[0].mxu0
        %v1508 = vadd.f32 %v833, %v1507
        %1509 = vmatprep.mubr.bf16.mxu0 0
        %1510 = vmatmul.mubr.bf16.gmra.mrb[0].mxu0 %v915
        %v1511 = vpop.f32.mrb[0].mxu0
        %v1512 = vadd.f32 %v838, %v1511
        %v1513 = vpop.f32.mrb[0].mxu0
        %v1514 = vadd.f32 %v838, %v1513
        %v1515 = vpop.f32.mrb[0].mxu0
        %v1516 = vadd.f32 %v843, %v1515
        %v1517 = vpop.f32.mrb[0].mxu0
        %v1518 = vadd.f32 %v843, %v1517
        %1519 = vmatprep.mubr.bf16.mxu0 0
        %1520 = vmatmul.mubr.bf16.gmra.mrb[0].mxu0 %v918
        %v1521 = vpop.f32.mrb[0].mxu0
        %v1522 = vadd.f32 %v848, %v1521
        %v1523 = vpop.f32.mrb[0].mxu0
        %v1524 = vadd.f32 %v848, %v1523
        %v1525 = vpop.f32.mrb[0].mxu0
        %v1526 = vadd.f32 %v853, %v1525
        %v1527 = vpop.f32.mrb[0].mxu0
        %v1528 = vadd.f32 %v853, %v1527
        %1529 = vdwg.mxu0
        %1530 = vmatprep.subr.bf16.mxu0 0
        %1531 = vmatpush1.bf16.xpose.msra.mxu0 %v1017
        %1532 = vmatprep.subr.bf16.mxu0 0
        %1533 = vmatpush1.bf16.xpose.msra.mxu0 %v1020
        %1534 = vmatprep.subr.bf16.mxu0 0
        %1535 = vmatpush1.bf16.xpose.msra.mxu0 %v1023
        %1536 = vmatprep.subr.bf16.mxu0 0
        %1537 = vmatpush1.bf16.xpose.msra.mxu0 %v1026
        %1538 = vmatprep.subr.bf16.mxu0 0
        %1539 = vmatpush1.bf16.xpose.msra.mxu0 %v1029
        %1540 = vmatprep.subr.bf16.mxu0 0
        %1541 = vmatpush1.bf16.xpose.msra.mxu0 %v1032
        %1542 = vmatprep.subr.bf16.mxu0 0
        %1543 = vmatpush1.bf16.xpose.msra.mxu0 %v1035
        %1544 = vmatprep.subr.bf16.mxu0 0
        %1545 = vmatpush1.bf16.xpose.msra.mxu0 %v1038
        %1546 = vmatprep.subr.bf16.mxu0 0
        %1547 = vmatpush1.bf16.xpose.msra.mxu0 %v1041
        %1548 = vmatprep.subr.bf16.mxu0 0
        %1549 = vmatpush1.bf16.xpose.msra.mxu0 %v1044
        %1550 = vmatprep.subr.bf16.mxu0 0
        %1551 = vmatpush1.bf16.xpose.msra.mxu0 %v1047
        %1552 = vmatprep.subr.bf16.mxu0 0
        %1553 = vmatpush1.bf16.xpose.msra.mxu0 %v1050
        %1554 = vmatprep.subr.bf16.mxu0 0
        %1555 = vmatpush1.bf16.xpose.msra.mxu0 %v1053
        %1556 = vmatprep.subr.bf16.mxu0 0
        %1557 = vmatpush1.bf16.xpose.msra.mxu0 %v1056
        %1558 = vmatprep.subr.bf16.mxu0 0
        %1559 = vmatpush1.bf16.xpose.msra.mxu0 %v1059
        %1560 = vmatprep.subr.bf16.mxu0 0
        %1561 = vmatpush1.bf16.xpose.msra.mxu0 %v1062
        %1562 = vmatprep.mubr.bf16.mxu0 0
        %1563 = vmatmul.mubr.bf16.gmra.mrb[0].mxu0 %v897
        %v1564 = vpop.f32.mrb[0].mxu0
        %v1565 = vadd.f32 %v778, %v1564
        %v1566 = vpop.f32.mrb[0].mxu0
        %v1567 = vadd.f32 %v778, %v1566
        %v1568 = vpop.f32.mrb[0].mxu0
        %v1569 = vadd.f32 %v783, %v1568
        %v1570 = vpop.f32.mrb[0].mxu0
        %v1571 = vadd.f32 %v783, %v1570
        %1572 = vmatprep.mubr.bf16.mxu0 0
        %1573 = vmatmul.mubr.bf16.gmra.mrb[0].mxu0 %v900
        %v1574 = vpop.f32.mrb[0].mxu0
        %v1575 = vadd.f32 %v788, %v1574
        %v1576 = vpop.f32.mrb[0].mxu0
        %v1577 = vadd.f32 %v788, %v1576
        %v1578 = vpop.f32.mrb[0].mxu0
        %v1579 = vadd.f32 %v793, %v1578
        %v1580 = vpop.f32.mrb[0].mxu0
        %v1581 = vadd.f32 %v793, %v1580
        %1582 = vmatprep.mubr.bf16.mxu0 0
        %1583 = vmatmul.mubr.bf16.gmra.mrb[0].mxu0 %v903
        %v1584 = vpop.f32.mrb[0].mxu0
        %v1585 = vadd.f32 %v798, %v1584
        %v1586 = vpop.f32.mrb[0].mxu0
        %v1587 = vadd.f32 %v798, %v1586
        %v1588 = vpop.f32.mrb[0].mxu0
        %v1589 = vadd.f32 %v803, %v1588
        %v1590 = vpop.f32.mrb[0].mxu0
        %v1591 = vadd.f32 %v803, %v1590
        %1592 = vmatprep.mubr.bf16.mxu0 0
        %1593 = vmatmul.mubr.bf16.gmra.mrb[0].mxu0 %v906
        %v1594 = vpop.f32.mrb[0].mxu0
        %v1595 = vadd.f32 %v808, %v1594
        %v1596 = vpop.f32.mrb[0].mxu0
        %v1597 = vadd.f32 %v808, %v1596
        %v1598 = vpop.f32.mrb[0].mxu0
        %v1599 = vadd.f32 %v813, %v1598
        %v1600 = vpop.f32.mrb[0].mxu0
        %v1601 = vadd.f32 %v813, %v1600
        %1602 = vmatprep.mubr.bf16.mxu0 0
        %1603 = vmatmul.mubr.bf16.gmra.mrb[0].mxu0 %v909
        %v1604 = vpop.f32.mrb[0].mxu0
        %v1605 = vadd.f32 %v818, %v1604
        %v1606 = vpop.f32.mrb[0].mxu0
        %v1607 = vadd.f32 %v818, %v1606
        %v1608 = vpop.f32.mrb[0].mxu0
        %v1609 = vadd.f32 %v823, %v1608
        %v1610 = vpop.f32.mrb[0].mxu0
        %v1611 = vadd.f32 %v823, %v1610
        %1612 = vmatprep.mubr.bf16.mxu0 0
        %1613 = vmatmul.mubr.bf16.gmra.mrb[0].mxu0 %v912
        %v1614 = vpop.f32.mrb[0].mxu0
        %v1615 = vadd.f32 %v828, %v1614
        %v1616 = vpop.f32.mrb[0].mxu0
        %v1617 = vadd.f32 %v828, %v1616
        %v1618 = vpop.f32.mrb[0].mxu0
        %v1619 = vadd.f32 %v833, %v1618
        %v1620 = vpop.f32.mrb[0].mxu0
        %v1621 = vadd.f32 %v833, %v1620
        %1622 = vmatprep.mubr.bf16.mxu0 0
        %1623 = vmatmul.mubr.bf16.gmra.mrb[0].mxu0 %v915
        %v1624 = vpop.f32.mrb[0].mxu0
        %v1625 = vadd.f32 %v838, %v1624
        %v1626 = vpop.f32.mrb[0].mxu0
        %v1627 = vadd.f32 %v838, %v1626
        %v1628 = vpop.f32.mrb[0].mxu0
        %v1629 = vadd.f32 %v843, %v1628
        %v1630 = vpop.f32.mrb[0].mxu0
        %v1631 = vadd.f32 %v843, %v1630
        %1632 = vmatprep.mubr.bf16.mxu0 0
        %1633 = vmatmul.mubr.bf16.gmra.mrb[0].mxu0 %v918
        %v1634 = vpop.f32.mrb[0].mxu0
        %v1635 = vadd.f32 %v848, %v1634
        %v1636 = vpop.f32.mrb[0].mxu0
        %v1637 = vadd.f32 %v848, %v1636
        %v1638 = vpop.f32.mrb[0].mxu0
        %v1639 = vadd.f32 %v853, %v1638
        %v1640 = vpop.f32.mrb[0].mxu0
        %v1641 = vadd.f32 %v853, %v1640
        %1642 = vdwg.mxu0
        %1643 = vmatprep.subr.bf16.mxu0 0
        %1644 = vmatpush1.bf16.xpose.msra.mxu0 %v1065
        %1645 = vmatprep.subr.bf16.mxu0 0
        %1646 = vmatpush1.bf16.xpose.msra.mxu0 %v1068
        %1647 = vmatprep.subr.bf16.mxu0 0
        %1648 = vmatpush1.bf16.xpose.msra.mxu0 %v1071
        %1649 = vmatprep.subr.bf16.mxu0 0
        %1650 = vmatpush1.bf16.xpose.msra.mxu0 %v1074
        %1651 = vmatprep.subr.bf16.mxu0 0
        %1652 = vmatpush1.bf16.xpose.msra.mxu0 %v1077
        %1653 = vmatprep.subr.bf16.mxu0 0
        %1654 = vmatpush1.bf16.xpose.msra.mxu0 %v1080
        %1655 = vmatprep.subr.bf16.mxu0 0
        %1656 = vmatpush1.bf16.xpose.msra.mxu0 %v1083
        %1657 = vmatprep.subr.bf16.mxu0 0
        %1658 = vmatpush1.bf16.xpose.msra.mxu0 %v1086
        %1659 = vmatprep.subr.bf16.mxu0 0
        %1660 = vmatpush1.bf16.xpose.msra.mxu0 %v1089
        %1661 = vmatprep.subr.bf16.mxu0 0
        %1662 = vmatpush1.bf16.xpose.msra.mxu0 %v1092
        %1663 = vmatprep.subr.bf16.mxu0 0
        %1664 = vmatpush1.bf16.xpose.msra.mxu0 %v1095
        %1665 = vmatprep.subr.bf16.mxu0 0
        %1666 = vmatpush1.bf16.xpose.msra.mxu0 %v1098
        %1667 = vmatprep.subr.bf16.mxu0 0
        %1668 = vmatpush1.bf16.xpose.msra.mxu0 %v1101
        %1669 = vmatprep.subr.bf16.mxu0 0
        %1670 = vmatpush1.bf16.xpose.msra.mxu0 %v1104
        %1671 = vmatprep.subr.bf16.mxu0 0
        %1672 = vmatpush1.bf16.xpose.msra.mxu0 %v1107
        %1673 = vmatprep.subr.bf16.mxu0 0
        %1674 = vmatpush1.bf16.xpose.msra.mxu0 %v1110
        %1675 = vmatprep.mubr.bf16.mxu0 0
        %1676 = vmatmul.mubr.bf16.gmra.mrb[0].mxu0 %v897
        %v1677 = vpop.f32.mrb[0].mxu0
        %v1678 = vadd.f32 %v778, %v1677
        %v1679 = vpop.f32.mrb[0].mxu0
        %v1680 = vadd.f32 %v778, %v1679
        %v1681 = vpop.f32.mrb[0].mxu0
        %v1682 = vadd.f32 %v783, %v1681
        %v1683 = vpop.f32.mrb[0].mxu0
        %v1684 = vadd.f32 %v783, %v1683
        %1685 = vmatprep.mubr.bf16.mxu0 0
        %1686 = vmatmul.mubr.bf16.gmra.mrb[0].mxu0 %v900
        %v1687 = vpop.f32.mrb[0].mxu0
        %v1688 = vadd.f32 %v788, %v1687
        %v1689 = vpop.f32.mrb[0].mxu0
        %v1690 = vadd.f32 %v788, %v1689
        %v1691 = vpop.f32.mrb[0].mxu0
        %v1692 = vadd.f32 %v793, %v1691
        %v1693 = vpop.f32.mrb[0].mxu0
        %v1694 = vadd.f32 %v793, %v1693
        %1695 = vmatprep.mubr.bf16.mxu0 0
        %1696 = vmatmul.mubr.bf16.gmra.mrb[0].mxu0 %v903
        %v1697 = vpop.f32.mrb[0].mxu0
        %v1698 = vadd.f32 %v798, %v1697
        %v1699 = vpop.f32.mrb[0].mxu0
        %v1700 = vadd.f32 %v798, %v1699
        %v1701 = vpop.f32.mrb[0].mxu0
        %v1702 = vadd.f32 %v803, %v1701
        %v1703 = vpop.f32.mrb[0].mxu0
        %v1704 = vadd.f32 %v803, %v1703
        %1705 = vmatprep.mubr.bf16.mxu0 0
        %1706 = vmatmul.mubr.bf16.gmra.mrb[0].mxu0 %v906
        %v1707 = vpop.f32.mrb[0].mxu0
        %v1708 = vadd.f32 %v808, %v1707
        %v1709 = vpop.f32.mrb[0].mxu0
        %v1710 = vadd.f32 %v808, %v1709
        %v1711 = vpop.f32.mrb[0].mxu0
        %v1712 = vadd.f32 %v813, %v1711
        %v1713 = vpop.f32.mrb[0].mxu0
        %v1714 = vadd.f32 %v813, %v1713
        %1715 = vmatprep.mubr.bf16.mxu0 0
        %1716 = vmatmul.mubr.bf16.gmra.mrb[0].mxu0 %v909
        %v1717 = vpop.f32.mrb[0].mxu0
        %v1718 = vadd.f32 %v818, %v1717
        %v1719 = vpop.f32.mrb[0].mxu0
        %v1720 = vadd.f32 %v818, %v1719
        %v1721 = vpop.f32.mrb[0].mxu0
        %v1722 = vadd.f32 %v823, %v1721
        %v1723 = vpop.f32.mrb[0].mxu0
        %v1724 = vadd.f32 %v823, %v1723
        %1725 = vmatprep.mubr.bf16.mxu0 0
        %1726 = vmatmul.mubr.bf16.gmra.mrb[0].mxu0 %v912
        %v1727 = vpop.f32.mrb[0].mxu0
        %v1728 = vadd.f32 %v828, %v1727
        %v1729 = vpop.f32.mrb[0].mxu0
        %v1730 = vadd.f32 %v828, %v1729
        %v1731 = vpop.f32.mrb[0].mxu0
        %v1732 = vadd.f32 %v833, %v1731
        %v1733 = vpop.f32.mrb[0].mxu0
        %v1734 = vadd.f32 %v833, %v1733
        %1735 = vmatprep.mubr.bf16.mxu0 0
        %1736 = vmatmul.mubr.bf16.gmra.mrb[0].mxu0 %v915
        %v1737 = vpop.f32.mrb[0].mxu0
        %v1738 = vadd.f32 %v838, %v1737
        %v1739 = vpop.f32.mrb[0].mxu0
        %v1740 = vadd.f32 %v838, %v1739
        %v1741 = vpop.f32.mrb[0].mxu0
        %v1742 = vadd.f32 %v843, %v1741
        %v1743 = vpop.f32.mrb[0].mxu0
        %v1744 = vadd.f32 %v843, %v1743
        %1745 = vmatprep.mubr.bf16.mxu0 0
        %1746 = vmatmul.mubr.bf16.gmra.mrb[0].mxu0 %v918
        %v1747 = vpop.f32.mrb[0].mxu0
        %v1748 = vadd.f32 %v848, %v1747
        %v1749 = vpop.f32.mrb[0].mxu0
        %v1750 = vadd.f32 %v848, %v1749
        %v1751 = vpop.f32.mrb[0].mxu0
        %v1752 = vadd.f32 %v853, %v1751
        %v1753 = vpop.f32.mrb[0].mxu0
        %v1754 = vadd.f32 %v853, %v1753
        %1755 = vdwg.mxu0
        %1756 = vmatprep.subr.bf16.mxu0 0
        %1757 = vmatpush1.bf16.xpose.msra.mxu0 %v1113
        %1758 = vmatprep.subr.bf16.mxu0 0
        %1759 = vmatpush1.bf16.xpose.msra.mxu0 %v1116
        %1760 = vmatprep.subr.bf16.mxu0 0
        %1761 = vmatpush1.bf16.xpose.msra.mxu0 %v1119
        %1762 = vmatprep.subr.bf16.mxu0 0
        %1763 = vmatpush1.bf16.xpose.msra.mxu0 %v1122
        %1764 = vmatprep.subr.bf16.mxu0 0
        %1765 = vmatpush1.bf16.xpose.msra.mxu0 %v1125
        %1766 = vmatprep.subr.bf16.mxu0 0
        %1767 = vmatpush1.bf16.xpose.msra.mxu0 %v1128
        %1768 = vmatprep.subr.bf16.mxu0 0
        %1769 = vmatpush1.bf16.xpose.msra.mxu0 %v1131
        %1770 = vmatprep.subr.bf16.mxu0 0
        %1771 = vmatpush1.bf16.xpose.msra.mxu0 %v1134
        %1772 = vmatprep.subr.bf16.mxu0 0
        %1773 = vmatpush1.bf16.xpose.msra.mxu0 %v1137
        %1774 = vmatprep.subr.bf16.mxu0 0
        %1775 = vmatpush1.bf16.xpose.msra.mxu0 %v1140
        %1776 = vmatprep.subr.bf16.mxu0 0
        %1777 = vmatpush1.bf16.xpose.msra.mxu0 %v1143
        %1778 = vmatprep.subr.bf16.mxu0 0
        %1779 = vmatpush1.bf16.xpose.msra.mxu0 %v1146
        %1780 = vmatprep.subr.bf16.mxu0 0
        %1781 = vmatpush1.bf16.xpose.msra.mxu0 %v1149
        %1782 = vmatprep.subr.bf16.mxu0 0
        %1783 = vmatpush1.bf16.xpose.msra.mxu0 %v1152
        %1784 = vmatprep.subr.bf16.mxu0 0
        %1785 = vmatpush1.bf16.xpose.msra.mxu0 %v1155
        %1786 = vmatprep.subr.bf16.mxu0 0
        %1787 = vmatpush1.bf16.xpose.msra.mxu0 %v1158
        %1788 = vmatprep.mubr.bf16.mxu0 0
        %1789 = vmatmul.mubr.bf16.gmra.mrb[0].mxu0 %v897
        %v1790 = vpop.f32.mrb[0].mxu0
        %v1791 = vadd.f32 %v778, %v1790
        %v1792 = vpop.f32.mrb[0].mxu0
        %v1793 = vadd.f32 %v778, %v1792
        %v1794 = vpop.f32.mrb[0].mxu0
        %v1795 = vadd.f32 %v783, %v1794
        %v1796 = vpop.f32.mrb[0].mxu0
        %v1797 = vadd.f32 %v783, %v1796
        %1798 = vmatprep.mubr.bf16.mxu0 0
        %1799 = vmatmul.mubr.bf16.gmra.mrb[0].mxu0 %v900
        %v1800 = vpop.f32.mrb[0].mxu0
        %v1801 = vadd.f32 %v788, %v1800
        %v1802 = vpop.f32.mrb[0].mxu0
        %v1803 = vadd.f32 %v788, %v1802
        %v1804 = vpop.f32.mrb[0].mxu0
        %v1805 = vadd.f32 %v793, %v1804
        %v1806 = vpop.f32.mrb[0].mxu0
        %v1807 = vadd.f32 %v793, %v1806
        %1808 = vmatprep.mubr.bf16.mxu0 0
        %1809 = vmatmul.mubr.bf16.gmra.mrb[0].mxu0 %v903
        %v1810 = vpop.f32.mrb[0].mxu0
        %v1811 = vadd.f32 %v798, %v1810
        %v1812 = vpop.f32.mrb[0].mxu0
        %v1813 = vadd.f32 %v798, %v1812
        %v1814 = vpop.f32.mrb[0].mxu0
        %v1815 = vadd.f32 %v803, %v1814
        %v1816 = vpop.f32.mrb[0].mxu0
        %v1817 = vadd.f32 %v803, %v1816
        %1818 = vmatprep.mubr.bf16.mxu0 0
        %1819 = vmatmul.mubr.bf16.gmra.mrb[0].mxu0 %v906
        %v1820 = vpop.f32.mrb[0].mxu0
        %v1821 = vadd.f32 %v808, %v1820
        %v1822 = vpop.f32.mrb[0].mxu0
        %v1823 = vadd.f32 %v808, %v1822
        %v1824 = vpop.f32.mrb[0].mxu0
        %v1825 = vadd.f32 %v813, %v1824
        %v1826 = vpop.f32.mrb[0].mxu0
        %v1827 = vadd.f32 %v813, %v1826
        %1828 = vmatprep.mubr.bf16.mxu0 0
        %1829 = vmatmul.mubr.bf16.gmra.mrb[0].mxu0 %v909
        %v1830 = vpop.f32.mrb[0].mxu0
        %v1831 = vadd.f32 %v818, %v1830
        %v1832 = vpop.f32.mrb[0].mxu0
        %v1833 = vadd.f32 %v818, %v1832
        %v1834 = vpop.f32.mrb[0].mxu0
        %v1835 = vadd.f32 %v823, %v1834
        %v1836 = vpop.f32.mrb[0].mxu0
        %v1837 = vadd.f32 %v823, %v1836
        %1838 = vmatprep.mubr.bf16.mxu0 0
        %1839 = vmatmul.mubr.bf16.gmra.mrb[0].mxu0 %v912
        %v1840 = vpop.f32.mrb[0].mxu0
        %v1841 = vadd.f32 %v828, %v1840
        %v1842 = vpop.f32.mrb[0].mxu0
        %v1843 = vadd.f32 %v828, %v1842
        %v1844 = vpop.f32.mrb[0].mxu0
        %v1845 = vadd.f32 %v833, %v1844
        %v1846 = vpop.f32.mrb[0].mxu0
        %v1847 = vadd.f32 %v833, %v1846
        %1848 = vmatprep.mubr.bf16.mxu0 0
        %1849 = vmatmul.mubr.bf16.gmra.mrb[0].mxu0 %v915
        %v1850 = vpop.f32.mrb[0].mxu0
        %v1851 = vadd.f32 %v838, %v1850
        %v1852 = vpop.f32.mrb[0].mxu0
        %v1853 = vadd.f32 %v838, %v1852
        %v1854 = vpop.f32.mrb[0].mxu0
        %v1855 = vadd.f32 %v843, %v1854
        %v1856 = vpop.f32.mrb[0].mxu0
        %v1857 = vadd.f32 %v843, %v1856
        %1858 = vmatprep.mubr.bf16.mxu0 0
        %1859 = vmatmul.mubr.bf16.gmra.mrb[0].mxu0 %v918
        %v1860 = vpop.f32.mrb[0].mxu0
        %v1861 = vadd.f32 %v848, %v1860
        %v1862 = vpop.f32.mrb[0].mxu0
        %v1863 = vadd.f32 %v848, %v1862
        %v1864 = vpop.f32.mrb[0].mxu0
        %v1865 = vadd.f32 %v853, %v1864
        %v1866 = vpop.f32.mrb[0].mxu0
        %v1867 = vadd.f32 %v853, %v1866
        %1868 = vdwg.mxu0
        %1869 = vmatprep.subr.bf16.mxu0 0
        %1870 = vmatpush1.bf16.xpose.msra.mxu0 %v1161
        %1871 = vmatprep.subr.bf16.mxu0 0
        %1872 = vmatpush1.bf16.xpose.msra.mxu0 %v1164
        %1873 = vmatprep.subr.bf16.mxu0 0
        %1874 = vmatpush1.bf16.xpose.msra.mxu0 %v1167
        %1875 = vmatprep.subr.bf16.mxu0 0
        %1876 = vmatpush1.bf16.xpose.msra.mxu0 %v1170
        %1877 = vmatprep.subr.bf16.mxu0 0
        %1878 = vmatpush1.bf16.xpose.msra.mxu0 %v1173
        %1879 = vmatprep.subr.bf16.mxu0 0
        %1880 = vmatpush1.bf16.xpose.msra.mxu0 %v1176
        %1881 = vmatprep.subr.bf16.mxu0 0
        %1882 = vmatpush1.bf16.xpose.msra.mxu0 %v1179
        %1883 = vmatprep.subr.bf16.mxu0 0
        %1884 = vmatpush1.bf16.xpose.msra.mxu0 %v1182
        %1885 = vmatprep.subr.bf16.mxu0 0
        %1886 = vmatpush1.bf16.xpose.msra.mxu0 %v1185
        %1887 = vmatprep.subr.bf16.mxu0 0
        %1888 = vmatpush1.bf16.xpose.msra.mxu0 %v1188
        %1889 = vmatprep.subr.bf16.mxu0 0
        %1890 = vmatpush1.bf16.xpose.msra.mxu0 %v1191
        %1891 = vmatprep.subr.bf16.mxu0 0
        %1892 = vmatpush1.bf16.xpose.msra.mxu0 %v1194
        %1893 = vmatprep.subr.bf16.mxu0 0
        %1894 = vmatpush1.bf16.xpose.msra.mxu0 %v1197
        %1895 = vmatprep.subr.bf16.mxu0 0
        %1896 = vmatpush1.bf16.xpose.msra.mxu0 %v1200
        %1897 = vmatprep.subr.bf16.mxu0 0
        %1898 = vmatpush1.bf16.xpose.msra.mxu0 %v1203
        %1899 = vmatprep.subr.bf16.mxu0 0
        %1900 = vmatpush1.bf16.xpose.msra.mxu0 %v1206
        %1901 = vmatprep.mubr.bf16.mxu0 0
        %1902 = vmatmul.mubr.bf16.gmra.mrb[0].mxu0 %v897
        %v1903 = vpop.f32.mrb[0].mxu0
        %v1904 = vadd.f32 %v778, %v1903
        %v1905 = vpop.f32.mrb[0].mxu0
        %v1906 = vadd.f32 %v778, %v1905
        %v1907 = vpop.f32.mrb[0].mxu0
        %v1908 = vadd.f32 %v783, %v1907
        %v1909 = vpop.f32.mrb[0].mxu0
        %v1910 = vadd.f32 %v783, %v1909
        %1911 = vmatprep.mubr.bf16.mxu0 0
        %1912 = vmatmul.mubr.bf16.gmra.mrb[0].mxu0 %v900
        %v1913 = vpop.f32.mrb[0].mxu0
        %v1914 = vadd.f32 %v788, %v1913
        %v1915 = vpop.f32.mrb[0].mxu0
        %v1916 = vadd.f32 %v788, %v1915
        %v1917 = vpop.f32.mrb[0].mxu0
        %v1918 = vadd.f32 %v793, %v1917
        %v1919 = vpop.f32.mrb[0].mxu0
        %v1920 = vadd.f32 %v793, %v1919
        %1921 = vmatprep.mubr.bf16.mxu0 0
        %1922 = vmatmul.mubr.bf16.gmra.mrb[0].mxu0 %v903
        %v1923 = vpop.f32.mrb[0].mxu0
        %v1924 = vadd.f32 %v798, %v1923
        %v1925 = vpop.f32.mrb[0].mxu0
        %v1926 = vadd.f32 %v798, %v1925
        %v1927 = vpop.f32.mrb[0].mxu0
        %v1928 = vadd.f32 %v803, %v1927
        %v1929 = vpop.f32.mrb[0].mxu0
        %v1930 = vadd.f32 %v803, %v1929
        %1931 = vmatprep.mubr.bf16.mxu0 0
        %1932 = vmatmul.mubr.bf16.gmra.mrb[0].mxu0 %v906
        %v1933 = vpop.f32.mrb[0].mxu0
        %v1934 = vadd.f32 %v808, %v1933
        %v1935 = vpop.f32.mrb[0].mxu0
        %v1936 = vadd.f32 %v808, %v1935
        %v1937 = vpop.f32.mrb[0].mxu0
        %v1938 = vadd.f32 %v813, %v1937
        %v1939 = vpop.f32.mrb[0].mxu0
        %v1940 = vadd.f32 %v813, %v1939
        %1941 = vmatprep.mubr.bf16.mxu0 0
        %1942 = vmatmul.mubr.bf16.gmra.mrb[0].mxu0 %v909
        %v1943 = vpop.f32.mrb[0].mxu0
        %v1944 = vadd.f32 %v818, %v1943
        %v1945 = vpop.f32.mrb[0].mxu0
        %v1946 = vadd.f32 %v818, %v1945
        %v1947 = vpop.f32.mrb[0].mxu0
        %v1948 = vadd.f32 %v823, %v1947
        %v1949 = vpop.f32.mrb[0].mxu0
        %v1950 = vadd.f32 %v823, %v1949
        %1951 = vmatprep.mubr.bf16.mxu0 0
        %1952 = vmatmul.mubr.bf16.gmra.mrb[0].mxu0 %v912
        %v1953 = vpop.f32.mrb[0].mxu0
        %v1954 = vadd.f32 %v828, %v1953
        %v1955 = vpop.f32.mrb[0].mxu0
        %v1956 = vadd.f32 %v828, %v1955
        %v1957 = vpop.f32.mrb[0].mxu0
        %v1958 = vadd.f32 %v833, %v1957
        %v1959 = vpop.f32.mrb[0].mxu0
        %v1960 = vadd.f32 %v833, %v1959
        %1961 = vmatprep.mubr.bf16.mxu0 0
        %1962 = vmatmul.mubr.bf16.gmra.mrb[0].mxu0 %v915
        %v1963 = vpop.f32.mrb[0].mxu0
        %v1964 = vadd.f32 %v838, %v1963
        %v1965 = vpop.f32.mrb[0].mxu0
        %v1966 = vadd.f32 %v838, %v1965
        %v1967 = vpop.f32.mrb[0].mxu0
        %v1968 = vadd.f32 %v843, %v1967
        %v1969 = vpop.f32.mrb[0].mxu0
        %v1970 = vadd.f32 %v843, %v1969
        %1971 = vmatprep.mubr.bf16.mxu0 0
        %1972 = vmatmul.mubr.bf16.gmra.mrb[0].mxu0 %v918
        %v1973 = vpop.f32.mrb[0].mxu0
        %v1974 = vadd.f32 %v848, %v1973
        %v1975 = vpop.f32.mrb[0].mxu0
        %v1976 = vadd.f32 %v848, %v1975
        %v1977 = vpop.f32.mrb[0].mxu0
        %v1978 = vadd.f32 %v853, %v1977
        %v1979 = vpop.f32.mrb[0].mxu0
        %v1980 = vadd.f32 %v853, %v1979
        %1981 = vdwg.mxu0
        %1982 = vmatprep.subr.bf16.mxu0 0
        %1983 = vmatpush1.bf16.xpose.msra.mxu0 %v1209
        %1984 = vmatprep.subr.bf16.mxu0 0
        %1985 = vmatpush1.bf16.xpose.msra.mxu0 %v1212
        %1986 = vmatprep.subr.bf16.mxu0 0
        %1987 = vmatpush1.bf16.xpose.msra.mxu0 %v1215
        %1988 = vmatprep.subr.bf16.mxu0 0
        %1989 = vmatpush1.bf16.xpose.msra.mxu0 %v1218
        %1990 = vmatprep.subr.bf16.mxu0 0
        %1991 = vmatpush1.bf16.xpose.msra.mxu0 %v1221
        %1992 = vmatprep.subr.bf16.mxu0 0
        %1993 = vmatpush1.bf16.xpose.msra.mxu0 %v1224
        %1994 = vmatprep.subr.bf16.mxu0 0
        %1995 = vmatpush1.bf16.xpose.msra.mxu0 %v1227
        %1996 = vmatprep.subr.bf16.mxu0 0
        %1997 = vmatpush1.bf16.xpose.msra.mxu0 %v1230
        %1998 = vmatprep.subr.bf16.mxu0 0
        %1999 = vmatpush1.bf16.xpose.msra.mxu0 %v1233
        %2000 = vmatprep.subr.bf16.mxu0 0
        %2001 = vmatpush1.bf16.xpose.msra.mxu0 %v1236
        %2002 = vmatprep.subr.bf16.mxu0 0
        %2003 = vmatpush1.bf16.xpose.msra.mxu0 %v1239
        %2004 = vmatprep.subr.bf16.mxu0 0
        %2005 = vmatpush1.bf16.xpose.msra.mxu0 %v1242
        %2006 = vmatprep.subr.bf16.mxu0 0
        %2007 = vmatpush1.bf16.xpose.msra.mxu0 %v1245
        %2008 = vmatprep.subr.bf16.mxu0 0
        %2009 = vmatpush1.bf16.xpose.msra.mxu0 %v1248
        %2010 = vmatprep.subr.bf16.mxu0 0
        %2011 = vmatpush1.bf16.xpose.msra.mxu0 %v1251
        %2012 = vmatprep.subr.bf16.mxu0 0
        %2013 = vmatpush1.bf16.xpose.msra.mxu0 %v1254
        %2014 = vmatprep.mubr.bf16.mxu0 0
        %2015 = vmatmul.mubr.bf16.gmra.mrb[0].mxu0 %v897
        %v2016 = vpop.f32.mrb[0].mxu0
        %v2017 = vadd.f32 %v778, %v2016
        %v2018 = vpop.f32.mrb[0].mxu0
        %v2019 = vadd.f32 %v778, %v2018
        %v2020 = vpop.f32.mrb[0].mxu0
        %v2021 = vadd.f32 %v783, %v2020
        %v2022 = vpop.f32.mrb[0].mxu0
        %v2023 = vadd.f32 %v783, %v2022
        %2024 = vmatprep.mubr.bf16.mxu0 0
        %2025 = vmatmul.mubr.bf16.gmra.mrb[0].mxu0 %v900
        %v2026 = vpop.f32.mrb[0].mxu0
        %v2027 = vadd.f32 %v788, %v2026
        %v2028 = vpop.f32.mrb[0].mxu0
        %v2029 = vadd.f32 %v788, %v2028
        %v2030 = vpop.f32.mrb[0].mxu0
        %v2031 = vadd.f32 %v793, %v2030
        %v2032 = vpop.f32.mrb[0].mxu0
        %v2033 = vadd.f32 %v793, %v2032
        %2034 = vmatprep.mubr.bf16.mxu0 0
        %2035 = vmatmul.mubr.bf16.gmra.mrb[0].mxu0 %v903
        %v2036 = vpop.f32.mrb[0].mxu0
        %v2037 = vadd.f32 %v798, %v2036
        %v2038 = vpop.f32.mrb[0].mxu0
        %v2039 = vadd.f32 %v798, %v2038
        %v2040 = vpop.f32.mrb[0].mxu0
        %v2041 = vadd.f32 %v803, %v2040
        %v2042 = vpop.f32.mrb[0].mxu0
        %v2043 = vadd.f32 %v803, %v2042
        %2044 = vmatprep.mubr.bf16.mxu0 0
        %2045 = vmatmul.mubr.bf16.gmra.mrb[0].mxu0 %v906
        %v2046 = vpop.f32.mrb[0].mxu0
        %v2047 = vadd.f32 %v808, %v2046
        %v2048 = vpop.f32.mrb[0].mxu0
        %v2049 = vadd.f32 %v808, %v2048
        %v2050 = vpop.f32.mrb[0].mxu0
        %v2051 = vadd.f32 %v813, %v2050
        %v2052 = vpop.f32.mrb[0].mxu0
        %v2053 = vadd.f32 %v813, %v2052
        %2054 = vmatprep.mubr.bf16.mxu0 0
        %2055 = vmatmul.mubr.bf16.gmra.mrb[0].mxu0 %v909
        %v2056 = vpop.f32.mrb[0].mxu0
        %v2057 = vadd.f32 %v818, %v2056
        %v2058 = vpop.f32.mrb[0].mxu0
        %v2059 = vadd.f32 %v818, %v2058
        %v2060 = vpop.f32.mrb[0].mxu0
        %v2061 = vadd.f32 %v823, %v2060
        %v2062 = vpop.f32.mrb[0].mxu0
        %v2063 = vadd.f32 %v823, %v2062
        %2064 = vmatprep.mubr.bf16.mxu0 0
        %2065 = vmatmul.mubr.bf16.gmra.mrb[0].mxu0 %v912
        %v2066 = vpop.f32.mrb[0].mxu0
        %v2067 = vadd.f32 %v828, %v2066
        %v2068 = vpop.f32.mrb[0].mxu0
        %v2069 = vadd.f32 %v828, %v2068
        %v2070 = vpop.f32.mrb[0].mxu0
        %v2071 = vadd.f32 %v833, %v2070
        %v2072 = vpop.f32.mrb[0].mxu0
        %v2073 = vadd.f32 %v833, %v2072
        %2074 = vmatprep.mubr.bf16.mxu0 0
        %2075 = vmatmul.mubr.bf16.gmra.mrb[0].mxu0 %v915
        %v2076 = vpop.f32.mrb[0].mxu0
        %v2077 = vadd.f32 %v838, %v2076
        %v2078 = vpop.f32.mrb[0].mxu0
        %v2079 = vadd.f32 %v838, %v2078
        %v2080 = vpop.f32.mrb[0].mxu0
        %v2081 = vadd.f32 %v843, %v2080
        %v2082 = vpop.f32.mrb[0].mxu0
        %v2083 = vadd.f32 %v843, %v2082
        %2084 = vmatprep.mubr.bf16.mxu0 0
        %2085 = vmatmul.mubr.bf16.gmra.mrb[0].mxu0 %v918
        %v2086 = vpop.f32.mrb[0].mxu0
        %v2087 = vadd.f32 %v848, %v2086
        %v2088 = vpop.f32.mrb[0].mxu0
        %v2089 = vadd.f32 %v848, %v2088
        %v2090 = vpop.f32.mrb[0].mxu0
        %v2091 = vadd.f32 %v853, %v2090
        %v2092 = vpop.f32.mrb[0].mxu0
        %v2093 = vadd.f32 %v853, %v2092
        %2094 = vdwg.mxu0
        %2095 = vmatprep.subr.bf16.mxu0 0
        %2096 = vmatpush1.bf16.xpose.msra.mxu0 %v1257
        %2097 = vmatprep.subr.bf16.mxu0 0
        %2098 = vmatpush1.bf16.xpose.msra.mxu0 %v1260
        %2099 = vmatprep.subr.bf16.mxu0 0
        %2100 = vmatpush1.bf16.xpose.msra.mxu0 %v1263
        %2101 = vmatprep.subr.bf16.mxu0 0
        %2102 = vmatpush1.bf16.xpose.msra.mxu0 %v1266
        %2103 = vmatprep.subr.bf16.mxu0 0
        %2104 = vmatpush1.bf16.xpose.msra.mxu0 %v1269
        %2105 = vmatprep.subr.bf16.mxu0 0
        %2106 = vmatpush1.bf16.xpose.msra.mxu0 %v1272
        %2107 = vmatprep.subr.bf16.mxu0 0
        %2108 = vmatpush1.bf16.xpose.msra.mxu0 %v1275
        %2109 = vmatprep.subr.bf16.mxu0 0
        %2110 = vmatpush1.bf16.xpose.msra.mxu0 %v1278
        %2111 = vmatprep.subr.bf16.mxu0 0
        %2112 = vmatpush1.bf16.xpose.msra.mxu0 %v1281
        %2113 = vmatprep.subr.bf16.mxu0 0
        %2114 = vmatpush1.bf16.xpose.msra.mxu0 %v1284
        %2115 = vmatprep.subr.bf16.mxu0 0
        %2116 = vmatpush1.bf16.xpose.msra.mxu0 %v1287
        %2117 = vmatprep.subr.bf16.mxu0 0
        %2118 = vmatpush1.bf16.xpose.msra.mxu0 %v1290
        %2119 = vmatprep.subr.bf16.mxu0 0
        %2120 = vmatpush1.bf16.xpose.msra.mxu0 %v1293
        %2121 = vmatprep.subr.bf16.mxu0 0
        %2122 = vmatpush1.bf16.xpose.msra.mxu0 %v1296
        %2123 = vmatprep.subr.bf16.mxu0 0
        %2124 = vmatpush1.bf16.xpose.msra.mxu0 %v1299
        %2125 = vmatprep.subr.bf16.mxu0 0
        %2126 = vmatpush1.bf16.xpose.msra.mxu0 %v1302
        %2127 = vmatprep.mubr.bf16.mxu0 0
        %2128 = vmatmul.mubr.bf16.gmra.mrb[0].mxu0 %v897
        %v2129 = vpop.f32.mrb[0].mxu0
        %v2130 = vadd.f32 %v778, %v2129
        %v2131 = vpop.f32.mrb[0].mxu0
        %v2132 = vadd.f32 %v778, %v2131
        %v2133 = vpop.f32.mrb[0].mxu0
        %v2134 = vadd.f32 %v783, %v2133
        %v2135 = vpop.f32.mrb[0].mxu0
        %v2136 = vadd.f32 %v783, %v2135
        %2137 = vmatprep.mubr.bf16.mxu0 0
        %2138 = vmatmul.mubr.bf16.gmra.mrb[0].mxu0 %v900
        %v2139 = vpop.f32.mrb[0].mxu0
        %v2140 = vadd.f32 %v788, %v2139
        %v2141 = vpop.f32.mrb[0].mxu0
        %v2142 = vadd.f32 %v788, %v2141
        %v2143 = vpop.f32.mrb[0].mxu0
        %v2144 = vadd.f32 %v793, %v2143
        %v2145 = vpop.f32.mrb[0].mxu0
        %v2146 = vadd.f32 %v793, %v2145
        %2147 = vmatprep.mubr.bf16.mxu0 0
        %2148 = vmatmul.mubr.bf16.gmra.mrb[0].mxu0 %v903
        %v2149 = vpop.f32.mrb[0].mxu0
        %v2150 = vadd.f32 %v798, %v2149
        %v2151 = vpop.f32.mrb[0].mxu0
        %v2152 = vadd.f32 %v798, %v2151
        %v2153 = vpop.f32.mrb[0].mxu0
        %v2154 = vadd.f32 %v803, %v2153
        %v2155 = vpop.f32.mrb[0].mxu0
        %v2156 = vadd.f32 %v803, %v2155
        %2157 = vmatprep.mubr.bf16.mxu0 0
        %2158 = vmatmul.mubr.bf16.gmra.mrb[0].mxu0 %v906
        %v2159 = vpop.f32.mrb[0].mxu0
        %v2160 = vadd.f32 %v808, %v2159
        %v2161 = vpop.f32.mrb[0].mxu0
        %v2162 = vadd.f32 %v808, %v2161
        %v2163 = vpop.f32.mrb[0].mxu0
        %v2164 = vadd.f32 %v813, %v2163
        %v2165 = vpop.f32.mrb[0].mxu0
        %v2166 = vadd.f32 %v813, %v2165
        %2167 = vmatprep.mubr.bf16.mxu0 0
        %2168 = vmatmul.mubr.bf16.gmra.mrb[0].mxu0 %v909
        %v2169 = vpop.f32.mrb[0].mxu0
        %v2170 = vadd.f32 %v818, %v2169
        %v2171 = vpop.f32.mrb[0].mxu0
        %v2172 = vadd.f32 %v818, %v2171
        %v2173 = vpop.f32.mrb[0].mxu0
        %v2174 = vadd.f32 %v823, %v2173
        %v2175 = vpop.f32.mrb[0].mxu0
        %v2176 = vadd.f32 %v823, %v2175
        %2177 = vmatprep.mubr.bf16.mxu0 0
        %2178 = vmatmul.mubr.bf16.gmra.mrb[0].mxu0 %v912
        %v2179 = vpop.f32.mrb[0].mxu0
        %v2180 = vadd.f32 %v828, %v2179
        %v2181 = vpop.f32.mrb[0].mxu0
        %v2182 = vadd.f32 %v828, %v2181
        %v2183 = vpop.f32.mrb[0].mxu0
        %v2184 = vadd.f32 %v833, %v2183
        %v2185 = vpop.f32.mrb[0].mxu0
        %v2186 = vadd.f32 %v833, %v2185
        %2187 = vmatprep.mubr.bf16.mxu0 0
        %2188 = vmatmul.mubr.bf16.gmra.mrb[0].mxu0 %v915
        %v2189 = vpop.f32.mrb[0].mxu0
        %v2190 = vadd.f32 %v838, %v2189
        %v2191 = vpop.f32.mrb[0].mxu0
        %v2192 = vadd.f32 %v838, %v2191
        %v2193 = vpop.f32.mrb[0].mxu0
        %v2194 = vadd.f32 %v843, %v2193
        %v2195 = vpop.f32.mrb[0].mxu0
        %v2196 = vadd.f32 %v843, %v2195
        %2197 = vmatprep.mubr.bf16.mxu0 0
        %2198 = vmatmul.mubr.bf16.gmra.mrb[0].mxu0 %v918
        %v2199 = vpop.f32.mrb[0].mxu0
        %v2200 = vadd.f32 %v848, %v2199
        %v2201 = vpop.f32.mrb[0].mxu0
        %v2202 = vadd.f32 %v848, %v2201
        %v2203 = vpop.f32.mrb[0].mxu0
        %v2204 = vadd.f32 %v853, %v2203
        %v2205 = vpop.f32.mrb[0].mxu0
        %v2206 = vadd.f32 %v853, %v2205
        %2207 = vdwg.mxu0
        %v2208 = vmax.f32 %v1339, 0.0
        %v2209 = vmax.f32 %v1341, 0.0
        %v2210 = vmax.f32 %v1452, 0.0
        %v2211 = vmax.f32 %v1454, 0.0
        %v2212 = vmax.f32 %v1565, 0.0
        %v2213 = vmax.f32 %v1567, 0.0
        %v2214 = vmax.f32 %v1678, 0.0
        %v2215 = vmax.f32 %v1680, 0.0
        %v2216 = vmax.f32 %v1791, 0.0
        %v2217 = vmax.f32 %v1793, 0.0
        %v2218 = vmax.f32 %v1904, 0.0
        %v2219 = vmax.f32 %v1906, 0.0
        %v2220 = vmax.f32 %v2017, 0.0
        %v2221 = vmax.f32 %v2019, 0.0
        %v2222 = vmax.f32 %v2130, 0.0
        %v2223 = vmax.f32 %v2132, 0.0
        %v2224 = vmax.f32 %v1343, 0.0
        %v2225 = vmax.f32 %v1345, 0.0
        %v2226 = vmax.f32 %v1456, 0.0
        %v2227 = vmax.f32 %v1458, 0.0
        %v2228 = vmax.f32 %v1569, 0.0
        %v2229 = vmax.f32 %v1571, 0.0
        %v2230 = vmax.f32 %v1682, 0.0
        %v2231 = vmax.f32 %v1684, 0.0
        %v2232 = vmax.f32 %v1795, 0.0
        %v2233 = vmax.f32 %v1797, 0.0
        %v2234 = vmax.f32 %v1908, 0.0
        %v2235 = vmax.f32 %v1910, 0.0
        %v2236 = vmax.f32 %v2021, 0.0
        %v2237 = vmax.f32 %v2023, 0.0
        %v2238 = vmax.f32 %v2134, 0.0
        %v2239 = vmax.f32 %v2136, 0.0
        %v2240 = vmax.f32 %v1349, 0.0
        %v2241 = vmax.f32 %v1351, 0.0
        %v2242 = vmax.f32 %v1462, 0.0
        %v2243 = vmax.f32 %v1464, 0.0
        %v2244 = vmax.f32 %v1575, 0.0
        %v2245 = vmax.f32 %v1577, 0.0
        %v2246 = vmax.f32 %v1688, 0.0
        %v2247 = vmax.f32 %v1690, 0.0
        %v2248 = vmax.f32 %v1801, 0.0
        %v2249 = vmax.f32 %v1803, 0.0
        %v2250 = vmax.f32 %v1914, 0.0
        %v2251 = vmax.f32 %v1916, 0.0
        %v2252 = vmax.f32 %v2027, 0.0
        %v2253 = vmax.f32 %v2029, 0.0
        %v2254 = vmax.f32 %v2140, 0.0
        %v2255 = vmax.f32 %v2142, 0.0
        %v2256 = vmax.f32 %v1353, 0.0
        %v2257 = vmax.f32 %v1355, 0.0
        %v2258 = vmax.f32 %v1466, 0.0
        %v2259 = vmax.f32 %v1468, 0.0
        %v2260 = vmax.f32 %v1579, 0.0
        %v2261 = vmax.f32 %v1581, 0.0
        %v2262 = vmax.f32 %v1692, 0.0
        %v2263 = vmax.f32 %v1694, 0.0
        %v2264 = vmax.f32 %v1805, 0.0
        %v2265 = vmax.f32 %v1807, 0.0
        %v2266 = vmax.f32 %v1918, 0.0
        %v2267 = vmax.f32 %v1920, 0.0
        %v2268 = vmax.f32 %v2031, 0.0
        %v2269 = vmax.f32 %v2033, 0.0
        %v2270 = vmax.f32 %v2144, 0.0
        %v2271 = vmax.f32 %v2146, 0.0
        %v2272 = vmax.f32 %v1359, 0.0
        %v2273 = vmax.f32 %v1361, 0.0
        %v2274 = vmax.f32 %v1472, 0.0
        %v2275 = vmax.f32 %v1474, 0.0
        %v2276 = vmax.f32 %v1585, 0.0
        %v2277 = vmax.f32 %v1587, 0.0
        %v2278 = vmax.f32 %v1698, 0.0
        %v2279 = vmax.f32 %v1700, 0.0
        %v2280 = vmax.f32 %v1811, 0.0
        %v2281 = vmax.f32 %v1813, 0.0
        %v2282 = vmax.f32 %v1924, 0.0
        %v2283 = vmax.f32 %v1926, 0.0
        %v2284 = vmax.f32 %v2037, 0.0
        %v2285 = vmax.f32 %v2039, 0.0
        %v2286 = vmax.f32 %v2150, 0.0
        %v2287 = vmax.f32 %v2152, 0.0
        %v2288 = vmax.f32 %v1363, 0.0
        %v2289 = vmax.f32 %v1365, 0.0
        %v2290 = vmax.f32 %v1476, 0.0
        %v2291 = vmax.f32 %v1478, 0.0
        %v2292 = vmax.f32 %v1589, 0.0
        %v2293 = vmax.f32 %v1591, 0.0
        %v2294 = vmax.f32 %v1702, 0.0
        %v2295 = vmax.f32 %v1704, 0.0
        %v2296 = vmax.f32 %v1815, 0.0
        %v2297 = vmax.f32 %v1817, 0.0
        %v2298 = vmax.f32 %v1928, 0.0
        %v2299 = vmax.f32 %v1930, 0.0
        %v2300 = vmax.f32 %v2041, 0.0
        %v2301 = vmax.f32 %v2043, 0.0
        %v2302 = vmax.f32 %v2154, 0.0
        %v2303 = vmax.f32 %v2156, 0.0
        %v2304 = vmax.f32 %v1369, 0.0
        %v2305 = vmax.f32 %v1371, 0.0
        %v2306 = vmax.f32 %v1482, 0.0
        %v2307 = vmax.f32 %v1484, 0.0
        %v2308 = vmax.f32 %v1595, 0.0
        %v2309 = vmax.f32 %v1597, 0.0
        %v2310 = vmax.f32 %v1708, 0.0
        %v2311 = vmax.f32 %v1710, 0.0
        %v2312 = vmax.f32 %v1821, 0.0
        %v2313 = vmax.f32 %v1823, 0.0
        %v2314 = vmax.f32 %v1934, 0.0
        %v2315 = vmax.f32 %v1936, 0.0
        %v2316 = vmax.f32 %v2047, 0.0
        %v2317 = vmax.f32 %v2049, 0.0
        %v2318 = vmax.f32 %v2160, 0.0
        %v2319 = vmax.f32 %v2162, 0.0
        %v2320 = vmax.f32 %v1373, 0.0
        %v2321 = vmax.f32 %v1375, 0.0
        %v2322 = vmax.f32 %v1486, 0.0
        %v2323 = vmax.f32 %v1488, 0.0
        %v2324 = vmax.f32 %v1599, 0.0
        %v2325 = vmax.f32 %v1601, 0.0
        %v2326 = vmax.f32 %v1712, 0.0
        %v2327 = vmax.f32 %v1714, 0.0
        %v2328 = vmax.f32 %v1825, 0.0
        %v2329 = vmax.f32 %v1827, 0.0
        %v2330 = vmax.f32 %v1938, 0.0
        %v2331 = vmax.f32 %v1940, 0.0
        %v2332 = vmax.f32 %v2051, 0.0
        %v2333 = vmax.f32 %v2053, 0.0
        %v2334 = vmax.f32 %v2164, 0.0
        %v2335 = vmax.f32 %v2166, 0.0
        %v2336 = vmax.f32 %v1379, 0.0
        %v2337 = vmax.f32 %v1381, 0.0
        %v2338 = vmax.f32 %v1492, 0.0
        %v2339 = vmax.f32 %v1494, 0.0
        %v2340 = vmax.f32 %v1605, 0.0
        %v2341 = vmax.f32 %v1607, 0.0
        %v2342 = vmax.f32 %v1718, 0.0
        %v2343 = vmax.f32 %v1720, 0.0
        %v2344 = vmax.f32 %v1831, 0.0
        %v2345 = vmax.f32 %v1833, 0.0
        %v2346 = vmax.f32 %v1944, 0.0
        %v2347 = vmax.f32 %v1946, 0.0
        %v2348 = vmax.f32 %v2057, 0.0
        %v2349 = vmax.f32 %v2059, 0.0
        %v2350 = vmax.f32 %v2170, 0.0
        %v2351 = vmax.f32 %v2172, 0.0
        %v2352 = vmax.f32 %v1383, 0.0
        %v2353 = vmax.f32 %v1385, 0.0
        %v2354 = vmax.f32 %v1496, 0.0
        %v2355 = vmax.f32 %v1498, 0.0
        %v2356 = vmax.f32 %v1609, 0.0
        %v2357 = vmax.f32 %v1611, 0.0
        %v2358 = vmax.f32 %v1722, 0.0
        %v2359 = vmax.f32 %v1724, 0.0
        %v2360 = vmax.f32 %v1835, 0.0
        %v2361 = vmax.f32 %v1837, 0.0
        %v2362 = vmax.f32 %v1948, 0.0
        %v2363 = vmax.f32 %v1950, 0.0
        %v2364 = vmax.f32 %v2061, 0.0
        %v2365 = vmax.f32 %v2063, 0.0
        %v2366 = vmax.f32 %v2174, 0.0
        %v2367 = vmax.f32 %v2176, 0.0
        %v2368 = vmax.f32 %v1389, 0.0
        %v2369 = vmax.f32 %v1391, 0.0
        %v2370 = vmax.f32 %v1502, 0.0
        %v2371 = vmax.f32 %v1504, 0.0
        %v2372 = vmax.f32 %v1615, 0.0
        %v2373 = vmax.f32 %v1617, 0.0
        %v2374 = vmax.f32 %v1728, 0.0
        %v2375 = vmax.f32 %v1730, 0.0
        %v2376 = vmax.f32 %v1841, 0.0
        %v2377 = vmax.f32 %v1843, 0.0
        %v2378 = vmax.f32 %v1954, 0.0
        %v2379 = vmax.f32 %v1956, 0.0
        %v2380 = vmax.f32 %v2067, 0.0
        %v2381 = vmax.f32 %v2069, 0.0
        %v2382 = vmax.f32 %v2180, 0.0
        %v2383 = vmax.f32 %v2182, 0.0
        %v2384 = vmax.f32 %v1393, 0.0
        %v2385 = vmax.f32 %v1395, 0.0
        %v2386 = vmax.f32 %v1506, 0.0
        %v2387 = vmax.f32 %v1508, 0.0
        %v2388 = vmax.f32 %v1619, 0.0
        %v2389 = vmax.f32 %v1621, 0.0
        %v2390 = vmax.f32 %v1732, 0.0
        %v2391 = vmax.f32 %v1734, 0.0
        %v2392 = vmax.f32 %v1845, 0.0
        %v2393 = vmax.f32 %v1847, 0.0
        %v2394 = vmax.f32 %v1958, 0.0
        %v2395 = vmax.f32 %v1960, 0.0
        %v2396 = vmax.f32 %v2071, 0.0
        %v2397 = vmax.f32 %v2073, 0.0
        %v2398 = vmax.f32 %v2184, 0.0
        %v2399 = vmax.f32 %v2186, 0.0
        %v2400 = vmax.f32 %v1399, 0.0
        %v2401 = vmax.f32 %v1401, 0.0
        %v2402 = vmax.f32 %v1512, 0.0
        %v2403 = vmax.f32 %v1514, 0.0
        %v2404 = vmax.f32 %v1625, 0.0
        %v2405 = vmax.f32 %v1627, 0.0
        %v2406 = vmax.f32 %v1738, 0.0
        %v2407 = vmax.f32 %v1740, 0.0
        %v2408 = vmax.f32 %v1851, 0.0
        %v2409 = vmax.f32 %v1853, 0.0
        %v2410 = vmax.f32 %v1964, 0.0
        %v2411 = vmax.f32 %v1966, 0.0
        %v2412 = vmax.f32 %v2077, 0.0
        %v2413 = vmax.f32 %v2079, 0.0
        %v2414 = vmax.f32 %v2190, 0.0
        %v2415 = vmax.f32 %v2192, 0.0
        %v2416 = vmax.f32 %v1403, 0.0
        %v2417 = vmax.f32 %v1405, 0.0
        %v2418 = vmax.f32 %v1516, 0.0
        %v2419 = vmax.f32 %v1518, 0.0
        %v2420 = vmax.f32 %v1629, 0.0
        %v2421 = vmax.f32 %v1631, 0.0
        %v2422 = vmax.f32 %v1742, 0.0
        %v2423 = vmax.f32 %v1744, 0.0
        %v2424 = vmax.f32 %v1855, 0.0
        %v2425 = vmax.f32 %v1857, 0.0
        %v2426 = vmax.f32 %v1968, 0.0
        %v2427 = vmax.f32 %v1970, 0.0
        %v2428 = vmax.f32 %v2081, 0.0
        %v2429 = vmax.f32 %v2083, 0.0
        %v2430 = vmax.f32 %v2194, 0.0
        %v2431 = vmax.f32 %v2196, 0.0
        %v2432 = vmax.f32 %v1409, 0.0
        %v2433 = vmax.f32 %v1411, 0.0
        %v2434 = vmax.f32 %v1522, 0.0
        %v2435 = vmax.f32 %v1524, 0.0
        %v2436 = vmax.f32 %v1635, 0.0
        %v2437 = vmax.f32 %v1637, 0.0
        %v2438 = vmax.f32 %v1748, 0.0
        %v2439 = vmax.f32 %v1750, 0.0
        %v2440 = vmax.f32 %v1861, 0.0
        %v2441 = vmax.f32 %v1863, 0.0
        %v2442 = vmax.f32 %v1974, 0.0
        %v2443 = vmax.f32 %v1976, 0.0
        %v2444 = vmax.f32 %v2087, 0.0
        %v2445 = vmax.f32 %v2089, 0.0
        %v2446 = vmax.f32 %v2200, 0.0
        %v2447 = vmax.f32 %v2202, 0.0
        %v2448 = vmax.f32 %v1413, 0.0
        %v2449 = vmax.f32 %v1415, 0.0
        %v2450 = vmax.f32 %v1526, 0.0
        %v2451 = vmax.f32 %v1528, 0.0
        %v2452 = vmax.f32 %v1639, 0.0
        %v2453 = vmax.f32 %v1641, 0.0
        %v2454 = vmax.f32 %v1752, 0.0
        %v2455 = vmax.f32 %v1754, 0.0
        %v2456 = vmax.f32 %v1865, 0.0
        %v2457 = vmax.f32 %v1867, 0.0
        %v2458 = vmax.f32 %v1978, 0.0
        %v2459 = vmax.f32 %v1980, 0.0
        %v2460 = vmax.f32 %v2091, 0.0
        %v2461 = vmax.f32 %v2093, 0.0
        %v2462 = vmax.f32 %v2204, 0.0
        %v2463 = vmax.f32 %v2206, 0.0
        %v2464 = vld [vmem:[%s3] sm:$0xf]
        %v2465 = vld [vmem:[%s3 + $0x4] sm:$0xf]
        %v2466 = vld [vmem:[%s3 + $0x8] sm:$0xf]
        %v2467 = vld [vmem:[%s3 + $0xc] sm:$0xf]
        %v2468 = vld [vmem:[%s3 + $0x10] sm:$0xf]
        %v2469 = vld [vmem:[%s3 + $0x14] sm:$0xf]
        %v2470 = vld [vmem:[%s3 + $0x18] sm:$0xf]
        %v2471 = vld [vmem:[%s3 + $0x1c] sm:$0xf]
        %v2472 = vpack.c.bf16 %v2224, %v2208
        %v2473 = vpack.c.bf16 %v2225, %v2209
        %v2474 = vpack.c.bf16 %v2226, %v2210
        %v2475 = vpack.c.bf16 %v2227, %v2211
        %v2476 = vpack.c.bf16 %v2228, %v2212
        %v2477 = vpack.c.bf16 %v2229, %v2213
        %v2478 = vpack.c.bf16 %v2230, %v2214
        %v2479 = vpack.c.bf16 %v2231, %v2215
        %v2480 = vpack.c.bf16 %v2232, %v2216
        %v2481 = vpack.c.bf16 %v2233, %v2217
        %v2482 = vpack.c.bf16 %v2234, %v2218
        %v2483 = vpack.c.bf16 %v2235, %v2219
        %v2484 = vpack.c.bf16 %v2236, %v2220
        %v2485 = vpack.c.bf16 %v2237, %v2221
        %v2486 = vpack.c.bf16 %v2238, %v2222
        %v2487 = vpack.c.bf16 %v2239, %v2223
        %v2488 = vpack.c.bf16 %v2256, %v2240
        %v2489 = vpack.c.bf16 %v2257, %v2241
        %v2490 = vpack.c.bf16 %v2258, %v2242
        %v2491 = vpack.c.bf16 %v2259, %v2243
        %v2492 = vpack.c.bf16 %v2260, %v2244
        %v2493 = vpack.c.bf16 %v2261, %v2245
        %v2494 = vpack.c.bf16 %v2262, %v2246
        %v2495 = vpack.c.bf16 %v2263, %v2247
        %v2496 = vpack.c.bf16 %v2264, %v2248
        %v2497 = vpack.c.bf16 %v2265, %v2249
        %v2498 = vpack.c.bf16 %v2266, %v2250
        %v2499 = vpack.c.bf16 %v2267, %v2251
        %v2500 = vpack.c.bf16 %v2268, %v2252
        %v2501 = vpack.c.bf16 %v2269, %v2253
        %v2502 = vpack.c.bf16 %v2270, %v2254
        %v2503 = vpack.c.bf16 %v2271, %v2255
        %v2504 = vpack.c.bf16 %v2288, %v2272
        %v2505 = vpack.c.bf16 %v2289, %v2273
        %v2506 = vpack.c.bf16 %v2290, %v2274
        %v2507 = vpack.c.bf16 %v2291, %v2275
        %v2508 = vpack.c.bf16 %v2292, %v2276
        %v2509 = vpack.c.bf16 %v2293, %v2277
        %v2510 = vpack.c.bf16 %v2294, %v2278
        %v2511 = vpack.c.bf16 %v2295, %v2279
        %v2512 = vpack.c.bf16 %v2296, %v2280
        %v2513 = vpack.c.bf16 %v2297, %v2281
        %v2514 = vpack.c.bf16 %v2298, %v2282
        %v2515 = vpack.c.bf16 %v2299, %v2283
        %v2516 = vpack.c.bf16 %v2300, %v2284
        %v2517 = vpack.c.bf16 %v2301, %v2285
        %v2518 = vpack.c.bf16 %v2302, %v2286
        %v2519 = vpack.c.bf16 %v2303, %v2287
        %v2520 = vpack.c.bf16 %v2320, %v2304
        %v2521 = vpack.c.bf16 %v2321, %v2305
        %v2522 = vpack.c.bf16 %v2322, %v2306
        %v2523 = vpack.c.bf16 %v2323, %v2307
        %v2524 = vpack.c.bf16 %v2324, %v2308
        %v2525 = vpack.c.bf16 %v2325, %v2309
        %v2526 = vpack.c.bf16 %v2326, %v2310
        %v2527 = vpack.c.bf16 %v2327, %v2311
        %v2528 = vpack.c.bf16 %v2328, %v2312
        %v2529 = vpack.c.bf16 %v2329, %v2313
        %v2530 = vpack.c.bf16 %v2330, %v2314
        %v2531 = vpack.c.bf16 %v2331, %v2315
        %v2532 = vpack.c.bf16 %v2332, %v2316
        %v2533 = vpack.c.bf16 %v2333, %v2317
        %v2534 = vpack.c.bf16 %v2334, %v2318
        %v2535 = vpack.c.bf16 %v2335, %v2319
        %v2536 = vpack.c.bf16 %v2352, %v2336
        %v2537 = vpack.c.bf16 %v2353, %v2337
        %v2538 = vpack.c.bf16 %v2354, %v2338
        %v2539 = vpack.c.bf16 %v2355, %v2339
        %v2540 = vpack.c.bf16 %v2356, %v2340
        %v2541 = vpack.c.bf16 %v2357, %v2341
        %v2542 = vpack.c.bf16 %v2358, %v2342
        %v2543 = vpack.c.bf16 %v2359, %v2343
        %v2544 = vpack.c.bf16 %v2360, %v2344
        %v2545 = vpack.c.bf16 %v2361, %v2345
        %v2546 = vpack.c.bf16 %v2362, %v2346
        %v2547 = vpack.c.bf16 %v2363, %v2347
        %v2548 = vpack.c.bf16 %v2364, %v2348
        %v2549 = vpack.c.bf16 %v2365, %v2349
        %v2550 = vpack.c.bf16 %v2366, %v2350
        %v2551 = vpack.c.bf16 %v2367, %v2351
        %v2552 = vpack.c.bf16 %v2384, %v2368
        %v2553 = vpack.c.bf16 %v2385, %v2369
        %v2554 = vpack.c.bf16 %v2386, %v2370
        %v2555 = vpack.c.bf16 %v2387, %v2371
        %v2556 = vpack.c.bf16 %v2388, %v2372
        %v2557 = vpack.c.bf16 %v2389, %v2373
        %v2558 = vpack.c.bf16 %v2390, %v2374
        %v2559 = vpack.c.bf16 %v2391, %v2375
        %v2560 = vpack.c.bf16 %v2392, %v2376
        %v2561 = vpack.c.bf16 %v2393, %v2377
        %v2562 = vpack.c.bf16 %v2394, %v2378
        %v2563 = vpack.c.bf16 %v2395, %v2379
        %v2564 = vpack.c.bf16 %v2396, %v2380
        %v2565 = vpack.c.bf16 %v2397, %v2381
        %v2566 = vpack.c.bf16 %v2398, %v2382
        %v2567 = vpack.c.bf16 %v2399, %v2383
        %v2568 = vpack.c.bf16 %v2416, %v2400
        %v2569 = vpack.c.bf16 %v2417, %v2401
        %v2570 = vpack.c.bf16 %v2418, %v2402
        %v2571 = vpack.c.bf16 %v2419, %v2403
        %v2572 = vpack.c.bf16 %v2420, %v2404
        %v2573 = vpack.c.bf16 %v2421, %v2405
        %v2574 = vpack.c.bf16 %v2422, %v2406
        %v2575 = vpack.c.bf16 %v2423, %v2407
        %v2576 = vpack.c.bf16 %v2424, %v2408
        %v2577 = vpack.c.bf16 %v2425, %v2409
        %v2578 = vpack.c.bf16 %v2426, %v2410
        %v2579 = vpack.c.bf16 %v2427, %v2411
        %v2580 = vpack.c.bf16 %v2428, %v2412
        %v2581 = vpack.c.bf16 %v2429, %v2413
        %v2582 = vpack.c.bf16 %v2430, %v2414
        %v2583 = vpack.c.bf16 %v2431, %v2415
        %v2584 = vpack.c.bf16 %v2448, %v2432
        %v2585 = vpack.c.bf16 %v2449, %v2433
        %v2586 = vpack.c.bf16 %v2450, %v2434
        %v2587 = vpack.c.bf16 %v2451, %v2435
        %v2588 = vpack.c.bf16 %v2452, %v2436
        %v2589 = vpack.c.bf16 %v2453, %v2437
        %v2590 = vpack.c.bf16 %v2454, %v2438
        %v2591 = vpack.c.bf16 %v2455, %v2439
        %v2592 = vpack.c.bf16 %v2456, %v2440
        %v2593 = vpack.c.bf16 %v2457, %v2441
        %v2594 = vpack.c.bf16 %v2458, %v2442
        %v2595 = vpack.c.bf16 %v2459, %v2443
        %v2596 = vpack.c.bf16 %v2460, %v2444
        %v2597 = vpack.c.bf16 %v2461, %v2445
        %v2598 = vpack.c.bf16 %v2462, %v2446
        %v2599 = vpack.c.bf16 %v2463, %v2447
        %v2600 = vld [vmem:[%s4] sm:$0xff]
        %v2601 = vld [vmem:[%s4 + $0x8] sm:$0xff]
        %v2602 = vld [vmem:[%s4 + $0x10] sm:$0xff]
        %v2603 = vld [vmem:[%s4 + $0x18] sm:$0xff]
        %v2604 = vld [vmem:[%s4 + $0x20] sm:$0xff]
        %v2605 = vld [vmem:[%s4 + $0x28] sm:$0xff]
        %v2606 = vld [vmem:[%s4 + $0x30] sm:$0xff]
        %v2607 = vld [vmem:[%s4 + $0x38] sm:$0xff]
        %2609 = vset.pattern.permute.xlu0 0
        %2610 = vperm.xlu0 %2609, %v2600
        %v2611 = vpop.permute.xlu0 %2610
        %2614 = vset.pattern.permute.xlu0 0
        %2615 = vperm.xlu0 %2614, %v2601
        %v2616 = vpop.permute.xlu0 %2615
        %2619 = vset.pattern.permute.xlu0 0
        %2620 = vperm.xlu0 %2619, %v2602
        %v2621 = vpop.permute.xlu0 %2620
        %2624 = vset.pattern.permute.xlu0 0
        %2625 = vperm.xlu0 %2624, %v2603
        %v2626 = vpop.permute.xlu0 %2625
        %2629 = vset.pattern.permute.xlu0 0
        %2630 = vperm.xlu0 %2629, %v2604
        %v2631 = vpop.permute.xlu0 %2630
        %2634 = vset.pattern.permute.xlu0 0
        %2635 = vperm.xlu0 %2634, %v2605
        %v2636 = vpop.permute.xlu0 %2635
        %2639 = vset.pattern.permute.xlu0 0
        %2640 = vperm.xlu0 %2639, %v2606
        %v2641 = vpop.permute.xlu0 %2640
        %2644 = vset.pattern.permute.xlu0 0
        %2645 = vperm.xlu0 %2644, %v2607
        %v2646 = vpop.permute.xlu0 %2645
        %v2656 = vunpack.c.l.b16 %v2464
        %v2657 = vunpack.c.l.b16 %v2465
        %v2658 = vunpack.c.l.b16 %v2466
        %v2659 = vunpack.c.l.b16 %v2467
        %v2660 = vunpack.c.l.b16 %v2468
        %v2661 = vunpack.c.l.b16 %v2469
        %v2662 = vunpack.c.l.b16 %v2470
        %v2663 = vunpack.c.l.b16 %v2471
        %v2664 = vpack.c.b16 %v2657, %v2656
        %v2665 = vpack.c.b16 %v2659, %v2658
        %v2666 = vpack.c.b16 %v2661, %v2660
        %v2667 = vpack.c.b16 %v2663, %v2662
        %2672 = vmatprep.subr.bf16.mxu0 %v2473
        %2673 = vmatpush1.bf16.msra.mxu0 %v2472
        %2674 = vmatprep.subr.bf16.mxu0 %v2489
        %2675 = vmatpush1.bf16.msra.mxu0 %v2488
        %2676 = vmatprep.subr.bf16.mxu0 %v2505
        %2677 = vmatpush1.bf16.msra.mxu0 %v2504
        %2678 = vmatprep.subr.bf16.mxu0 %v2521
        %2679 = vmatpush1.bf16.msra.mxu0 %v2520
        %2680 = vmatprep.subr.bf16.mxu0 %v2537
        %2681 = vmatpush1.bf16.msra.mxu0 %v2536
        %2682 = vmatprep.subr.bf16.mxu0 %v2553
        %2683 = vmatpush1.bf16.msra.mxu0 %v2552
        %2684 = vmatprep.subr.bf16.mxu0 %v2569
        %2685 = vmatpush1.bf16.msra.mxu0 %v2568
        %2686 = vmatprep.subr.bf16.mxu0 %v2585
        %2687 = vmatpush1.bf16.msra.mxu0 %v2584
        %2688 = vmatprep.subr.bf16.mxu0 0
        %2689 = vmatpush1.bf16.msra.mxu0 0
        %2690 = vmatprep.subr.bf16.mxu0 0
        %2691 = vmatpush1.bf16.msra.mxu0 0
        %2692 = vmatprep.subr.bf16.mxu0 0
        %2693 = vmatpush1.bf16.msra.mxu0 0
        %2694 = vmatprep.subr.bf16.mxu0 0
        %2695 = vmatpush1.bf16.msra.mxu0 0
        %2696 = vmatprep.subr.bf16.mxu0 0
        %2697 = vmatpush1.bf16.msra.mxu0 0
        %2698 = vmatprep.subr.bf16.mxu0 0
        %2699 = vmatpush1.bf16.msra.mxu0 0
        %2700 = vmatprep.subr.bf16.mxu0 0
        %2701 = vmatpush1.bf16.msra.mxu0 0
        %2702 = vmatprep.subr.bf16.mxu0 0
        %2703 = vmatpush1.bf16.msra.mxu0 0
        %2704 = vmatprep.mubr.bf16.mxu0 0
        %2705 = vmatmul.mubr.bf16.gmra.mrb[0].mxu0 %v2664
        %v2706 = vpop.f32.mrb[0].mxu0
        %v2707 = vadd.f32 %v2611, %v2706
        %v2708 = vpop.f32.mrb[0].mxu0
        %v2709 = vadd.f32 %v2611, %v2708
        %v2710 = vpop.f32.mrb[0].mxu0
        %v2711 = vadd.f32 %v2616, %v2710
        %v2712 = vpop.f32.mrb[0].mxu0
        %v2713 = vadd.f32 %v2616, %v2712
        %2714 = vmatprep.mubr.bf16.mxu0 0
        %2715 = vmatmul.mubr.bf16.gmra.mrb[0].mxu0 %v2665
        %v2716 = vpop.f32.mrb[0].mxu0
        %v2717 = vadd.f32 %v2621, %v2716
        %v2718 = vpop.f32.mrb[0].mxu0
        %v2719 = vadd.f32 %v2621, %v2718
        %v2720 = vpop.f32.mrb[0].mxu0
        %v2721 = vadd.f32 %v2626, %v2720
        %v2722 = vpop.f32.mrb[0].mxu0
        %v2723 = vadd.f32 %v2626, %v2722
        %2724 = vmatprep.mubr.bf16.mxu0 0
        %2725 = vmatmul.mubr.bf16.gmra.mrb[0].mxu0 %v2666
        %v2726 = vpop.f32.mrb[0].mxu0
        %v2727 = vadd.f32 %v2631, %v2726
        %v2728 = vpop.f32.mrb[0].mxu0
        %v2729 = vadd.f32 %v2631, %v2728
        %v2730 = vpop.f32.mrb[0].mxu0
        %v2731 = vadd.f32 %v2636, %v2730
        %v2732 = vpop.f32.mrb[0].mxu0
        %v2733 = vadd.f32 %v2636, %v2732
        %2734 = vmatprep.mubr.bf16.mxu0 0
        %2735 = vmatmul.mubr.bf16.gmra.mrb[0].mxu0 %v2667
        %v2736 = vpop.f32.mrb[0].mxu0
        %v2737 = vadd.f32 %v2641, %v2736
        %v2738 = vpop.f32.mrb[0].mxu0
        %v2739 = vadd.f32 %v2641, %v2738
        %v2740 = vpop.f32.mrb[0].mxu0
        %v2741 = vadd.f32 %v2646, %v2740
        %v2742 = vpop.f32.mrb[0].mxu0
        %v2743 = vadd.f32 %v2646, %v2742
        %2744 = vdwg.mxu0
        %2745 = vmatprep.subr.bf16.mxu0 %v2475
        %2746 = vmatpush1.bf16.msra.mxu0 %v2474
        %2747 = vmatprep.subr.bf16.mxu0 %v2491
        %2748 = vmatpush1.bf16.msra.mxu0 %v2490
        %2749 = vmatprep.subr.bf16.mxu0 %v2507
        %2750 = vmatpush1.bf16.msra.mxu0 %v2506
        %2751 = vmatprep.subr.bf16.mxu0 %v2523
        %2752 = vmatpush1.bf16.msra.mxu0 %v2522
        %2753 = vmatprep.subr.bf16.mxu0 %v2539
        %2754 = vmatpush1.bf16.msra.mxu0 %v2538
        %2755 = vmatprep.subr.bf16.mxu0 %v2555
        %2756 = vmatpush1.bf16.msra.mxu0 %v2554
        %2757 = vmatprep.subr.bf16.mxu0 %v2571
        %2758 = vmatpush1.bf16.msra.mxu0 %v2570
        %2759 = vmatprep.subr.bf16.mxu0 %v2587
        %2760 = vmatpush1.bf16.msra.mxu0 %v2586
        %2761 = vmatprep.subr.bf16.mxu0 0
        %2762 = vmatpush1.bf16.msra.mxu0 0
        %2763 = vmatprep.subr.bf16.mxu0 0
        %2764 = vmatpush1.bf16.msra.mxu0 0
        %2765 = vmatprep.subr.bf16.mxu0 0
        %2766 = vmatpush1.bf16.msra.mxu0 0
        %2767 = vmatprep.subr.bf16.mxu0 0
        %2768 = vmatpush1.bf16.msra.mxu0 0
        %2769 = vmatprep.subr.bf16.mxu0 0
        %2770 = vmatpush1.bf16.msra.mxu0 0
        %2771 = vmatprep.subr.bf16.mxu0 0
        %2772 = vmatpush1.bf16.msra.mxu0 0
        %2773 = vmatprep.subr.bf16.mxu0 0
        %2774 = vmatpush1.bf16.msra.mxu0 0
        %2775 = vmatprep.subr.bf16.mxu0 0
        %2776 = vmatpush1.bf16.msra.mxu0 0
        %2777 = vmatprep.mubr.bf16.mxu0 0
        %2778 = vmatmul.mubr.bf16.gmra.mrb[0].mxu0 %v2664
        %v2779 = vpop.f32.mrb[0].mxu0
        %v2780 = vadd.f32 %v2611, %v2779
        %v2781 = vpop.f32.mrb[0].mxu0
        %v2782 = vadd.f32 %v2611, %v2781
        %v2783 = vpop.f32.mrb[0].mxu0
        %v2784 = vadd.f32 %v2616, %v2783
        %v2785 = vpop.f32.mrb[0].mxu0
        %v2786 = vadd.f32 %v2616, %v2785
        %2787 = vmatprep.mubr.bf16.mxu0 0
        %2788 = vmatmul.mubr.bf16.gmra.mrb[0].mxu0 %v2665
        %v2789 = vpop.f32.mrb[0].mxu0
        %v2790 = vadd.f32 %v2621, %v2789
        %v2791 = vpop.f32.mrb[0].mxu0
        %v2792 = vadd.f32 %v2621, %v2791
        %v2793 = vpop.f32.mrb[0].mxu0
        %v2794 = vadd.f32 %v2626, %v2793
        %v2795 = vpop.f32.mrb[0].mxu0
        %v2796 = vadd.f32 %v2626, %v2795
        %2797 = vmatprep.mubr.bf16.mxu0 0
        %2798 = vmatmul.mubr.bf16.gmra.mrb[0].mxu0 %v2666
        %v2799 = vpop.f32.mrb[0].mxu0
        %v2800 = vadd.f32 %v2631, %v2799
        %v2801 = vpop.f32.mrb[0].mxu0
        %v2802 = vadd.f32 %v2631, %v2801
        %v2803 = vpop.f32.mrb[0].mxu0
        %v2804 = vadd.f32 %v2636, %v2803
        %v2805 = vpop.f32.mrb[0].mxu0
        %v2806 = vadd.f32 %v2636, %v2805
        %2807 = vmatprep.mubr.bf16.mxu0 0
        %2808 = vmatmul.mubr.bf16.gmra.mrb[0].mxu0 %v2667
        %v2809 = vpop.f32.mrb[0].mxu0
        %v2810 = vadd.f32 %v2641, %v2809
        %v2811 = vpop.f32.mrb[0].mxu0
        %v2812 = vadd.f32 %v2641, %v2811
        %v2813 = vpop.f32.mrb[0].mxu0
        %v2814 = vadd.f32 %v2646, %v2813
        %v2815 = vpop.f32.mrb[0].mxu0
        %v2816 = vadd.f32 %v2646, %v2815
        %2817 = vdwg.mxu0
        %2818 = vmatprep.subr.bf16.mxu0 %v2477
        %2819 = vmatpush1.bf16.msra.mxu0 %v2476
        %2820 = vmatprep.subr.bf16.mxu0 %v2493
        %2821 = vmatpush1.bf16.msra.mxu0 %v2492
        %2822 = vmatprep.subr.bf16.mxu0 %v2509
        %2823 = vmatpush1.bf16.msra.mxu0 %v2508
        %2824 = vmatprep.subr.bf16.mxu0 %v2525
        %2825 = vmatpush1.bf16.msra.mxu0 %v2524
        %2826 = vmatprep.subr.bf16.mxu0 %v2541
        %2827 = vmatpush1.bf16.msra.mxu0 %v2540
        %2828 = vmatprep.subr.bf16.mxu0 %v2557
        %2829 = vmatpush1.bf16.msra.mxu0 %v2556
        %2830 = vmatprep.subr.bf16.mxu0 %v2573
        %2831 = vmatpush1.bf16.msra.mxu0 %v2572
        %2832 = vmatprep.subr.bf16.mxu0 %v2589
        %2833 = vmatpush1.bf16.msra.mxu0 %v2588
        %2834 = vmatprep.subr.bf16.mxu0 0
        %2835 = vmatpush1.bf16.msra.mxu0 0
        %2836 = vmatprep.subr.bf16.mxu0 0
        %2837 = vmatpush1.bf16.msra.mxu0 0
        %2838 = vmatprep.subr.bf16.mxu0 0
        %2839 = vmatpush1.bf16.msra.mxu0 0
        %2840 = vmatprep.subr.bf16.mxu0 0
        %2841 = vmatpush1.bf16.msra.mxu0 0
        %2842 = vmatprep.subr.bf16.mxu0 0
        %2843 = vmatpush1.bf16.msra.mxu0 0
        %2844 = vmatprep.subr.bf16.mxu0 0
        %2845 = vmatpush1.bf16.msra.mxu0 0
        %2846 = vmatprep.subr.bf16.mxu0 0
        %2847 = vmatpush1.bf16.msra.mxu0 0
        %2848 = vmatprep.subr.bf16.mxu0 0
        %2849 = vmatpush1.bf16.msra.mxu0 0
        %2850 = vmatprep.mubr.bf16.mxu0 0
        %2851 = vmatmul.mubr.bf16.gmra.mrb[0].mxu0 %v2664
        %v2852 = vpop.f32.mrb[0].mxu0
        %v2853 = vadd.f32 %v2611, %v2852
        %v2854 = vpop.f32.mrb[0].mxu0
        %v2855 = vadd.f32 %v2611, %v2854
        %v2856 = vpop.f32.mrb[0].mxu0
        %v2857 = vadd.f32 %v2616, %v2856
        %v2858 = vpop.f32.mrb[0].mxu0
        %v2859 = vadd.f32 %v2616, %v2858
        %2860 = vmatprep.mubr.bf16.mxu0 0
        %2861 = vmatmul.mubr.bf16.gmra.mrb[0].mxu0 %v2665
        %v2862 = vpop.f32.mrb[0].mxu0
        %v2863 = vadd.f32 %v2621, %v2862
        %v2864 = vpop.f32.mrb[0].mxu0
        %v2865 = vadd.f32 %v2621, %v2864
        %v2866 = vpop.f32.mrb[0].mxu0
        %v2867 = vadd.f32 %v2626, %v2866
        %v2868 = vpop.f32.mrb[0].mxu0
        %v2869 = vadd.f32 %v2626, %v2868
        %2870 = vmatprep.mubr.bf16.mxu0 0
        %2871 = vmatmul.mubr.bf16.gmra.mrb[0].mxu0 %v2666
        %v2872 = vpop.f32.mrb[0].mxu0
        %v2873 = vadd.f32 %v2631, %v2872
        %v2874 = vpop.f32.mrb[0].mxu0
        %v2875 = vadd.f32 %v2631, %v2874
        %v2876 = vpop.f32.mrb[0].mxu0
        %v2877 = vadd.f32 %v2636, %v2876
        %v2878 = vpop.f32.mrb[0].mxu0
        %v2879 = vadd.f32 %v2636, %v2878
        %2880 = vmatprep.mubr.bf16.mxu0 0
        %2881 = vmatmul.mubr.bf16.gmra.mrb[0].mxu0 %v2667
        %v2882 = vpop.f32.mrb[0].mxu0
        %v2883 = vadd.f32 %v2641, %v2882
        %v2884 = vpop.f32.mrb[0].mxu0
        %v2885 = vadd.f32 %v2641, %v2884
        %v2886 = vpop.f32.mrb[0].mxu0
        %v2887 = vadd.f32 %v2646, %v2886
        %v2888 = vpop.f32.mrb[0].mxu0
        %v2889 = vadd.f32 %v2646, %v2888
        %2890 = vdwg.mxu0
        %2891 = vmatprep.subr.bf16.mxu0 %v2479
        %2892 = vmatpush1.bf16.msra.mxu0 %v2478
        %2893 = vmatprep.subr.bf16.mxu0 %v2495
        %2894 = vmatpush1.bf16.msra.mxu0 %v2494
        %2895 = vmatprep.subr.bf16.mxu0 %v2511
        %2896 = vmatpush1.bf16.msra.mxu0 %v2510
        %2897 = vmatprep.subr.bf16.mxu0 %v2527
        %2898 = vmatpush1.bf16.msra.mxu0 %v2526
        %2899 = vmatprep.subr.bf16.mxu0 %v2543
        %2900 = vmatpush1.bf16.msra.mxu0 %v2542
        %2901 = vmatprep.subr.bf16.mxu0 %v2559
        %2902 = vmatpush1.bf16.msra.mxu0 %v2558
        %2903 = vmatprep.subr.bf16.mxu0 %v2575
        %2904 = vmatpush1.bf16.msra.mxu0 %v2574
        %2905 = vmatprep.subr.bf16.mxu0 %v2591
        %2906 = vmatpush1.bf16.msra.mxu0 %v2590
        %2907 = vmatprep.subr.bf16.mxu0 0
        %2908 = vmatpush1.bf16.msra.mxu0 0
        %2909 = vmatprep.subr.bf16.mxu0 0
        %2910 = vmatpush1.bf16.msra.mxu0 0
        %2911 = vmatprep.subr.bf16.mxu0 0
        %2912 = vmatpush1.bf16.msra.mxu0 0
        %2913 = vmatprep.subr.bf16.mxu0 0
        %2914 = vmatpush1.bf16.msra.mxu0 0
        %2915 = vmatprep.subr.bf16.mxu0 0
        %2916 = vmatpush1.bf16.msra.mxu0 0
        %2917 = vmatprep.subr.bf16.mxu0 0
        %2918 = vmatpush1.bf16.msra.mxu0 0
        %2919 = vmatprep.subr.bf16.mxu0 0
        %2920 = vmatpush1.bf16.msra.mxu0 0
        %2921 = vmatprep.subr.bf16.mxu0 0
        %2922 = vmatpush1.bf16.msra.mxu0 0
        %2923 = vmatprep.mubr.bf16.mxu0 0
        %2924 = vmatmul.mubr.bf16.gmra.mrb[0].mxu0 %v2664
        %v2925 = vpop.f32.mrb[0].mxu0
        %v2926 = vadd.f32 %v2611, %v2925
        %v2927 = vpop.f32.mrb[0].mxu0
        %v2928 = vadd.f32 %v2611, %v2927
        %v2929 = vpop.f32.mrb[0].mxu0
        %v2930 = vadd.f32 %v2616, %v2929
        %v2931 = vpop.f32.mrb[0].mxu0
        %v2932 = vadd.f32 %v2616, %v2931
        %2933 = vmatprep.mubr.bf16.mxu0 0
        %2934 = vmatmul.mubr.bf16.gmra.mrb[0].mxu0 %v2665
        %v2935 = vpop.f32.mrb[0].mxu0
        %v2936 = vadd.f32 %v2621, %v2935
        %v2937 = vpop.f32.mrb[0].mxu0
        %v2938 = vadd.f32 %v2621, %v2937
        %v2939 = vpop.f32.mrb[0].mxu0
        %v2940 = vadd.f32 %v2626, %v2939
        %v2941 = vpop.f32.mrb[0].mxu0
        %v2942 = vadd.f32 %v2626, %v2941
        %2943 = vmatprep.mubr.bf16.mxu0 0
        %2944 = vmatmul.mubr.bf16.gmra.mrb[0].mxu0 %v2666
        %v2945 = vpop.f32.mrb[0].mxu0
        %v2946 = vadd.f32 %v2631, %v2945
        %v2947 = vpop.f32.mrb[0].mxu0
        %v2948 = vadd.f32 %v2631, %v2947
        %v2949 = vpop.f32.mrb[0].mxu0
        %v2950 = vadd.f32 %v2636, %v2949
        %v2951 = vpop.f32.mrb[0].mxu0
        %v2952 = vadd.f32 %v2636, %v2951
        %2953 = vmatprep.mubr.bf16.mxu0 0
        %2954 = vmatmul.mubr.bf16.gmra.mrb[0].mxu0 %v2667
        %v2955 = vpop.f32.mrb[0].mxu0
        %v2956 = vadd.f32 %v2641, %v2955
        %v2957 = vpop.f32.mrb[0].mxu0
        %v2958 = vadd.f32 %v2641, %v2957
        %v2959 = vpop.f32.mrb[0].mxu0
        %v2960 = vadd.f32 %v2646, %v2959
        %v2961 = vpop.f32.mrb[0].mxu0
        %v2962 = vadd.f32 %v2646, %v2961
        %2963 = vdwg.mxu0
        %2964 = vmatprep.subr.bf16.mxu0 %v2481
        %2965 = vmatpush1.bf16.msra.mxu0 %v2480
        %2966 = vmatprep.subr.bf16.mxu0 %v2497
        %2967 = vmatpush1.bf16.msra.mxu0 %v2496
        %2968 = vmatprep.subr.bf16.mxu0 %v2513
        %2969 = vmatpush1.bf16.msra.mxu0 %v2512
        %2970 = vmatprep.subr.bf16.mxu0 %v2529
        %2971 = vmatpush1.bf16.msra.mxu0 %v2528
        %2972 = vmatprep.subr.bf16.mxu0 %v2545
        %2973 = vmatpush1.bf16.msra.mxu0 %v2544
        %2974 = vmatprep.subr.bf16.mxu0 %v2561
        %2975 = vmatpush1.bf16.msra.mxu0 %v2560
        %2976 = vmatprep.subr.bf16.mxu0 %v2577
        %2977 = vmatpush1.bf16.msra.mxu0 %v2576
        %2978 = vmatprep.subr.bf16.mxu0 %v2593
        %2979 = vmatpush1.bf16.msra.mxu0 %v2592
        %2980 = vmatprep.subr.bf16.mxu0 0
        %2981 = vmatpush1.bf16.msra.mxu0 0
        %2982 = vmatprep.subr.bf16.mxu0 0
        %2983 = vmatpush1.bf16.msra.mxu0 0
        %2984 = vmatprep.subr.bf16.mxu0 0
        %2985 = vmatpush1.bf16.msra.mxu0 0
        %2986 = vmatprep.subr.bf16.mxu0 0
        %2987 = vmatpush1.bf16.msra.mxu0 0
        %2988 = vmatprep.subr.bf16.mxu0 0
        %2989 = vmatpush1.bf16.msra.mxu0 0
        %2990 = vmatprep.subr.bf16.mxu0 0
        %2991 = vmatpush1.bf16.msra.mxu0 0
        %2992 = vmatprep.subr.bf16.mxu0 0
        %2993 = vmatpush1.bf16.msra.mxu0 0
        %2994 = vmatprep.subr.bf16.mxu0 0
        %2995 = vmatpush1.bf16.msra.mxu0 0
        %2996 = vmatprep.mubr.bf16.mxu0 0
        %2997 = vmatmul.mubr.bf16.gmra.mrb[0].mxu0 %v2664
        %v2998 = vpop.f32.mrb[0].mxu0
        %v2999 = vadd.f32 %v2611, %v2998
        %v3000 = vpop.f32.mrb[0].mxu0
        %v3001 = vadd.f32 %v2611, %v3000
        %v3002 = vpop.f32.mrb[0].mxu0
        %v3003 = vadd.f32 %v2616, %v3002
        %v3004 = vpop.f32.mrb[0].mxu0
        %v3005 = vadd.f32 %v2616, %v3004
        %3006 = vmatprep.mubr.bf16.mxu0 0
        %3007 = vmatmul.mubr.bf16.gmra.mrb[0].mxu0 %v2665
        %v3008 = vpop.f32.mrb[0].mxu0
        %v3009 = vadd.f32 %v2621, %v3008
        %v3010 = vpop.f32.mrb[0].mxu0
        %v3011 = vadd.f32 %v2621, %v3010
        %v3012 = vpop.f32.mrb[0].mxu0
        %v3013 = vadd.f32 %v2626, %v3012
        %v3014 = vpop.f32.mrb[0].mxu0
        %v3015 = vadd.f32 %v2626, %v3014
        %3016 = vmatprep.mubr.bf16.mxu0 0
        %3017 = vmatmul.mubr.bf16.gmra.mrb[0].mxu0 %v2666
        %v3018 = vpop.f32.mrb[0].mxu0
        %v3019 = vadd.f32 %v2631, %v3018
        %v3020 = vpop.f32.mrb[0].mxu0
        %v3021 = vadd.f32 %v2631, %v3020
        %v3022 = vpop.f32.mrb[0].mxu0
        %v3023 = vadd.f32 %v2636, %v3022
        %v3024 = vpop.f32.mrb[0].mxu0
        %v3025 = vadd.f32 %v2636, %v3024
        %3026 = vmatprep.mubr.bf16.mxu0 0
        %3027 = vmatmul.mubr.bf16.gmra.mrb[0].mxu0 %v2667
        %v3028 = vpop.f32.mrb[0].mxu0
        %v3029 = vadd.f32 %v2641, %v3028
        %v3030 = vpop.f32.mrb[0].mxu0
        %v3031 = vadd.f32 %v2641, %v3030
        %v3032 = vpop.f32.mrb[0].mxu0
        %v3033 = vadd.f32 %v2646, %v3032
        %v3034 = vpop.f32.mrb[0].mxu0
        %v3035 = vadd.f32 %v2646, %v3034
        %3036 = vdwg.mxu0
        %3037 = vmatprep.subr.bf16.mxu0 %v2483
        %3038 = vmatpush1.bf16.msra.mxu0 %v2482
        %3039 = vmatprep.subr.bf16.mxu0 %v2499
        %3040 = vmatpush1.bf16.msra.mxu0 %v2498
        %3041 = vmatprep.subr.bf16.mxu0 %v2515
        %3042 = vmatpush1.bf16.msra.mxu0 %v2514
        %3043 = vmatprep.subr.bf16.mxu0 %v2531
        %3044 = vmatpush1.bf16.msra.mxu0 %v2530
        %3045 = vmatprep.subr.bf16.mxu0 %v2547
        %3046 = vmatpush1.bf16.msra.mxu0 %v2546
        %3047 = vmatprep.subr.bf16.mxu0 %v2563
        %3048 = vmatpush1.bf16.msra.mxu0 %v2562
        %3049 = vmatprep.subr.bf16.mxu0 %v2579
        %3050 = vmatpush1.bf16.msra.mxu0 %v2578
        %3051 = vmatprep.subr.bf16.mxu0 %v2595
        %3052 = vmatpush1.bf16.msra.mxu0 %v2594
        %3053 = vmatprep.subr.bf16.mxu0 0
        %3054 = vmatpush1.bf16.msra.mxu0 0
        %3055 = vmatprep.subr.bf16.mxu0 0
        %3056 = vmatpush1.bf16.msra.mxu0 0
        %3057 = vmatprep.subr.bf16.mxu0 0
        %3058 = vmatpush1.bf16.msra.mxu0 0
        %3059 = vmatprep.subr.bf16.mxu0 0
        %3060 = vmatpush1.bf16.msra.mxu0 0
        %3061 = vmatprep.subr.bf16.mxu0 0
        %3062 = vmatpush1.bf16.msra.mxu0 0
        %3063 = vmatprep.subr.bf16.mxu0 0
        %3064 = vmatpush1.bf16.msra.mxu0 0
        %3065 = vmatprep.subr.bf16.mxu0 0
        %3066 = vmatpush1.bf16.msra.mxu0 0
        %3067 = vmatprep.subr.bf16.mxu0 0
        %3068 = vmatpush1.bf16.msra.mxu0 0
        %3069 = vmatprep.mubr.bf16.mxu0 0
        %3070 = vmatmul.mubr.bf16.gmra.mrb[0].mxu0 %v2664
        %v3071 = vpop.f32.mrb[0].mxu0
        %v3072 = vadd.f32 %v2611, %v3071
        %v3073 = vpop.f32.mrb[0].mxu0
        %v3074 = vadd.f32 %v2611, %v3073
        %v3075 = vpop.f32.mrb[0].mxu0
        %v3076 = vadd.f32 %v2616, %v3075
        %v3077 = vpop.f32.mrb[0].mxu0
        %v3078 = vadd.f32 %v2616, %v3077
        %3079 = vmatprep.mubr.bf16.mxu0 0
        %3080 = vmatmul.mubr.bf16.gmra.mrb[0].mxu0 %v2665
        %v3081 = vpop.f32.mrb[0].mxu0
        %v3082 = vadd.f32 %v2621, %v3081
        %v3083 = vpop.f32.mrb[0].mxu0
        %v3084 = vadd.f32 %v2621, %v3083
        %v3085 = vpop.f32.mrb[0].mxu0
        %v3086 = vadd.f32 %v2626, %v3085
        %v3087 = vpop.f32.mrb[0].mxu0
        %v3088 = vadd.f32 %v2626, %v3087
        %3089 = vmatprep.mubr.bf16.mxu0 0
        %3090 = vmatmul.mubr.bf16.gmra.mrb[0].mxu0 %v2666
        %v3091 = vpop.f32.mrb[0].mxu0
        %v3092 = vadd.f32 %v2631, %v3091
        %v3093 = vpop.f32.mrb[0].mxu0
        %v3094 = vadd.f32 %v2631, %v3093
        %v3095 = vpop.f32.mrb[0].mxu0
        %v3096 = vadd.f32 %v2636, %v3095
        %v3097 = vpop.f32.mrb[0].mxu0
        %v3098 = vadd.f32 %v2636, %v3097
        %3099 = vmatprep.mubr.bf16.mxu0 0
        %3100 = vmatmul.mubr.bf16.gmra.mrb[0].mxu0 %v2667
        %v3101 = vpop.f32.mrb[0].mxu0
        %v3102 = vadd.f32 %v2641, %v3101
        %v3103 = vpop.f32.mrb[0].mxu0
        %v3104 = vadd.f32 %v2641, %v3103
        %v3105 = vpop.f32.mrb[0].mxu0
        %v3106 = vadd.f32 %v2646, %v3105
        %v3107 = vpop.f32.mrb[0].mxu0
        %v3108 = vadd.f32 %v2646, %v3107
        %3109 = vdwg.mxu0
        %3110 = vmatprep.subr.bf16.mxu0 %v2485
        %3111 = vmatpush1.bf16.msra.mxu0 %v2484
        %3112 = vmatprep.subr.bf16.mxu0 %v2501
        %3113 = vmatpush1.bf16.msra.mxu0 %v2500
        %3114 = vmatprep.subr.bf16.mxu0 %v2517
        %3115 = vmatpush1.bf16.msra.mxu0 %v2516
        %3116 = vmatprep.subr.bf16.mxu0 %v2533
        %3117 = vmatpush1.bf16.msra.mxu0 %v2532
        %3118 = vmatprep.subr.bf16.mxu0 %v2549
        %3119 = vmatpush1.bf16.msra.mxu0 %v2548
        %3120 = vmatprep.subr.bf16.mxu0 %v2565
        %3121 = vmatpush1.bf16.msra.mxu0 %v2564
        %3122 = vmatprep.subr.bf16.mxu0 %v2581
        %3123 = vmatpush1.bf16.msra.mxu0 %v2580
        %3124 = vmatprep.subr.bf16.mxu0 %v2597
        %3125 = vmatpush1.bf16.msra.mxu0 %v2596
        %3126 = vmatprep.subr.bf16.mxu0 0
        %3127 = vmatpush1.bf16.msra.mxu0 0
        %3128 = vmatprep.subr.bf16.mxu0 0
        %3129 = vmatpush1.bf16.msra.mxu0 0
        %3130 = vmatprep.subr.bf16.mxu0 0
        %3131 = vmatpush1.bf16.msra.mxu0 0
        %3132 = vmatprep.subr.bf16.mxu0 0
        %3133 = vmatpush1.bf16.msra.mxu0 0
        %3134 = vmatprep.subr.bf16.mxu0 0
        %3135 = vmatpush1.bf16.msra.mxu0 0
        %3136 = vmatprep.subr.bf16.mxu0 0
        %3137 = vmatpush1.bf16.msra.mxu0 0
        %3138 = vmatprep.subr.bf16.mxu0 0
        %3139 = vmatpush1.bf16.msra.mxu0 0
        %3140 = vmatprep.subr.bf16.mxu0 0
        %3141 = vmatpush1.bf16.msra.mxu0 0
        %3142 = vmatprep.mubr.bf16.mxu0 0
        %3143 = vmatmul.mubr.bf16.gmra.mrb[0].mxu0 %v2664
        %v3144 = vpop.f32.mrb[0].mxu0
        %v3145 = vadd.f32 %v2611, %v3144
        %v3146 = vpop.f32.mrb[0].mxu0
        %v3147 = vadd.f32 %v2611, %v3146
        %v3148 = vpop.f32.mrb[0].mxu0
        %v3149 = vadd.f32 %v2616, %v3148
        %v3150 = vpop.f32.mrb[0].mxu0
        %v3151 = vadd.f32 %v2616, %v3150
        %3152 = vmatprep.mubr.bf16.mxu0 0
        %3153 = vmatmul.mubr.bf16.gmra.mrb[0].mxu0 %v2665
        %v3154 = vpop.f32.mrb[0].mxu0
        %v3155 = vadd.f32 %v2621, %v3154
        %v3156 = vpop.f32.mrb[0].mxu0
        %v3157 = vadd.f32 %v2621, %v3156
        %v3158 = vpop.f32.mrb[0].mxu0
        %v3159 = vadd.f32 %v2626, %v3158
        %v3160 = vpop.f32.mrb[0].mxu0
        %v3161 = vadd.f32 %v2626, %v3160
        %3162 = vmatprep.mubr.bf16.mxu0 0
        %3163 = vmatmul.mubr.bf16.gmra.mrb[0].mxu0 %v2666
        %v3164 = vpop.f32.mrb[0].mxu0
        %v3165 = vadd.f32 %v2631, %v3164
        %v3166 = vpop.f32.mrb[0].mxu0
        %v3167 = vadd.f32 %v2631, %v3166
        %v3168 = vpop.f32.mrb[0].mxu0
        %v3169 = vadd.f32 %v2636, %v3168
        %v3170 = vpop.f32.mrb[0].mxu0
        %v3171 = vadd.f32 %v2636, %v3170
        %3172 = vmatprep.mubr.bf16.mxu0 0
        %3173 = vmatmul.mubr.bf16.gmra.mrb[0].mxu0 %v2667
        %v3174 = vpop.f32.mrb[0].mxu0
        %v3175 = vadd.f32 %v2641, %v3174
        %v3176 = vpop.f32.mrb[0].mxu0
        %v3177 = vadd.f32 %v2641, %v3176
        %v3178 = vpop.f32.mrb[0].mxu0
        %v3179 = vadd.f32 %v2646, %v3178
        %v3180 = vpop.f32.mrb[0].mxu0
        %v3181 = vadd.f32 %v2646, %v3180
        %3182 = vdwg.mxu0
        %3183 = vmatprep.subr.bf16.mxu0 %v2487
        %3184 = vmatpush1.bf16.msra.mxu0 %v2486
        %3185 = vmatprep.subr.bf16.mxu0 %v2503
        %3186 = vmatpush1.bf16.msra.mxu0 %v2502
        %3187 = vmatprep.subr.bf16.mxu0 %v2519
        %3188 = vmatpush1.bf16.msra.mxu0 %v2518
        %3189 = vmatprep.subr.bf16.mxu0 %v2535
        %3190 = vmatpush1.bf16.msra.mxu0 %v2534
        %3191 = vmatprep.subr.bf16.mxu0 %v2551
        %3192 = vmatpush1.bf16.msra.mxu0 %v2550
        %3193 = vmatprep.subr.bf16.mxu0 %v2567
        %3194 = vmatpush1.bf16.msra.mxu0 %v2566
        %3195 = vmatprep.subr.bf16.mxu0 %v2583
        %3196 = vmatpush1.bf16.msra.mxu0 %v2582
        %3197 = vmatprep.subr.bf16.mxu0 %v2599
        %3198 = vmatpush1.bf16.msra.mxu0 %v2598
        %3199 = vmatprep.subr.bf16.mxu0 0
        %3200 = vmatpush1.bf16.msra.mxu0 0
        %3201 = vmatprep.subr.bf16.mxu0 0
        %3202 = vmatpush1.bf16.msra.mxu0 0
        %3203 = vmatprep.subr.bf16.mxu0 0
        %3204 = vmatpush1.bf16.msra.mxu0 0
        %3205 = vmatprep.subr.bf16.mxu0 0
        %3206 = vmatpush1.bf16.msra.mxu0 0
        %3207 = vmatprep.subr.bf16.mxu0 0
        %3208 = vmatpush1.bf16.msra.mxu0 0
        %3209 = vmatprep.subr.bf16.mxu0 0
        %3210 = vmatpush1.bf16.msra.mxu0 0
        %3211 = vmatprep.subr.bf16.mxu0 0
        %3212 = vmatpush1.bf16.msra.mxu0 0
        %3213 = vmatprep.subr.bf16.mxu0 0
        %3214 = vmatpush1.bf16.msra.mxu0 0
        %3215 = vmatprep.mubr.bf16.mxu0 0
        %3216 = vmatmul.mubr.bf16.gmra.mrb[0].mxu0 %v2664
        %v3217 = vpop.f32.mrb[0].mxu0
        %v3218 = vadd.f32 %v2611, %v3217
        %v3219 = vpop.f32.mrb[0].mxu0
        %v3220 = vadd.f32 %v2611, %v3219
        %v3221 = vpop.f32.mrb[0].mxu0
        %v3222 = vadd.f32 %v2616, %v3221
        %v3223 = vpop.f32.mrb[0].mxu0
        %v3224 = vadd.f32 %v2616, %v3223
        %3225 = vmatprep.mubr.bf16.mxu0 0
        %3226 = vmatmul.mubr.bf16.gmra.mrb[0].mxu0 %v2665
        %v3227 = vpop.f32.mrb[0].mxu0
        %v3228 = vadd.f32 %v2621, %v3227
        %v3229 = vpop.f32.mrb[0].mxu0
        %v3230 = vadd.f32 %v2621, %v3229
        %v3231 = vpop.f32.mrb[0].mxu0
        %v3232 = vadd.f32 %v2626, %v3231
        %v3233 = vpop.f32.mrb[0].mxu0
        %v3234 = vadd.f32 %v2626, %v3233
        %3235 = vmatprep.mubr.bf16.mxu0 0
        %3236 = vmatmul.mubr.bf16.gmra.mrb[0].mxu0 %v2666
        %v3237 = vpop.f32.mrb[0].mxu0
        %v3238 = vadd.f32 %v2631, %v3237
        %v3239 = vpop.f32.mrb[0].mxu0
        %v3240 = vadd.f32 %v2631, %v3239
        %v3241 = vpop.f32.mrb[0].mxu0
        %v3242 = vadd.f32 %v2636, %v3241
        %v3243 = vpop.f32.mrb[0].mxu0
        %v3244 = vadd.f32 %v2636, %v3243
        %3245 = vmatprep.mubr.bf16.mxu0 0
        %3246 = vmatmul.mubr.bf16.gmra.mrb[0].mxu0 %v2667
        %v3247 = vpop.f32.mrb[0].mxu0
        %v3248 = vadd.f32 %v2641, %v3247
        %v3249 = vpop.f32.mrb[0].mxu0
        %v3250 = vadd.f32 %v2641, %v3249
        %v3251 = vpop.f32.mrb[0].mxu0
        %v3252 = vadd.f32 %v2646, %v3251
        %v3253 = vpop.f32.mrb[0].mxu0
        %v3254 = vadd.f32 %v2646, %v3253
        %3255 = vdwg.mxu0
        %v3256 = vmax.f32 %v2707, 0.0
        %v3257 = vmax.f32 %v2709, 0.0
        %v3258 = vmax.f32 %v2780, 0.0
        %v3259 = vmax.f32 %v2782, 0.0
        %v3260 = vmax.f32 %v2853, 0.0
        %v3261 = vmax.f32 %v2855, 0.0
        %v3262 = vmax.f32 %v2926, 0.0
        %v3263 = vmax.f32 %v2928, 0.0
        %v3264 = vmax.f32 %v2999, 0.0
        %v3265 = vmax.f32 %v3001, 0.0
        %v3266 = vmax.f32 %v3072, 0.0
        %v3267 = vmax.f32 %v3074, 0.0
        %v3268 = vmax.f32 %v3145, 0.0
        %v3269 = vmax.f32 %v3147, 0.0
        %v3270 = vmax.f32 %v3218, 0.0
        %v3271 = vmax.f32 %v3220, 0.0
        %v3272 = vmax.f32 %v2711, 0.0
        %v3273 = vmax.f32 %v2713, 0.0
        %v3274 = vmax.f32 %v2784, 0.0
        %v3275 = vmax.f32 %v2786, 0.0
        %v3276 = vmax.f32 %v2857, 0.0
        %v3277 = vmax.f32 %v2859, 0.0
        %v3278 = vmax.f32 %v2930, 0.0
        %v3279 = vmax.f32 %v2932, 0.0
        %v3280 = vmax.f32 %v3003, 0.0
        %v3281 = vmax.f32 %v3005, 0.0
        %v3282 = vmax.f32 %v3076, 0.0
        %v3283 = vmax.f32 %v3078, 0.0
        %v3284 = vmax.f32 %v3149, 0.0
        %v3285 = vmax.f32 %v3151, 0.0
        %v3286 = vmax.f32 %v3222, 0.0
        %v3287 = vmax.f32 %v3224, 0.0
        %v3288 = vmax.f32 %v2717, 0.0
        %v3289 = vmax.f32 %v2719, 0.0
        %v3290 = vmax.f32 %v2790, 0.0
        %v3291 = vmax.f32 %v2792, 0.0
        %v3292 = vmax.f32 %v2863, 0.0
        %v3293 = vmax.f32 %v2865, 0.0
        %v3294 = vmax.f32 %v2936, 0.0
        %v3295 = vmax.f32 %v2938, 0.0
        %v3296 = vmax.f32 %v3009, 0.0
        %v3297 = vmax.f32 %v3011, 0.0
        %v3298 = vmax.f32 %v3082, 0.0
        %v3299 = vmax.f32 %v3084, 0.0
        %v3300 = vmax.f32 %v3155, 0.0
        %v3301 = vmax.f32 %v3157, 0.0
        %v3302 = vmax.f32 %v3228, 0.0
        %v3303 = vmax.f32 %v3230, 0.0
        %v3304 = vmax.f32 %v2721, 0.0
        %v3305 = vmax.f32 %v2723, 0.0
        %v3306 = vmax.f32 %v2794, 0.0
        %v3307 = vmax.f32 %v2796, 0.0
        %v3308 = vmax.f32 %v2867, 0.0
        %v3309 = vmax.f32 %v2869, 0.0
        %v3310 = vmax.f32 %v2940, 0.0
        %v3311 = vmax.f32 %v2942, 0.0
        %v3312 = vmax.f32 %v3013, 0.0
        %v3313 = vmax.f32 %v3015, 0.0
        %v3314 = vmax.f32 %v3086, 0.0
        %v3315 = vmax.f32 %v3088, 0.0
        %v3316 = vmax.f32 %v3159, 0.0
        %v3317 = vmax.f32 %v3161, 0.0
        %v3318 = vmax.f32 %v3232, 0.0
        %v3319 = vmax.f32 %v3234, 0.0
        %v3320 = vmax.f32 %v2727, 0.0
        %v3321 = vmax.f32 %v2729, 0.0
        %v3322 = vmax.f32 %v2800, 0.0
        %v3323 = vmax.f32 %v2802, 0.0
        %v3324 = vmax.f32 %v2873, 0.0
        %v3325 = vmax.f32 %v2875, 0.0
        %v3326 = vmax.f32 %v2946, 0.0
        %v3327 = vmax.f32 %v2948, 0.0
        %v3328 = vmax.f32 %v3019, 0.0
        %v3329 = vmax.f32 %v3021, 0.0
        %v3330 = vmax.f32 %v3092, 0.0
        %v3331 = vmax.f32 %v3094, 0.0
        %v3332 = vmax.f32 %v3165, 0.0
        %v3333 = vmax.f32 %v3167, 0.0
        %v3334 = vmax.f32 %v3238, 0.0
        %v3335 = vmax.f32 %v3240, 0.0
        %v3336 = vmax.f32 %v2731, 0.0
        %v3337 = vmax.f32 %v2733, 0.0
        %v3338 = vmax.f32 %v2804, 0.0
        %v3339 = vmax.f32 %v2806, 0.0
        %v3340 = vmax.f32 %v2877, 0.0
        %v3341 = vmax.f32 %v2879, 0.0
        %v3342 = vmax.f32 %v2950, 0.0
        %v3343 = vmax.f32 %v2952, 0.0
        %v3344 = vmax.f32 %v3023, 0.0
        %v3345 = vmax.f32 %v3025, 0.0
        %v3346 = vmax.f32 %v3096, 0.0
        %v3347 = vmax.f32 %v3098, 0.0
        %v3348 = vmax.f32 %v3169, 0.0
        %v3349 = vmax.f32 %v3171, 0.0
        %v3350 = vmax.f32 %v3242, 0.0
        %v3351 = vmax.f32 %v3244, 0.0
        %v3352 = vmax.f32 %v2737, 0.0
        %v3353 = vmax.f32 %v2739, 0.0
        %v3354 = vmax.f32 %v2810, 0.0
        %v3355 = vmax.f32 %v2812, 0.0
        %v3356 = vmax.f32 %v2883, 0.0
        %v3357 = vmax.f32 %v2885, 0.0
        %v3358 = vmax.f32 %v2956, 0.0
        %v3359 = vmax.f32 %v2958, 0.0
        %v3360 = vmax.f32 %v3029, 0.0
        %v3361 = vmax.f32 %v3031, 0.0
        %v3362 = vmax.f32 %v3102, 0.0
        %v3363 = vmax.f32 %v3104, 0.0
        %v3364 = vmax.f32 %v3175, 0.0
        %v3365 = vmax.f32 %v3177, 0.0
        %v3366 = vmax.f32 %v3248, 0.0
        %v3367 = vmax.f32 %v3250, 0.0
        %v3368 = vmax.f32 %v2741, 0.0
        %v3369 = vmax.f32 %v2743, 0.0
        %v3370 = vmax.f32 %v2814, 0.0
        %v3371 = vmax.f32 %v2816, 0.0
        %v3372 = vmax.f32 %v2887, 0.0
        %v3373 = vmax.f32 %v2889, 0.0
        %v3374 = vmax.f32 %v2960, 0.0
        %v3375 = vmax.f32 %v2962, 0.0
        %v3376 = vmax.f32 %v3033, 0.0
        %v3377 = vmax.f32 %v3035, 0.0
        %v3378 = vmax.f32 %v3106, 0.0
        %v3379 = vmax.f32 %v3108, 0.0
        %v3380 = vmax.f32 %v3179, 0.0
        %v3381 = vmax.f32 %v3181, 0.0
        %v3382 = vmax.f32 %v3252, 0.0
        %v3383 = vmax.f32 %v3254, 0.0
        %v3384 = vld [vmem:[%s5] sm:$0xf]
        %v3385 = vld [vmem:[%s5 + $0x4] sm:$0xf]
        %v3386 = vld [vmem:[%s5 + $0x8] sm:$0xf]
        %v3387 = vld [vmem:[%s5 + $0xc] sm:$0xf]
        %v3388 = vpack.c.bf16 %v3272, %v3256
        %v3389 = vpack.c.bf16 %v3273, %v3257
        %v3390 = vpack.c.bf16 %v3274, %v3258
        %v3391 = vpack.c.bf16 %v3275, %v3259
        %v3392 = vpack.c.bf16 %v3276, %v3260
        %v3393 = vpack.c.bf16 %v3277, %v3261
        %v3394 = vpack.c.bf16 %v3278, %v3262
        %v3395 = vpack.c.bf16 %v3279, %v3263
        %v3396 = vpack.c.bf16 %v3280, %v3264
        %v3397 = vpack.c.bf16 %v3281, %v3265
        %v3398 = vpack.c.bf16 %v3282, %v3266
        %v3399 = vpack.c.bf16 %v3283, %v3267
        %v3400 = vpack.c.bf16 %v3284, %v3268
        %v3401 = vpack.c.bf16 %v3285, %v3269
        %v3402 = vpack.c.bf16 %v3286, %v3270
        %v3403 = vpack.c.bf16 %v3287, %v3271
        %v3404 = vpack.c.bf16 %v3304, %v3288
        %v3405 = vpack.c.bf16 %v3305, %v3289
        %v3406 = vpack.c.bf16 %v3306, %v3290
        %v3407 = vpack.c.bf16 %v3307, %v3291
        %v3408 = vpack.c.bf16 %v3308, %v3292
        %v3409 = vpack.c.bf16 %v3309, %v3293
        %v3410 = vpack.c.bf16 %v3310, %v3294
        %v3411 = vpack.c.bf16 %v3311, %v3295
        %v3412 = vpack.c.bf16 %v3312, %v3296
        %v3413 = vpack.c.bf16 %v3313, %v3297
        %v3414 = vpack.c.bf16 %v3314, %v3298
        %v3415 = vpack.c.bf16 %v3315, %v3299
        %v3416 = vpack.c.bf16 %v3316, %v3300
        %v3417 = vpack.c.bf16 %v3317, %v3301
        %v3418 = vpack.c.bf16 %v3318, %v3302
        %v3419 = vpack.c.bf16 %v3319, %v3303
        %v3420 = vpack.c.bf16 %v3336, %v3320
        %v3421 = vpack.c.bf16 %v3337, %v3321
        %v3422 = vpack.c.bf16 %v3338, %v3322
        %v3423 = vpack.c.bf16 %v3339, %v3323
        %v3424 = vpack.c.bf16 %v3340, %v3324
        %v3425 = vpack.c.bf16 %v3341, %v3325
        %v3426 = vpack.c.bf16 %v3342, %v3326
        %v3427 = vpack.c.bf16 %v3343, %v3327
        %v3428 = vpack.c.bf16 %v3344, %v3328
        %v3429 = vpack.c.bf16 %v3345, %v3329
        %v3430 = vpack.c.bf16 %v3346, %v3330
        %v3431 = vpack.c.bf16 %v3347, %v3331
        %v3432 = vpack.c.bf16 %v3348, %v3332
        %v3433 = vpack.c.bf16 %v3349, %v3333
        %v3434 = vpack.c.bf16 %v3350, %v3334
        %v3435 = vpack.c.bf16 %v3351, %v3335
        %v3436 = vpack.c.bf16 %v3368, %v3352
        %v3437 = vpack.c.bf16 %v3369, %v3353
        %v3438 = vpack.c.bf16 %v3370, %v3354
        %v3439 = vpack.c.bf16 %v3371, %v3355
        %v3440 = vpack.c.bf16 %v3372, %v3356
        %v3441 = vpack.c.bf16 %v3373, %v3357
        %v3442 = vpack.c.bf16 %v3374, %v3358
        %v3443 = vpack.c.bf16 %v3375, %v3359
        %v3444 = vpack.c.bf16 %v3376, %v3360
        %v3445 = vpack.c.bf16 %v3377, %v3361
        %v3446 = vpack.c.bf16 %v3378, %v3362
        %v3447 = vpack.c.bf16 %v3379, %v3363
        %v3448 = vpack.c.bf16 %v3380, %v3364
        %v3449 = vpack.c.bf16 %v3381, %v3365
        %v3450 = vpack.c.bf16 %v3382, %v3366
        %v3451 = vpack.c.bf16 %v3383, %v3367
        %v3452 = vld [vmem:[%s6] sm:$0xff]
        %v3453 = vld [vmem:[%s6 + $0x8] sm:$0xff]
        %v3454 = vld [vmem:[%s6 + $0x10] sm:$0xff]
        %v3455 = vld [vmem:[%s6 + $0x18] sm:$0xff]
        %3457 = vset.pattern.permute.xlu0 0
        %3458 = vperm.xlu0 %3457, %v3452
        %v3459 = vpop.permute.xlu0 %3458
        %3462 = vset.pattern.permute.xlu0 0
        %3463 = vperm.xlu0 %3462, %v3453
        %v3464 = vpop.permute.xlu0 %3463
        %3467 = vset.pattern.permute.xlu0 0
        %3468 = vperm.xlu0 %3467, %v3454
        %v3469 = vpop.permute.xlu0 %3468
        %3472 = vset.pattern.permute.xlu0 0
        %3473 = vperm.xlu0 %3472, %v3455
        %v3474 = vpop.permute.xlu0 %3473
        %v3480 = vunpack.c.l.b16 %v3384
        %v3481 = vunpack.c.l.b16 %v3385
        %v3482 = vunpack.c.l.b16 %v3386
        %v3483 = vunpack.c.l.b16 %v3387
        %v3484 = vpack.c.b16 %v3481, %v3480
        %v3485 = vpack.c.b16 %v3483, %v3482
        %vm3486 = vcmask 523264
        %v3488 = vsel %vm3486, %v3484, 0
        %v3491 = vsel %vm3486, %v3485, 0
        %3493 = vmatprep.subr.bf16.mxu0 %v3389
        %3494 = vmatpush1.bf16.msra.mxu0 %v3388
        %3495 = vmatprep.subr.bf16.mxu0 %v3405
        %3496 = vmatpush1.bf16.msra.mxu0 %v3404
        %3497 = vmatprep.subr.bf16.mxu0 %v3421
        %3498 = vmatpush1.bf16.msra.mxu0 %v3420
        %3499 = vmatprep.subr.bf16.mxu0 %v3437
        %3500 = vmatpush1.bf16.msra.mxu0 %v3436
        %3501 = vmatprep.subr.bf16.mxu0 0
        %3502 = vmatpush1.bf16.msra.mxu0 0
        %3503 = vmatprep.subr.bf16.mxu0 0
        %3504 = vmatpush1.bf16.msra.mxu0 0
        %3505 = vmatprep.subr.bf16.mxu0 0
        %3506 = vmatpush1.bf16.msra.mxu0 0
        %3507 = vmatprep.subr.bf16.mxu0 0
        %3508 = vmatpush1.bf16.msra.mxu0 0
        %3509 = vmatprep.subr.bf16.mxu0 0
        %3510 = vmatpush1.bf16.msra.mxu0 0
        %3511 = vmatprep.subr.bf16.mxu0 0
        %3512 = vmatpush1.bf16.msra.mxu0 0
        %3513 = vmatprep.subr.bf16.mxu0 0
        %3514 = vmatpush1.bf16.msra.mxu0 0
        %3515 = vmatprep.subr.bf16.mxu0 0
        %3516 = vmatpush1.bf16.msra.mxu0 0
        %3517 = vmatprep.subr.bf16.mxu0 0
        %3518 = vmatpush1.bf16.msra.mxu0 0
        %3519 = vmatprep.subr.bf16.mxu0 0
        %3520 = vmatpush1.bf16.msra.mxu0 0
        %3521 = vmatprep.subr.bf16.mxu0 0
        %3522 = vmatpush1.bf16.msra.mxu0 0
        %3523 = vmatprep.subr.bf16.mxu0 0
        %3524 = vmatpush1.bf16.msra.mxu0 0
        %3525 = vmatprep.mubr.bf16.mxu0 0
        %3526 = vmatmul.mubr.bf16.gmra.mrb[0].mxu0 %v3488
        %v3527 = vpop.f32.mrb[0].mxu0
        %v3528 = vadd.f32 %v3459, %v3527
        %v3529 = vpop.f32.mrb[0].mxu0
        %v3530 = vadd.f32 %v3459, %v3529
        %v3531 = vpop.f32.mrb[0].mxu0
        %v3532 = vadd.f32 %v3464, %v3531
        %v3533 = vpop.f32.mrb[0].mxu0
        %v3534 = vadd.f32 %v3464, %v3533
        %3535 = vmatprep.mubr.bf16.mxu0 0
        %3536 = vmatmul.mubr.bf16.gmra.mrb[0].mxu0 %v3491
        %v3537 = vpop.f32.mrb[0].mxu0
        %v3538 = vadd.f32 %v3469, %v3537
        %v3539 = vpop.f32.mrb[0].mxu0
        %v3540 = vadd.f32 %v3469, %v3539
        %v3541 = vpop.f32.mrb[0].mxu0
        %v3542 = vadd.f32 %v3474, %v3541
        %v3543 = vpop.f32.mrb[0].mxu0
        %v3544 = vadd.f32 %v3474, %v3543
        %3545 = vdwg.mxu0
        %3546 = vmatprep.subr.bf16.mxu0 %v3391
        %3547 = vmatpush1.bf16.msra.mxu0 %v3390
        %3548 = vmatprep.subr.bf16.mxu0 %v3407
        %3549 = vmatpush1.bf16.msra.mxu0 %v3406
        %3550 = vmatprep.subr.bf16.mxu0 %v3423
        %3551 = vmatpush1.bf16.msra.mxu0 %v3422
        %3552 = vmatprep.subr.bf16.mxu0 %v3439
        %3553 = vmatpush1.bf16.msra.mxu0 %v3438
        %3554 = vmatprep.subr.bf16.mxu0 0
        %3555 = vmatpush1.bf16.msra.mxu0 0
        %3556 = vmatprep.subr.bf16.mxu0 0
        %3557 = vmatpush1.bf16.msra.mxu0 0
        %3558 = vmatprep.subr.bf16.mxu0 0
        %3559 = vmatpush1.bf16.msra.mxu0 0
        %3560 = vmatprep.subr.bf16.mxu0 0
        %3561 = vmatpush1.bf16.msra.mxu0 0
        %3562 = vmatprep.subr.bf16.mxu0 0
        %3563 = vmatpush1.bf16.msra.mxu0 0
        %3564 = vmatprep.subr.bf16.mxu0 0
        %3565 = vmatpush1.bf16.msra.mxu0 0
        %3566 = vmatprep.subr.bf16.mxu0 0
        %3567 = vmatpush1.bf16.msra.mxu0 0
        %3568 = vmatprep.subr.bf16.mxu0 0
        %3569 = vmatpush1.bf16.msra.mxu0 0
        %3570 = vmatprep.subr.bf16.mxu0 0
        %3571 = vmatpush1.bf16.msra.mxu0 0
        %3572 = vmatprep.subr.bf16.mxu0 0
        %3573 = vmatpush1.bf16.msra.mxu0 0
        %3574 = vmatprep.subr.bf16.mxu0 0
        %3575 = vmatpush1.bf16.msra.mxu0 0
        %3576 = vmatprep.subr.bf16.mxu0 0
        %3577 = vmatpush1.bf16.msra.mxu0 0
        %3578 = vmatprep.mubr.bf16.mxu0 0
        %3579 = vmatmul.mubr.bf16.gmra.mrb[0].mxu0 %v3488
        %v3580 = vpop.f32.mrb[0].mxu0
        %v3581 = vadd.f32 %v3459, %v3580
        %v3582 = vpop.f32.mrb[0].mxu0
        %v3583 = vadd.f32 %v3459, %v3582
        %v3584 = vpop.f32.mrb[0].mxu0
        %v3585 = vadd.f32 %v3464, %v3584
        %v3586 = vpop.f32.mrb[0].mxu0
        %v3587 = vadd.f32 %v3464, %v3586
        %3588 = vmatprep.mubr.bf16.mxu0 0
        %3589 = vmatmul.mubr.bf16.gmra.mrb[0].mxu0 %v3491
        %v3590 = vpop.f32.mrb[0].mxu0
        %v3591 = vadd.f32 %v3469, %v3590
        %v3592 = vpop.f32.mrb[0].mxu0
        %v3593 = vadd.f32 %v3469, %v3592
        %v3594 = vpop.f32.mrb[0].mxu0
        %v3595 = vadd.f32 %v3474, %v3594
        %v3596 = vpop.f32.mrb[0].mxu0
        %v3597 = vadd.f32 %v3474, %v3596
        %3598 = vdwg.mxu0
        %3599 = vmatprep.subr.bf16.mxu0 %v3393
        %3600 = vmatpush1.bf16.msra.mxu0 %v3392
        %3601 = vmatprep.subr.bf16.mxu0 %v3409
        %3602 = vmatpush1.bf16.msra.mxu0 %v3408
        %3603 = vmatprep.subr.bf16.mxu0 %v3425
        %3604 = vmatpush1.bf16.msra.mxu0 %v3424
        %3605 = vmatprep.subr.bf16.mxu0 %v3441
        %3606 = vmatpush1.bf16.msra.mxu0 %v3440
        %3607 = vmatprep.subr.bf16.mxu0 0
        %3608 = vmatpush1.bf16.msra.mxu0 0
        %3609 = vmatprep.subr.bf16.mxu0 0
        %3610 = vmatpush1.bf16.msra.mxu0 0
        %3611 = vmatprep.subr.bf16.mxu0 0
        %3612 = vmatpush1.bf16.msra.mxu0 0
        %3613 = vmatprep.subr.bf16.mxu0 0
        %3614 = vmatpush1.bf16.msra.mxu0 0
        %3615 = vmatprep.subr.bf16.mxu0 0
        %3616 = vmatpush1.bf16.msra.mxu0 0
        %3617 = vmatprep.subr.bf16.mxu0 0
        %3618 = vmatpush1.bf16.msra.mxu0 0
        %3619 = vmatprep.subr.bf16.mxu0 0
        %3620 = vmatpush1.bf16.msra.mxu0 0
        %3621 = vmatprep.subr.bf16.mxu0 0
        %3622 = vmatpush1.bf16.msra.mxu0 0
        %3623 = vmatprep.subr.bf16.mxu0 0
        %3624 = vmatpush1.bf16.msra.mxu0 0
        %3625 = vmatprep.subr.bf16.mxu0 0
        %3626 = vmatpush1.bf16.msra.mxu0 0
        %3627 = vmatprep.subr.bf16.mxu0 0
        %3628 = vmatpush1.bf16.msra.mxu0 0
        %3629 = vmatprep.subr.bf16.mxu0 0
        %3630 = vmatpush1.bf16.msra.mxu0 0
        %3631 = vmatprep.mubr.bf16.mxu0 0
        %3632 = vmatmul.mubr.bf16.gmra.mrb[0].mxu0 %v3488
        %v3633 = vpop.f32.mrb[0].mxu0
        %v3634 = vadd.f32 %v3459, %v3633
        %v3635 = vpop.f32.mrb[0].mxu0
        %v3636 = vadd.f32 %v3459, %v3635
        %v3637 = vpop.f32.mrb[0].mxu0
        %v3638 = vadd.f32 %v3464, %v3637
        %v3639 = vpop.f32.mrb[0].mxu0
        %v3640 = vadd.f32 %v3464, %v3639
        %3641 = vmatprep.mubr.bf16.mxu0 0
        %3642 = vmatmul.mubr.bf16.gmra.mrb[0].mxu0 %v3491
        %v3643 = vpop.f32.mrb[0].mxu0
        %v3644 = vadd.f32 %v3469, %v3643
        %v3645 = vpop.f32.mrb[0].mxu0
        %v3646 = vadd.f32 %v3469, %v3645
        %v3647 = vpop.f32.mrb[0].mxu0
        %v3648 = vadd.f32 %v3474, %v3647
        %v3649 = vpop.f32.mrb[0].mxu0
        %v3650 = vadd.f32 %v3474, %v3649
        %3651 = vdwg.mxu0
        %3652 = vmatprep.subr.bf16.mxu0 %v3395
        %3653 = vmatpush1.bf16.msra.mxu0 %v3394
        %3654 = vmatprep.subr.bf16.mxu0 %v3411
        %3655 = vmatpush1.bf16.msra.mxu0 %v3410
        %3656 = vmatprep.subr.bf16.mxu0 %v3427
        %3657 = vmatpush1.bf16.msra.mxu0 %v3426
        %3658 = vmatprep.subr.bf16.mxu0 %v3443
        %3659 = vmatpush1.bf16.msra.mxu0 %v3442
        %3660 = vmatprep.subr.bf16.mxu0 0
        %3661 = vmatpush1.bf16.msra.mxu0 0
        %3662 = vmatprep.subr.bf16.mxu0 0
        %3663 = vmatpush1.bf16.msra.mxu0 0
        %3664 = vmatprep.subr.bf16.mxu0 0
        %3665 = vmatpush1.bf16.msra.mxu0 0
        %3666 = vmatprep.subr.bf16.mxu0 0
        %3667 = vmatpush1.bf16.msra.mxu0 0
        %3668 = vmatprep.subr.bf16.mxu0 0
        %3669 = vmatpush1.bf16.msra.mxu0 0
        %3670 = vmatprep.subr.bf16.mxu0 0
        %3671 = vmatpush1.bf16.msra.mxu0 0
        %3672 = vmatprep.subr.bf16.mxu0 0
        %3673 = vmatpush1.bf16.msra.mxu0 0
        %3674 = vmatprep.subr.bf16.mxu0 0
        %3675 = vmatpush1.bf16.msra.mxu0 0
        %3676 = vmatprep.subr.bf16.mxu0 0
        %3677 = vmatpush1.bf16.msra.mxu0 0
        %3678 = vmatprep.subr.bf16.mxu0 0
        %3679 = vmatpush1.bf16.msra.mxu0 0
        %3680 = vmatprep.subr.bf16.mxu0 0
        %3681 = vmatpush1.bf16.msra.mxu0 0
        %3682 = vmatprep.subr.bf16.mxu0 0
        %3683 = vmatpush1.bf16.msra.mxu0 0
        %3684 = vmatprep.mubr.bf16.mxu0 0
        %3685 = vmatmul.mubr.bf16.gmra.mrb[0].mxu0 %v3488
        %v3686 = vpop.f32.mrb[0].mxu0
        %v3687 = vadd.f32 %v3459, %v3686
        %v3688 = vpop.f32.mrb[0].mxu0
        %v3689 = vadd.f32 %v3459, %v3688
        %v3690 = vpop.f32.mrb[0].mxu0
        %v3691 = vadd.f32 %v3464, %v3690
        %v3692 = vpop.f32.mrb[0].mxu0
        %v3693 = vadd.f32 %v3464, %v3692
        %3694 = vmatprep.mubr.bf16.mxu0 0
        %3695 = vmatmul.mubr.bf16.gmra.mrb[0].mxu0 %v3491
        %v3696 = vpop.f32.mrb[0].mxu0
        %v3697 = vadd.f32 %v3469, %v3696
        %v3698 = vpop.f32.mrb[0].mxu0
        %v3699 = vadd.f32 %v3469, %v3698
        %v3700 = vpop.f32.mrb[0].mxu0
        %v3701 = vadd.f32 %v3474, %v3700
        %v3702 = vpop.f32.mrb[0].mxu0
        %v3703 = vadd.f32 %v3474, %v3702
        %3704 = vdwg.mxu0
        %3705 = vmatprep.subr.bf16.mxu0 %v3397
        %3706 = vmatpush1.bf16.msra.mxu0 %v3396
        %3707 = vmatprep.subr.bf16.mxu0 %v3413
        %3708 = vmatpush1.bf16.msra.mxu0 %v3412
        %3709 = vmatprep.subr.bf16.mxu0 %v3429
        %3710 = vmatpush1.bf16.msra.mxu0 %v3428
        %3711 = vmatprep.subr.bf16.mxu0 %v3445
        %3712 = vmatpush1.bf16.msra.mxu0 %v3444
        %3713 = vmatprep.subr.bf16.mxu0 0
        %3714 = vmatpush1.bf16.msra.mxu0 0
        %3715 = vmatprep.subr.bf16.mxu0 0
        %3716 = vmatpush1.bf16.msra.mxu0 0
        %3717 = vmatprep.subr.bf16.mxu0 0
        %3718 = vmatpush1.bf16.msra.mxu0 0
        %3719 = vmatprep.subr.bf16.mxu0 0
        %3720 = vmatpush1.bf16.msra.mxu0 0
        %3721 = vmatprep.subr.bf16.mxu0 0
        %3722 = vmatpush1.bf16.msra.mxu0 0
        %3723 = vmatprep.subr.bf16.mxu0 0
        %3724 = vmatpush1.bf16.msra.mxu0 0
        %3725 = vmatprep.subr.bf16.mxu0 0
        %3726 = vmatpush1.bf16.msra.mxu0 0
        %3727 = vmatprep.subr.bf16.mxu0 0
        %3728 = vmatpush1.bf16.msra.mxu0 0
        %3729 = vmatprep.subr.bf16.mxu0 0
        %3730 = vmatpush1.bf16.msra.mxu0 0
        %3731 = vmatprep.subr.bf16.mxu0 0
        %3732 = vmatpush1.bf16.msra.mxu0 0
        %3733 = vmatprep.subr.bf16.mxu0 0
        %3734 = vmatpush1.bf16.msra.mxu0 0
        %3735 = vmatprep.subr.bf16.mxu0 0
        %3736 = vmatpush1.bf16.msra.mxu0 0
        %3737 = vmatprep.mubr.bf16.mxu0 0
        %3738 = vmatmul.mubr.bf16.gmra.mrb[0].mxu0 %v3488
        %v3739 = vpop.f32.mrb[0].mxu0
        %v3740 = vadd.f32 %v3459, %v3739
        %v3741 = vpop.f32.mrb[0].mxu0
        %v3742 = vadd.f32 %v3459, %v3741
        %v3743 = vpop.f32.mrb[0].mxu0
        %v3744 = vadd.f32 %v3464, %v3743
        %v3745 = vpop.f32.mrb[0].mxu0
        %v3746 = vadd.f32 %v3464, %v3745
        %3747 = vmatprep.mubr.bf16.mxu0 0
        %3748 = vmatmul.mubr.bf16.gmra.mrb[0].mxu0 %v3491
        %v3749 = vpop.f32.mrb[0].mxu0
        %v3750 = vadd.f32 %v3469, %v3749
        %v3751 = vpop.f32.mrb[0].mxu0
        %v3752 = vadd.f32 %v3469, %v3751
        %v3753 = vpop.f32.mrb[0].mxu0
        %v3754 = vadd.f32 %v3474, %v3753
        %v3755 = vpop.f32.mrb[0].mxu0
        %v3756 = vadd.f32 %v3474, %v3755
        %3757 = vdwg.mxu0
        %3758 = vmatprep.subr.bf16.mxu0 %v3399
        %3759 = vmatpush1.bf16.msra.mxu0 %v3398
        %3760 = vmatprep.subr.bf16.mxu0 %v3415
        %3761 = vmatpush1.bf16.msra.mxu0 %v3414
        %3762 = vmatprep.subr.bf16.mxu0 %v3431
        %3763 = vmatpush1.bf16.msra.mxu0 %v3430
        %3764 = vmatprep.subr.bf16.mxu0 %v3447
        %3765 = vmatpush1.bf16.msra.mxu0 %v3446
        %3766 = vmatprep.subr.bf16.mxu0 0
        %3767 = vmatpush1.bf16.msra.mxu0 0
        %3768 = vmatprep.subr.bf16.mxu0 0
        %3769 = vmatpush1.bf16.msra.mxu0 0
        %3770 = vmatprep.subr.bf16.mxu0 0
        %3771 = vmatpush1.bf16.msra.mxu0 0
        %3772 = vmatprep.subr.bf16.mxu0 0
        %3773 = vmatpush1.bf16.msra.mxu0 0
        %3774 = vmatprep.subr.bf16.mxu0 0
        %3775 = vmatpush1.bf16.msra.mxu0 0
        %3776 = vmatprep.subr.bf16.mxu0 0
        %3777 = vmatpush1.bf16.msra.mxu0 0
        %3778 = vmatprep.subr.bf16.mxu0 0
        %3779 = vmatpush1.bf16.msra.mxu0 0
        %3780 = vmatprep.subr.bf16.mxu0 0
        %3781 = vmatpush1.bf16.msra.mxu0 0
        %3782 = vmatprep.subr.bf16.mxu0 0
        %3783 = vmatpush1.bf16.msra.mxu0 0
        %3784 = vmatprep.subr.bf16.mxu0 0
        %3785 = vmatpush1.bf16.msra.mxu0 0
        %3786 = vmatprep.subr.bf16.mxu0 0
        %3787 = vmatpush1.bf16.msra.mxu0 0
        %3788 = vmatprep.subr.bf16.mxu0 0
        %3789 = vmatpush1.bf16.msra.mxu0 0
        %3790 = vmatprep.mubr.bf16.mxu0 0
        %3791 = vmatmul.mubr.bf16.gmra.mrb[0].mxu0 %v3488
        %v3792 = vpop.f32.mrb[0].mxu0
        %v3793 = vadd.f32 %v3459, %v3792
        %v3794 = vpop.f32.mrb[0].mxu0
        %v3795 = vadd.f32 %v3459, %v3794
        %v3796 = vpop.f32.mrb[0].mxu0
        %v3797 = vadd.f32 %v3464, %v3796
        %v3798 = vpop.f32.mrb[0].mxu0
        %v3799 = vadd.f32 %v3464, %v3798
        %3800 = vmatprep.mubr.bf16.mxu0 0
        %3801 = vmatmul.mubr.bf16.gmra.mrb[0].mxu0 %v3491
        %v3802 = vpop.f32.mrb[0].mxu0
        %v3803 = vadd.f32 %v3469, %v3802
        %v3804 = vpop.f32.mrb[0].mxu0
        %v3805 = vadd.f32 %v3469, %v3804
        %v3806 = vpop.f32.mrb[0].mxu0
        %v3807 = vadd.f32 %v3474, %v3806
        %v3808 = vpop.f32.mrb[0].mxu0
        %v3809 = vadd.f32 %v3474, %v3808
        %3810 = vdwg.mxu0
        %3811 = vmatprep.subr.bf16.mxu0 %v3401
        %3812 = vmatpush1.bf16.msra.mxu0 %v3400
        %3813 = vmatprep.subr.bf16.mxu0 %v3417
        %3814 = vmatpush1.bf16.msra.mxu0 %v3416
        %3815 = vmatprep.subr.bf16.mxu0 %v3433
        %3816 = vmatpush1.bf16.msra.mxu0 %v3432
        %3817 = vmatprep.subr.bf16.mxu0 %v3449
        %3818 = vmatpush1.bf16.msra.mxu0 %v3448
        %3819 = vmatprep.subr.bf16.mxu0 0
        %3820 = vmatpush1.bf16.msra.mxu0 0
        %3821 = vmatprep.subr.bf16.mxu0 0
        %3822 = vmatpush1.bf16.msra.mxu0 0
        %3823 = vmatprep.subr.bf16.mxu0 0
        %3824 = vmatpush1.bf16.msra.mxu0 0
        %3825 = vmatprep.subr.bf16.mxu0 0
        %3826 = vmatpush1.bf16.msra.mxu0 0
        %3827 = vmatprep.subr.bf16.mxu0 0
        %3828 = vmatpush1.bf16.msra.mxu0 0
        %3829 = vmatprep.subr.bf16.mxu0 0
        %3830 = vmatpush1.bf16.msra.mxu0 0
        %3831 = vmatprep.subr.bf16.mxu0 0
        %3832 = vmatpush1.bf16.msra.mxu0 0
        %3833 = vmatprep.subr.bf16.mxu0 0
        %3834 = vmatpush1.bf16.msra.mxu0 0
        %3835 = vmatprep.subr.bf16.mxu0 0
        %3836 = vmatpush1.bf16.msra.mxu0 0
        %3837 = vmatprep.subr.bf16.mxu0 0
        %3838 = vmatpush1.bf16.msra.mxu0 0
        %3839 = vmatprep.subr.bf16.mxu0 0
        %3840 = vmatpush1.bf16.msra.mxu0 0
        %3841 = vmatprep.subr.bf16.mxu0 0
        %3842 = vmatpush1.bf16.msra.mxu0 0
        %3843 = vmatprep.mubr.bf16.mxu0 0
        %3844 = vmatmul.mubr.bf16.gmra.mrb[0].mxu0 %v3488
        %v3845 = vpop.f32.mrb[0].mxu0
        %v3846 = vadd.f32 %v3459, %v3845
        %v3847 = vpop.f32.mrb[0].mxu0
        %v3848 = vadd.f32 %v3459, %v3847
        %v3849 = vpop.f32.mrb[0].mxu0
        %v3850 = vadd.f32 %v3464, %v3849
        %v3851 = vpop.f32.mrb[0].mxu0
        %v3852 = vadd.f32 %v3464, %v3851
        %3853 = vmatprep.mubr.bf16.mxu0 0
        %3854 = vmatmul.mubr.bf16.gmra.mrb[0].mxu0 %v3491
        %v3855 = vpop.f32.mrb[0].mxu0
        %v3856 = vadd.f32 %v3469, %v3855
        %v3857 = vpop.f32.mrb[0].mxu0
        %v3858 = vadd.f32 %v3469, %v3857
        %v3859 = vpop.f32.mrb[0].mxu0
        %v3860 = vadd.f32 %v3474, %v3859
        %v3861 = vpop.f32.mrb[0].mxu0
        %v3862 = vadd.f32 %v3474, %v3861
        %3863 = vdwg.mxu0
        %3864 = vmatprep.subr.bf16.mxu0 %v3403
        %3865 = vmatpush1.bf16.msra.mxu0 %v3402
        %3866 = vmatprep.subr.bf16.mxu0 %v3419
        %3867 = vmatpush1.bf16.msra.mxu0 %v3418
        %3868 = vmatprep.subr.bf16.mxu0 %v3435
        %3869 = vmatpush1.bf16.msra.mxu0 %v3434
        %3870 = vmatprep.subr.bf16.mxu0 %v3451
        %3871 = vmatpush1.bf16.msra.mxu0 %v3450
        %3872 = vmatprep.subr.bf16.mxu0 0
        %3873 = vmatpush1.bf16.msra.mxu0 0
        %3874 = vmatprep.subr.bf16.mxu0 0
        %3875 = vmatpush1.bf16.msra.mxu0 0
        %3876 = vmatprep.subr.bf16.mxu0 0
        %3877 = vmatpush1.bf16.msra.mxu0 0
        %3878 = vmatprep.subr.bf16.mxu0 0
        %3879 = vmatpush1.bf16.msra.mxu0 0
        %3880 = vmatprep.subr.bf16.mxu0 0
        %3881 = vmatpush1.bf16.msra.mxu0 0
        %3882 = vmatprep.subr.bf16.mxu0 0
        %3883 = vmatpush1.bf16.msra.mxu0 0
        %3884 = vmatprep.subr.bf16.mxu0 0
        %3885 = vmatpush1.bf16.msra.mxu0 0
        %3886 = vmatprep.subr.bf16.mxu0 0
        %3887 = vmatpush1.bf16.msra.mxu0 0
        %3888 = vmatprep.subr.bf16.mxu0 0
        %3889 = vmatpush1.bf16.msra.mxu0 0
        %3890 = vmatprep.subr.bf16.mxu0 0
        %3891 = vmatpush1.bf16.msra.mxu0 0
        %3892 = vmatprep.subr.bf16.mxu0 0
        %3893 = vmatpush1.bf16.msra.mxu0 0
        %3894 = vmatprep.subr.bf16.mxu0 0
        %3895 = vmatpush1.bf16.msra.mxu0 0
        %3896 = vmatprep.mubr.bf16.mxu0 0
        %3897 = vmatmul.mubr.bf16.gmra.mrb[0].mxu0 %v3488
        %v3898 = vpop.f32.mrb[0].mxu0
        %v3899 = vadd.f32 %v3459, %v3898
        %v3900 = vpop.f32.mrb[0].mxu0
        %v3901 = vadd.f32 %v3459, %v3900
        %v3902 = vpop.f32.mrb[0].mxu0
        %v3903 = vadd.f32 %v3464, %v3902
        %v3904 = vpop.f32.mrb[0].mxu0
        %v3905 = vadd.f32 %v3464, %v3904
        %3906 = vmatprep.mubr.bf16.mxu0 0
        %3907 = vmatmul.mubr.bf16.gmra.mrb[0].mxu0 %v3491
        %v3908 = vpop.f32.mrb[0].mxu0
        %v3909 = vadd.f32 %v3469, %v3908
        %v3910 = vpop.f32.mrb[0].mxu0
        %v3911 = vadd.f32 %v3469, %v3910
        %v3912 = vpop.f32.mrb[0].mxu0
        %v3913 = vadd.f32 %v3474, %v3912
        %v3914 = vpop.f32.mrb[0].mxu0
        %v3915 = vadd.f32 %v3474, %v3914
        %3916 = vdwg.mxu0
        %v3917 = vmax.f32 %v3528, 0.0
        %v3918 = vmax.f32 %v3530, 0.0
        %v3919 = vmax.f32 %v3581, 0.0
        %v3920 = vmax.f32 %v3583, 0.0
        %v3921 = vmax.f32 %v3634, 0.0
        %v3922 = vmax.f32 %v3636, 0.0
        %v3923 = vmax.f32 %v3687, 0.0
        %v3924 = vmax.f32 %v3689, 0.0
        %v3925 = vmax.f32 %v3740, 0.0
        %v3926 = vmax.f32 %v3742, 0.0
        %v3927 = vmax.f32 %v3793, 0.0
        %v3928 = vmax.f32 %v3795, 0.0
        %v3929 = vmax.f32 %v3846, 0.0
        %v3930 = vmax.f32 %v3848, 0.0
        %v3931 = vmax.f32 %v3899, 0.0
        %v3932 = vmax.f32 %v3901, 0.0
        %v3933 = vmax.f32 %v3532, 0.0
        %v3934 = vmax.f32 %v3534, 0.0
        %v3935 = vmax.f32 %v3585, 0.0
        %v3936 = vmax.f32 %v3587, 0.0
        %v3937 = vmax.f32 %v3638, 0.0
        %v3938 = vmax.f32 %v3640, 0.0
        %v3939 = vmax.f32 %v3691, 0.0
        %v3940 = vmax.f32 %v3693, 0.0
        %v3941 = vmax.f32 %v3744, 0.0
        %v3942 = vmax.f32 %v3746, 0.0
        %v3943 = vmax.f32 %v3797, 0.0
        %v3944 = vmax.f32 %v3799, 0.0
        %v3945 = vmax.f32 %v3850, 0.0
        %v3946 = vmax.f32 %v3852, 0.0
        %v3947 = vmax.f32 %v3903, 0.0
        %v3948 = vmax.f32 %v3905, 0.0
        %v3949 = vmax.f32 %v3538, 0.0
        %v3950 = vmax.f32 %v3540, 0.0
        %v3951 = vmax.f32 %v3591, 0.0
        %v3952 = vmax.f32 %v3593, 0.0
        %v3953 = vmax.f32 %v3644, 0.0
        %v3954 = vmax.f32 %v3646, 0.0
        %v3955 = vmax.f32 %v3697, 0.0
        %v3956 = vmax.f32 %v3699, 0.0
        %v3957 = vmax.f32 %v3750, 0.0
        %v3958 = vmax.f32 %v3752, 0.0
        %v3959 = vmax.f32 %v3803, 0.0
        %v3960 = vmax.f32 %v3805, 0.0
        %v3961 = vmax.f32 %v3856, 0.0
        %v3962 = vmax.f32 %v3858, 0.0
        %v3963 = vmax.f32 %v3909, 0.0
        %v3964 = vmax.f32 %v3911, 0.0
        %v3965 = vmax.f32 %v3542, 0.0
        %v3966 = vmax.f32 %v3544, 0.0
        %v3967 = vmax.f32 %v3595, 0.0
        %v3968 = vmax.f32 %v3597, 0.0
        %v3969 = vmax.f32 %v3648, 0.0
        %v3970 = vmax.f32 %v3650, 0.0
        %v3971 = vmax.f32 %v3701, 0.0
        %v3972 = vmax.f32 %v3703, 0.0
        %v3973 = vmax.f32 %v3754, 0.0
        %v3974 = vmax.f32 %v3756, 0.0
        %v3975 = vmax.f32 %v3807, 0.0
        %v3976 = vmax.f32 %v3809, 0.0
        %v3977 = vmax.f32 %v3860, 0.0
        %v3978 = vmax.f32 %v3862, 0.0
        %v3979 = vmax.f32 %v3913, 0.0
        %v3980 = vmax.f32 %v3915, 0.0
        %v3981 = vld [vmem:[%s7] sm:$0x1]
        %v3982 = vpack.c.bf16 %v3933, %v3917
        %v3983 = vpack.c.bf16 %v3934, %v3918
        %v3984 = vpack.c.bf16 %v3935, %v3919
        %v3985 = vpack.c.bf16 %v3936, %v3920
        %v3986 = vpack.c.bf16 %v3937, %v3921
        %v3987 = vpack.c.bf16 %v3938, %v3922
        %v3988 = vpack.c.bf16 %v3939, %v3923
        %v3989 = vpack.c.bf16 %v3940, %v3924
        %v3990 = vpack.c.bf16 %v3941, %v3925
        %v3991 = vpack.c.bf16 %v3942, %v3926
        %v3992 = vpack.c.bf16 %v3943, %v3927
        %v3993 = vpack.c.bf16 %v3944, %v3928
        %v3994 = vpack.c.bf16 %v3945, %v3929
        %v3995 = vpack.c.bf16 %v3946, %v3930
        %v3996 = vpack.c.bf16 %v3947, %v3931
        %v3997 = vpack.c.bf16 %v3948, %v3932
        %v3998 = vpack.c.bf16 %v3965, %v3949
        %v3999 = vpack.c.bf16 %v3966, %v3950
        %v4000 = vpack.c.bf16 %v3967, %v3951
        %v4001 = vpack.c.bf16 %v3968, %v3952
        %v4002 = vpack.c.bf16 %v3969, %v3953
        %v4003 = vpack.c.bf16 %v3970, %v3954
        %v4004 = vpack.c.bf16 %v3971, %v3955
        %v4005 = vpack.c.bf16 %v3972, %v3956
        %v4006 = vpack.c.bf16 %v3973, %v3957
        %v4007 = vpack.c.bf16 %v3974, %v3958
        %v4008 = vpack.c.bf16 %v3975, %v3959
        %v4009 = vpack.c.bf16 %v3976, %v3960
        %v4010 = vpack.c.bf16 %v3977, %v3961
        %v4011 = vpack.c.bf16 %v3978, %v3962
        %v4012 = vpack.c.bf16 %v3979, %v3963
        %v4013 = vpack.c.bf16 %v3980, %v3964
        %v4014 = vld [vmem:[%s8] sm:$0x3]
        %4016 = vset.pattern.permute.xlu0 0
        %4017 = vperm.xlu0 %4016, %v4014
        %v4018 = vpop.permute.xlu0 %4017
        %vm4020 = vcmask 261120
        %v4022 = vsel %vm4020, %v3981, 0
        %4024 = vmatprep.subr.bf16.mxu0 %v3983
        %4025 = vmatpush1.bf16.msra.mxu0 %v3982
        %4026 = vmatprep.subr.bf16.mxu0 %v3999
        %4027 = vmatpush1.bf16.msra.mxu0 %v3998
        %4028 = vmatprep.subr.bf16.mxu0 0
        %4029 = vmatpush1.bf16.msra.mxu0 0
        %4030 = vmatprep.subr.bf16.mxu0 0
        %4031 = vmatpush1.bf16.msra.mxu0 0
        %4032 = vmatprep.subr.bf16.mxu0 0
        %4033 = vmatpush1.bf16.msra.mxu0 0
        %4034 = vmatprep.subr.bf16.mxu0 0
        %4035 = vmatpush1.bf16.msra.mxu0 0
        %4036 = vmatprep.subr.bf16.mxu0 0
        %4037 = vmatpush1.bf16.msra.mxu0 0
        %4038 = vmatprep.subr.bf16.mxu0 0
        %4039 = vmatpush1.bf16.msra.mxu0 0
        %4040 = vmatprep.subr.bf16.mxu0 0
        %4041 = vmatpush1.bf16.msra.mxu0 0
        %4042 = vmatprep.subr.bf16.mxu0 0
        %4043 = vmatpush1.bf16.msra.mxu0 0
        %4044 = vmatprep.subr.bf16.mxu0 0
        %4045 = vmatpush1.bf16.msra.mxu0 0
        %4046 = vmatprep.subr.bf16.mxu0 0
        %4047 = vmatpush1.bf16.msra.mxu0 0
        %4048 = vmatprep.subr.bf16.mxu0 0
        %4049 = vmatpush1.bf16.msra.mxu0 0
        %4050 = vmatprep.subr.bf16.mxu0 0
        %4051 = vmatpush1.bf16.msra.mxu0 0
        %4052 = vmatprep.subr.bf16.mxu0 0
        %4053 = vmatpush1.bf16.msra.mxu0 0
        %4054 = vmatprep.subr.bf16.mxu0 0
        %4055 = vmatpush1.bf16.msra.mxu0 0
        %4056 = vmatprep.mubr.bf16.mxu0 0
        %4057 = vmatmul.mubr.bf16.gmra.mrb[0].mxu0 %v4022
        %v4058 = vpop.f32.mrb[0].mxu0
        %v4059 = vadd.f32 %v4018, %v4058
        %v4060 = vpop.f32.mrb[0].mxu0
        %v4061 = vadd.f32 %v4018, %v4060
        %v4062 = vpop.f32.mrb[0].mxu0
        %v4063 = vpop.f32.mrb[0].mxu0
        %4064 = vdwg.mxu0
        %4065 = vmatprep.subr.bf16.mxu0 %v3985
        %4066 = vmatpush1.bf16.msra.mxu0 %v3984
        %4067 = vmatprep.subr.bf16.mxu0 %v4001
        %4068 = vmatpush1.bf16.msra.mxu0 %v4000
        %4069 = vmatprep.subr.bf16.mxu0 0
        %4070 = vmatpush1.bf16.msra.mxu0 0
        %4071 = vmatprep.subr.bf16.mxu0 0
        %4072 = vmatpush1.bf16.msra.mxu0 0
        %4073 = vmatprep.subr.bf16.mxu0 0
        %4074 = vmatpush1.bf16.msra.mxu0 0
        %4075 = vmatprep.subr.bf16.mxu0 0
        %4076 = vmatpush1.bf16.msra.mxu0 0
        %4077 = vmatprep.subr.bf16.mxu0 0
        %4078 = vmatpush1.bf16.msra.mxu0 0
        %4079 = vmatprep.subr.bf16.mxu0 0
        %4080 = vmatpush1.bf16.msra.mxu0 0
        %4081 = vmatprep.subr.bf16.mxu0 0
        %4082 = vmatpush1.bf16.msra.mxu0 0
        %4083 = vmatprep.subr.bf16.mxu0 0
        %4084 = vmatpush1.bf16.msra.mxu0 0
        %4085 = vmatprep.subr.bf16.mxu0 0
        %4086 = vmatpush1.bf16.msra.mxu0 0
        %4087 = vmatprep.subr.bf16.mxu0 0
        %4088 = vmatpush1.bf16.msra.mxu0 0
        %4089 = vmatprep.subr.bf16.mxu0 0
        %4090 = vmatpush1.bf16.msra.mxu0 0
        %4091 = vmatprep.subr.bf16.mxu0 0
        %4092 = vmatpush1.bf16.msra.mxu0 0
        %4093 = vmatprep.subr.bf16.mxu0 0
        %4094 = vmatpush1.bf16.msra.mxu0 0
        %4095 = vmatprep.subr.bf16.mxu0 0
        %4096 = vmatpush1.bf16.msra.mxu0 0
        %4097 = vmatprep.mubr.bf16.mxu0 0
        %4098 = vmatmul.mubr.bf16.gmra.mrb[0].mxu0 %v4022
        %v4099 = vpop.f32.mrb[0].mxu0
        %v4100 = vadd.f32 %v4018, %v4099
        %v4101 = vpop.f32.mrb[0].mxu0
        %v4102 = vadd.f32 %v4018, %v4101
        %v4103 = vpop.f32.mrb[0].mxu0
        %v4104 = vpop.f32.mrb[0].mxu0
        %4105 = vdwg.mxu0
        %4106 = vmatprep.subr.bf16.mxu0 %v3987
        %4107 = vmatpush1.bf16.msra.mxu0 %v3986
        %4108 = vmatprep.subr.bf16.mxu0 %v4003
        %4109 = vmatpush1.bf16.msra.mxu0 %v4002
        %4110 = vmatprep.subr.bf16.mxu0 0
        %4111 = vmatpush1.bf16.msra.mxu0 0
        %4112 = vmatprep.subr.bf16.mxu0 0
        %4113 = vmatpush1.bf16.msra.mxu0 0
        %4114 = vmatprep.subr.bf16.mxu0 0
        %4115 = vmatpush1.bf16.msra.mxu0 0
        %4116 = vmatprep.subr.bf16.mxu0 0
        %4117 = vmatpush1.bf16.msra.mxu0 0
        %4118 = vmatprep.subr.bf16.mxu0 0
        %4119 = vmatpush1.bf16.msra.mxu0 0
        %4120 = vmatprep.subr.bf16.mxu0 0
        %4121 = vmatpush1.bf16.msra.mxu0 0
        %4122 = vmatprep.subr.bf16.mxu0 0
        %4123 = vmatpush1.bf16.msra.mxu0 0
        %4124 = vmatprep.subr.bf16.mxu0 0
        %4125 = vmatpush1.bf16.msra.mxu0 0
        %4126 = vmatprep.subr.bf16.mxu0 0
        %4127 = vmatpush1.bf16.msra.mxu0 0
        %4128 = vmatprep.subr.bf16.mxu0 0
        %4129 = vmatpush1.bf16.msra.mxu0 0
        %4130 = vmatprep.subr.bf16.mxu0 0
        %4131 = vmatpush1.bf16.msra.mxu0 0
        %4132 = vmatprep.subr.bf16.mxu0 0
        %4133 = vmatpush1.bf16.msra.mxu0 0
        %4134 = vmatprep.subr.bf16.mxu0 0
        %4135 = vmatpush1.bf16.msra.mxu0 0
        %4136 = vmatprep.subr.bf16.mxu0 0
        %4137 = vmatpush1.bf16.msra.mxu0 0
        %4138 = vmatprep.mubr.bf16.mxu0 0
        %4139 = vmatmul.mubr.bf16.gmra.mrb[0].mxu0 %v4022
        %v4140 = vpop.f32.mrb[0].mxu0
        %v4141 = vadd.f32 %v4018, %v4140
        %v4142 = vpop.f32.mrb[0].mxu0
        %v4143 = vadd.f32 %v4018, %v4142
        %v4144 = vpop.f32.mrb[0].mxu0
        %v4145 = vpop.f32.mrb[0].mxu0
        %4146 = vdwg.mxu0
        %4147 = vmatprep.subr.bf16.mxu0 %v3989
        %4148 = vmatpush1.bf16.msra.mxu0 %v3988
        %4149 = vmatprep.subr.bf16.mxu0 %v4005
        %4150 = vmatpush1.bf16.msra.mxu0 %v4004
        %4151 = vmatprep.subr.bf16.mxu0 0
        %4152 = vmatpush1.bf16.msra.mxu0 0
        %4153 = vmatprep.subr.bf16.mxu0 0
        %4154 = vmatpush1.bf16.msra.mxu0 0
        %4155 = vmatprep.subr.bf16.mxu0 0
        %4156 = vmatpush1.bf16.msra.mxu0 0
        %4157 = vmatprep.subr.bf16.mxu0 0
        %4158 = vmatpush1.bf16.msra.mxu0 0
        %4159 = vmatprep.subr.bf16.mxu0 0
        %4160 = vmatpush1.bf16.msra.mxu0 0
        %4161 = vmatprep.subr.bf16.mxu0 0
        %4162 = vmatpush1.bf16.msra.mxu0 0
        %4163 = vmatprep.subr.bf16.mxu0 0
        %4164 = vmatpush1.bf16.msra.mxu0 0
        %4165 = vmatprep.subr.bf16.mxu0 0
        %4166 = vmatpush1.bf16.msra.mxu0 0
        %4167 = vmatprep.subr.bf16.mxu0 0
        %4168 = vmatpush1.bf16.msra.mxu0 0
        %4169 = vmatprep.subr.bf16.mxu0 0
        %4170 = vmatpush1.bf16.msra.mxu0 0
        %4171 = vmatprep.subr.bf16.mxu0 0
        %4172 = vmatpush1.bf16.msra.mxu0 0
        %4173 = vmatprep.subr.bf16.mxu0 0
        %4174 = vmatpush1.bf16.msra.mxu0 0
        %4175 = vmatprep.subr.bf16.mxu0 0
        %4176 = vmatpush1.bf16.msra.mxu0 0
        %4177 = vmatprep.subr.bf16.mxu0 0
        %4178 = vmatpush1.bf16.msra.mxu0 0
        %4179 = vmatprep.mubr.bf16.mxu0 0
        %4180 = vmatmul.mubr.bf16.gmra.mrb[0].mxu0 %v4022
        %v4181 = vpop.f32.mrb[0].mxu0
        %v4182 = vadd.f32 %v4018, %v4181
        %v4183 = vpop.f32.mrb[0].mxu0
        %v4184 = vadd.f32 %v4018, %v4183
        %v4185 = vpop.f32.mrb[0].mxu0
        %v4186 = vpop.f32.mrb[0].mxu0
        %4187 = vdwg.mxu0
        %4188 = vmatprep.subr.bf16.mxu0 %v3991
        %4189 = vmatpush1.bf16.msra.mxu0 %v3990
        %4190 = vmatprep.subr.bf16.mxu0 %v4007
        %4191 = vmatpush1.bf16.msra.mxu0 %v4006
        %4192 = vmatprep.subr.bf16.mxu0 0
        %4193 = vmatpush1.bf16.msra.mxu0 0
        %4194 = vmatprep.subr.bf16.mxu0 0
        %4195 = vmatpush1.bf16.msra.mxu0 0
        %4196 = vmatprep.subr.bf16.mxu0 0
        %4197 = vmatpush1.bf16.msra.mxu0 0
        %4198 = vmatprep.subr.bf16.mxu0 0
        %4199 = vmatpush1.bf16.msra.mxu0 0
        %4200 = vmatprep.subr.bf16.mxu0 0
        %4201 = vmatpush1.bf16.msra.mxu0 0
        %4202 = vmatprep.subr.bf16.mxu0 0
        %4203 = vmatpush1.bf16.msra.mxu0 0
        %4204 = vmatprep.subr.bf16.mxu0 0
        %4205 = vmatpush1.bf16.msra.mxu0 0
        %4206 = vmatprep.subr.bf16.mxu0 0
        %4207 = vmatpush1.bf16.msra.mxu0 0
        %4208 = vmatprep.subr.bf16.mxu0 0
        %4209 = vmatpush1.bf16.msra.mxu0 0
        %4210 = vmatprep.subr.bf16.mxu0 0
        %4211 = vmatpush1.bf16.msra.mxu0 0
        %4212 = vmatprep.subr.bf16.mxu0 0
        %4213 = vmatpush1.bf16.msra.mxu0 0
        %4214 = vmatprep.subr.bf16.mxu0 0
        %4215 = vmatpush1.bf16.msra.mxu0 0
        %4216 = vmatprep.subr.bf16.mxu0 0
        %4217 = vmatpush1.bf16.msra.mxu0 0
        %4218 = vmatprep.subr.bf16.mxu0 0
        %4219 = vmatpush1.bf16.msra.mxu0 0
        %4220 = vmatprep.mubr.bf16.mxu0 0
        %4221 = vmatmul.mubr.bf16.gmra.mrb[0].mxu0 %v4022
        %v4222 = vpop.f32.mrb[0].mxu0
        %v4223 = vadd.f32 %v4018, %v4222
        %v4224 = vpop.f32.mrb[0].mxu0
        %v4225 = vadd.f32 %v4018, %v4224
        %v4226 = vpop.f32.mrb[0].mxu0
        %v4227 = vpop.f32.mrb[0].mxu0
        %4228 = vdwg.mxu0
        %4229 = vmatprep.subr.bf16.mxu0 %v3993
        %4230 = vmatpush1.bf16.msra.mxu0 %v3992
        %4231 = vmatprep.subr.bf16.mxu0 %v4009
        %4232 = vmatpush1.bf16.msra.mxu0 %v4008
        %4233 = vmatprep.subr.bf16.mxu0 0
        %4234 = vmatpush1.bf16.msra.mxu0 0
        %4235 = vmatprep.subr.bf16.mxu0 0
        %4236 = vmatpush1.bf16.msra.mxu0 0
        %4237 = vmatprep.subr.bf16.mxu0 0
        %4238 = vmatpush1.bf16.msra.mxu0 0
        %4239 = vmatprep.subr.bf16.mxu0 0
        %4240 = vmatpush1.bf16.msra.mxu0 0
        %4241 = vmatprep.subr.bf16.mxu0 0
        %4242 = vmatpush1.bf16.msra.mxu0 0
        %4243 = vmatprep.subr.bf16.mxu0 0
        %4244 = vmatpush1.bf16.msra.mxu0 0
        %4245 = vmatprep.subr.bf16.mxu0 0
        %4246 = vmatpush1.bf16.msra.mxu0 0
        %4247 = vmatprep.subr.bf16.mxu0 0
        %4248 = vmatpush1.bf16.msra.mxu0 0
        %4249 = vmatprep.subr.bf16.mxu0 0
        %4250 = vmatpush1.bf16.msra.mxu0 0
        %4251 = vmatprep.subr.bf16.mxu0 0
        %4252 = vmatpush1.bf16.msra.mxu0 0
        %4253 = vmatprep.subr.bf16.mxu0 0
        %4254 = vmatpush1.bf16.msra.mxu0 0
        %4255 = vmatprep.subr.bf16.mxu0 0
        %4256 = vmatpush1.bf16.msra.mxu0 0
        %4257 = vmatprep.subr.bf16.mxu0 0
        %4258 = vmatpush1.bf16.msra.mxu0 0
        %4259 = vmatprep.subr.bf16.mxu0 0
        %4260 = vmatpush1.bf16.msra.mxu0 0
        %4261 = vmatprep.mubr.bf16.mxu0 0
        %4262 = vmatmul.mubr.bf16.gmra.mrb[0].mxu0 %v4022
        %v4263 = vpop.f32.mrb[0].mxu0
        %v4264 = vadd.f32 %v4018, %v4263
        %v4265 = vpop.f32.mrb[0].mxu0
        %v4266 = vadd.f32 %v4018, %v4265
        %v4267 = vpop.f32.mrb[0].mxu0
        %v4268 = vpop.f32.mrb[0].mxu0
        %4269 = vdwg.mxu0
        %4270 = vmatprep.subr.bf16.mxu0 %v3995
        %4271 = vmatpush1.bf16.msra.mxu0 %v3994
        %4272 = vmatprep.subr.bf16.mxu0 %v4011
        %4273 = vmatpush1.bf16.msra.mxu0 %v4010
        %4274 = vmatprep.subr.bf16.mxu0 0
        %4275 = vmatpush1.bf16.msra.mxu0 0
        %4276 = vmatprep.subr.bf16.mxu0 0
        %4277 = vmatpush1.bf16.msra.mxu0 0
        %4278 = vmatprep.subr.bf16.mxu0 0
        %4279 = vmatpush1.bf16.msra.mxu0 0
        %4280 = vmatprep.subr.bf16.mxu0 0
        %4281 = vmatpush1.bf16.msra.mxu0 0
        %4282 = vmatprep.subr.bf16.mxu0 0
        %4283 = vmatpush1.bf16.msra.mxu0 0
        %4284 = vmatprep.subr.bf16.mxu0 0
        %4285 = vmatpush1.bf16.msra.mxu0 0
        %4286 = vmatprep.subr.bf16.mxu0 0
        %4287 = vmatpush1.bf16.msra.mxu0 0
        %4288 = vmatprep.subr.bf16.mxu0 0
        %4289 = vmatpush1.bf16.msra.mxu0 0
        %4290 = vmatprep.subr.bf16.mxu0 0
        %4291 = vmatpush1.bf16.msra.mxu0 0
        %4292 = vmatprep.subr.bf16.mxu0 0
        %4293 = vmatpush1.bf16.msra.mxu0 0
        %4294 = vmatprep.subr.bf16.mxu0 0
        %4295 = vmatpush1.bf16.msra.mxu0 0
        %4296 = vmatprep.subr.bf16.mxu0 0
        %4297 = vmatpush1.bf16.msra.mxu0 0
        %4298 = vmatprep.subr.bf16.mxu0 0
        %4299 = vmatpush1.bf16.msra.mxu0 0
        %4300 = vmatprep.subr.bf16.mxu0 0
        %4301 = vmatpush1.bf16.msra.mxu0 0
        %4302 = vmatprep.mubr.bf16.mxu0 0
        %4303 = vmatmul.mubr.bf16.gmra.mrb[0].mxu0 %v4022
        %v4304 = vpop.f32.mrb[0].mxu0
        %v4305 = vadd.f32 %v4018, %v4304
        %v4306 = vpop.f32.mrb[0].mxu0
        %v4307 = vadd.f32 %v4018, %v4306
        %v4308 = vpop.f32.mrb[0].mxu0
        %v4309 = vpop.f32.mrb[0].mxu0
        %4310 = vdwg.mxu0
        %4311 = vmatprep.subr.bf16.mxu0 %v3997
        %4312 = vmatpush1.bf16.msra.mxu0 %v3996
        %4313 = vmatprep.subr.bf16.mxu0 %v4013
        %4314 = vmatpush1.bf16.msra.mxu0 %v4012
        %4315 = vmatprep.subr.bf16.mxu0 0
        %4316 = vmatpush1.bf16.msra.mxu0 0
        %4317 = vmatprep.subr.bf16.mxu0 0
        %4318 = vmatpush1.bf16.msra.mxu0 0
        %4319 = vmatprep.subr.bf16.mxu0 0
        %4320 = vmatpush1.bf16.msra.mxu0 0
        %4321 = vmatprep.subr.bf16.mxu0 0
        %4322 = vmatpush1.bf16.msra.mxu0 0
        %4323 = vmatprep.subr.bf16.mxu0 0
        %4324 = vmatpush1.bf16.msra.mxu0 0
        %4325 = vmatprep.subr.bf16.mxu0 0
        %4326 = vmatpush1.bf16.msra.mxu0 0
        %4327 = vmatprep.subr.bf16.mxu0 0
        %4328 = vmatpush1.bf16.msra.mxu0 0
        %4329 = vmatprep.subr.bf16.mxu0 0
        %4330 = vmatpush1.bf16.msra.mxu0 0
        %4331 = vmatprep.subr.bf16.mxu0 0
        %4332 = vmatpush1.bf16.msra.mxu0 0
        %4333 = vmatprep.subr.bf16.mxu0 0
        %4334 = vmatpush1.bf16.msra.mxu0 0
        %4335 = vmatprep.subr.bf16.mxu0 0
        %4336 = vmatpush1.bf16.msra.mxu0 0
        %4337 = vmatprep.subr.bf16.mxu0 0
        %4338 = vmatpush1.bf16.msra.mxu0 0
        %4339 = vmatprep.subr.bf16.mxu0 0
        %4340 = vmatpush1.bf16.msra.mxu0 0
        %4341 = vmatprep.subr.bf16.mxu0 0
        %4342 = vmatpush1.bf16.msra.mxu0 0
        %4343 = vmatprep.mubr.bf16.mxu0 0
        %4344 = vmatmul.mubr.bf16.gmra.mrb[0].mxu0 %v4022
        %v4345 = vpop.f32.mrb[0].mxu0
        %v4346 = vadd.f32 %v4018, %v4345
        %v4347 = vpop.f32.mrb[0].mxu0
        %v4348 = vadd.f32 %v4018, %v4347
        %v4349 = vpop.f32.mrb[0].mxu0
        %v4350 = vpop.f32.mrb[0].mxu0
        %4351 = vdwg.mxu0
        %v4368 = vcombine.low %v4059, %v4061
        %v4369 = vcombine.low %v4100, %v4102
        %v4371 = vunpack.c.l.s4 1983009808
        %v4372 = vunpack.c.0.s8 %v4371
        %v4373 = vlaneseq
        %v4374 = vshrl.u32 %v4373, 7
        %v4375 = vsub.s32 %v4372, %v4374
        %v4376 = vrot.slane %v4368, %v4375
        %v4378 = vunpack.c.l.s4 1983009808
        %v4379 = vunpack.c.0.s8 %v4378
        %v4380 = vlaneseq
        %v4381 = vshrl.u32 %v4380, 7
        %v4382 = vsub.s32 %v4379, %v4381
        %v4383 = vrot.slane %v4369, %v4382
        %v4384 = vcombine.low %v4376, %v4383
        %v4385 = vcombine.low %v4141, %v4143
        %v4386 = vcombine.low %v4182, %v4184
        %v4388 = vunpack.c.l.s4 1983009808
        %v4389 = vunpack.c.0.s8 %v4388
        %v4390 = vlaneseq
        %v4391 = vshrl.u32 %v4390, 7
        %v4392 = vsub.s32 %v4389, %v4391
        %v4393 = vrot.slane %v4385, %v4392
        %v4395 = vunpack.c.l.s4 1983009808
        %v4396 = vunpack.c.0.s8 %v4395
        %v4397 = vlaneseq
        %v4398 = vshrl.u32 %v4397, 7
        %v4399 = vsub.s32 %v4396, %v4398
        %v4400 = vrot.slane %v4386, %v4399
        %v4401 = vcombine.low %v4393, %v4400
        %v4402 = vcombine.low %v4223, %v4225
        %v4403 = vcombine.low %v4264, %v4266
        %v4405 = vunpack.c.l.s4 1983009808
        %v4406 = vunpack.c.0.s8 %v4405
        %v4407 = vlaneseq
        %v4408 = vshrl.u32 %v4407, 7
        %v4409 = vsub.s32 %v4406, %v4408
        %v4410 = vrot.slane %v4402, %v4409
        %v4412 = vunpack.c.l.s4 1983009808
        %v4413 = vunpack.c.0.s8 %v4412
        %v4414 = vlaneseq
        %v4415 = vshrl.u32 %v4414, 7
        %v4416 = vsub.s32 %v4413, %v4415
        %v4417 = vrot.slane %v4403, %v4416
        %v4418 = vcombine.low %v4410, %v4417
        %v4419 = vcombine.low %v4305, %v4307
        %v4420 = vcombine.low %v4346, %v4348
        %v4422 = vunpack.c.l.s4 1983009808
        %v4423 = vunpack.c.0.s8 %v4422
        %v4424 = vlaneseq
        %v4425 = vshrl.u32 %v4424, 7
        %v4426 = vsub.s32 %v4423, %v4425
        %v4427 = vrot.slane %v4419, %v4426
        %v4429 = vunpack.c.l.s4 1983009808
        %v4430 = vunpack.c.0.s8 %v4429
        %v4431 = vlaneseq
        %v4432 = vshrl.u32 %v4431, 7
        %v4433 = vsub.s32 %v4430, %v4432
        %v4434 = vrot.slane %v4420, %v4433
        %v4435 = vcombine.low %v4427, %v4434
        %4440 = vst [vmem:[%s338] sm:$0xff] %v4384
        %4441 = vst [vmem:[%s338 + $0x8] sm:$0xff] %v4401
        %4442 = vst [vmem:[%s338 + $0x10] sm:$0xff] %v4418
        %4443 = vst [vmem:[%s338 + $0x18] sm:$0xff] %v4435
        %s4444 = sand.u32 %s225, 1
        %s4445 = scalar_lea.sflag [#allocation3], %s4444
        %s4446 = sand.u32 %s225, 1
        %s4447 = smul.addr %s4446, 32
        %s4448 = scalar_lea.vmem [#allocation2], %s4447
        // Predicated region
        $region57: #{tpu_custom_call.1} parent=55 // pred_check
          %p4449 = pneg %p235
        $region58: #{tpu_custom_call.1} parent=55 // pred_check_branch
          %4451 = sbr.rel (%p4449) target = $region60
        $region59: #{tpu_custom_call.1} parent=55 // pred_region
          %s4452 = smul.u32 16, %s23
          %s4453 = ssub.s32 20, %s4452
          %p4454 = scmp.lt.s32.totalorder %s4453, 16
          %s4455 = scalar_select %p4454, %s4453, 16
          %s4456 = smul.u32 32, %s4455
          %s4458 = ssub.s32 512, %s4456
          %4459 = vsyncadd %s4445, %s4458
          %p4460 = scmp.ne.s32.totalorder 0, %s4456
          %s4461 = smul.addr %s4452, 32
          %s4462 = scalar_lea.hbm %s9, %s4461
          %s4463 = smul.u32 %s4455, 2
          %s4464 = sshll.u32 %s4463, 4
          %s4465 = sshll.u32 %s4448, 4
          %s4466 = int_to_ptr.vmem [resolvable:$true] %s4465
          %4468 = dma.vmem_to_hbm [thread:$0]  (%p4460), %s4466, %s4464, %s4462, %s4445
        $region60: #{tpu_custom_call.1} parent=55 // pred_fallthru
          _
      $region56: #{tpu_custom_call.1} parent=5 // pred_fallthru
        _
      %p4469 = scmp.le.s32.totalorder 2, %s18
      // Predicated region
      $region61: #{tpu_custom_call.1} parent=5 // pred_check
        %p4470 = pneg %p4469
      $region62: #{tpu_custom_call.1} parent=5 // pred_check_branch
        %4472 = sbr.rel (%p4470) target = $region64
      $region63: #{tpu_custom_call.1} parent=5 // pred_region
        %s4473 = ssub.s32 %s18, 2
        // Predicated region
        $region65: #{tpu_custom_call.1} parent=63 // pred_check
          %p4474 = pneg %p241
        $region66: #{tpu_custom_call.1} parent=63 // pred_check_branch
          %4476 = sbr.rel (%p4474) target = $region68
        $region67: #{tpu_custom_call.1} parent=63 // pred_region
          %s4477 = sand.u32 %s226, 1
          %s4478 = scalar_lea.sflag [#allocation3], %s4477
          %s4479 = sand.u32 %s226, 1
          %s4480 = smul.addr %s4479, 32
          %s4481 = scalar_lea.vmem [#allocation2], %s4480
          %4482 = dma.done %s4478, 512
        $region68: #{tpu_custom_call.1} parent=63 // pred_fallthru
          _
      $region64: #{tpu_custom_call.1} parent=5 // pred_fallthru
        _
    $region6: #{tpu_custom_call.1} parent=1 // loop_footer
      %s22 = sadd.s32 1, %s18
    $region7: #{tpu_custom_call.1} parent=1 // loop_footer_branch
      %17 = sbr.rel target = $region3
    $region8: #{tpu_custom_call.1} parent=1 // loop_exit
      _
    %4483 = vsyncpa [#allocation3], 1
    %s4484 = scalar_lea.sflag [#allocation3], 1
    %4485 = vsyncpa %s4484, 1

</llo_original>
